<compile_context>
chip_gen: v6e
topology: v6e:2x2x1
jax: 0.10.0
libtpu: 0.0.40
codegen_flags: <defaults>
</compile_context>

<pallas_src>
import functools
import math

import jax
import jax.numpy as jnp
from jax.experimental import pallas as pl
from jax.experimental.pallas import tpu as pltpu

H = 512          # hidden width of Denoise
FOURIER = 128    # sinusoidal embedding dim
TIME = 128       # time embedding dim
IN_PAD = 32      # padded input-feature width (inp_dim + out_dim <= 17 -> pad to 32 lanes)
OUT_PAD = 128    # padded output-feature width (out_dim <= 8 -> pad to 128, lane-dense stores)

OBJ_INP, OBJ_OUT = 4, 4   # obj denoiser = Denoise(4, 4)
REL_INP, REL_OUT = 9, 8   # rel denoiser = Denoise(9, 8)

# (name, rows, cols) of the stacked main-MLP weights/biases streamed into the kernel.
_MAIN_WEIGHTS = (
    ("w1", IN_PAD, H), ("b1", 1, H),
    ("w2", H, H),      ("b2", 1, H),
    ("w3", H, H),      ("b3", 1, H),
    ("w4", H, OUT_PAD), ("b4", 1, OUT_PAD),
)


def _round_up(x, m):
    return ((x + m - 1) // m) * m


def _swish(x):
    # x * sigmoid(x) == x / (1 + exp(-x)); exp has a guaranteed Mosaic lowering.
    return x / (1.0 + jnp.exp(-x))


# ----------------------------------------------------------------------------------------------
# Pallas kernel: main MLP (fc1 -> swish -> fc2*FiLM -> swish -> fc3*FiLM -> swish -> fc4)
# ----------------------------------------------------------------------------------------------
def _denoise_mlp_kernel(x_ref, g2_ref, fb2_ref, g3_ref, fb3_ref,
                        w1_ref, b1_ref, w2_ref, b2_ref,
                        w3_ref, b3_ref, w4_ref, b4_ref,
                        o_ref, *, tile_m, obj_rows, rel_rows):
    f32, bf16 = jnp.float32, jnp.bfloat16
    br = pl.program_id(0)          # 0 = obj branch, 1 = rel branch
    it = pl.program_id(2)          # row tile within this batch element

    # per-branch valid row count (static constants) -> skip tiles that are pure padding.
    valid_rows = jnp.where(br == 0, obj_rows, rel_rows)

    @pl.when(it * tile_m < valid_rows)
    def _():
        x = x_ref[...]                                                     # (TM, 32) bf16
        h = _swish(jnp.dot(x, w1_ref[...], preferred_element_type=f32) + b1_ref[...])
        # fc2 + FiLM (gain already includes the +1, folded host-side)
        h = jnp.dot(h.astype(bf16), w2_ref[...], preferred_element_type=f32) + b2_ref[...]
        h = _swish(h * g2_ref[...] + fb2_ref[...])                         # (1,H) broadcast
        # fc3 + FiLM
        h = jnp.dot(h.astype(bf16), w3_ref[...], preferred_element_type=f32) + b3_ref[...]
        h = _swish(h * g3_ref[...] + fb3_ref[...])
        # fc4 (128 padded lanes -> unmasked vst)
        o_ref[...] = jnp.dot(h.astype(bf16), w4_ref[...],
                             preferred_element_type=f32) + b4_ref[...]


def _fused_main_mlp(params, x, film, obj_rows, rel_rows, tile_m, n_tiles):
    """x: (2, B, row_pad, IN_PAD) bf16; film: 4 x (2, B, 1, H) f32. Returns (2,B,row_pad,OUT_PAD) f32."""
    B = x.shape[1]
    row_pad = x.shape[2]

    def row_spec(feat):
        return pl.BlockSpec((None, None, tile_m, feat), lambda br, b, i: (br, b, i, 0))

    def film_spec():
        return pl.BlockSpec((None, None, 1, H), lambda br, b, i: (br, b, 0, 0))

    def weight_spec(d0, d1):
        # indexed only by the branch axis -> weights stay resident across all batch/row tiles
        return pl.BlockSpec((None, d0, d1), lambda br, b, i: (br, 0, 0))

    in_specs = [row_spec(IN_PAD)] + [film_spec()] * 4
    args = [x, *film]
    for name, d0, d1 in _MAIN_WEIGHTS:
        in_specs.append(weight_spec(d0, d1))
        args.append(params[name])

    kernel = functools.partial(_denoise_mlp_kernel, tile_m=tile_m,
                               obj_rows=obj_rows, rel_rows=rel_rows)
    return pl.pallas_call(
        kernel,
        grid=(2, B, n_tiles),
        out_shape=jax.ShapeDtypeStruct((2, B, row_pad, OUT_PAD), jnp.float32),
        in_specs=in_specs,
        out_specs=pl.BlockSpec((None, None, tile_m, OUT_PAD), lambda br, b, i: (br, b, i, 0)),
        compiler_params=pltpu.CompilerParams(
            # only the branch axis is parallel -> v7x megacore splits obj/rel across its 2 TCs
            dimension_semantics=("parallel", "arbitrary", "arbitrary"),
            vmem_limit_bytes=32 * 1024 * 1024,
        ),
    )(*args)


# ----------------------------------------------------------------------------------------------
# Parameters (deterministic synthetic init mimicking nn.Linear defaults)
# ----------------------------------------------------------------------------------------------
def _init_single_denoise(key, inp_dim, out_dim):
    def lin(k, din, dout):
        kw, kb = jax.random.split(k)
        s = 1.0 / math.sqrt(din)
        w = jax.random.uniform(kw, (din, dout), jnp.float32, -s, s)
        b = jax.random.uniform(kb, (dout,), jnp.float32, -s, s)
        return w, b

    ks = jax.random.split(key, 8)
    wt1, bt1 = lin(ks[0], FOURIER, TIME)         # time_mlp[1]
    wt2, bt2 = lin(ks[1], TIME, TIME)            # time_mlp[3]
    wm2, bm2 = lin(ks[2], TIME, 2 * H)           # t_map_fc2
    wm3, bm3 = lin(ks[3], TIME, 2 * H)           # t_map_fc3
    w1, b1 = lin(ks[4], inp_dim + out_dim, H)    # fc1
    w2, b2 = lin(ks[5], H, H)                    # fc2
    w3, b3 = lin(ks[6], H, H)                    # fc3
    w4, b4 = lin(ks[7], H, out_dim)              # fc4

    w1p = jnp.pad(w1, ((0, IN_PAD - (inp_dim + out_dim)), (0, 0)))   # zero rows: padding inert
    w4p = jnp.pad(w4, ((0, 0), (0, OUT_PAD - out_dim)))
    b4p = jnp.pad(b4, (0, OUT_PAD - out_dim))

    return dict(
        wt1=wt1, bt1=bt1, wt2=wt2, bt2=bt2,
        wm2g=wm2[:, :H], bm2g=bm2[:H] + 1.0,    # FiLM "+1" folded into the gain bias
        wm2b=wm2[:, H:], bm2b=bm2[H:],
        wm3g=wm3[:, :H], bm3g=bm3[:H] + 1.0,
        wm3b=wm3[:, H:], bm3b=bm3[H:],
        w1=w1p, b1=b1, w2=w2, b2=b2, w3=w3, b3=b3, w4=w4p, b4=b4p,
    )


def init_bidenoise_params(key_obj, key_rel):
    """Stack obj = Denoise(4,4) and rel = Denoise(9,8) params on a leading branch axis (size 2)."""
    obj = _init_single_denoise(key_obj, OBJ_INP, OBJ_OUT)
    rel = _init_single_denoise(key_rel, REL_INP, REL_OUT)
    main_w = {"w1", "w2", "w3", "w4"}
    main_b = {"b1", "b2", "b3", "b4"}
    params = {}
    for name in obj:
        stacked = jnp.stack([obj[name], rel[name]], axis=0)
        if name in main_w:
            params[name] = stacked.astype(jnp.bfloat16)                   # (2, din, dout) bf16
        elif name in main_b:
            params[name] = stacked[:, None, :].astype(jnp.float32)        # (2, 1, dout) f32
        else:                                                             # time / FiLM params stay f32
            params[name] = stacked.astype(jnp.float32)

    # sinusoidal embedding constants: duplicated freqs + pi/2 phase on the upper half
    half = FOURIER // 2
    scale = math.log(10000.0) / (half - 1)
    freqs = jnp.exp(jnp.arange(half, dtype=jnp.float32) * -scale)
    params["freq2"] = jnp.concatenate([freqs, freqs])                     # (128,)
    params["phase"] = jnp.concatenate([jnp.zeros((half,), jnp.float32),
                                       jnp.full((half,), jnp.pi / 2, jnp.float32)])
    return params


# ----------------------------------------------------------------------------------------------
# Forward
# ----------------------------------------------------------------------------------------------
@jax.jit
def bidenoise_forward(params, obj_cond, rel_cond, rel_ids, positions, t):
    """obj_cond: (B,N,4)  rel_cond: (B,R,9)  rel_ids: (B,R,2) int32  positions: (B,N,4)  t: (B,)
    returns (B, N, 4)."""
    B, N, _ = obj_cond.shape
    R = rel_cond.shape[1]

    # ---- time-MLP + FiLM branch, deduped to ONE row per (branch, batch) — plain JAX -----------
    t32 = t.astype(jnp.float32).reshape(B)
    emb = jnp.sin(t32[:, None] * params["freq2"][None, :] + params["phase"][None, :])   # (B,128)
    te = jnp.einsum("bf,kfh->kbh", emb, params["wt1"]) + params["bt1"][:, None, :]
    te = jax.nn.gelu(te, approximate=False)                      # exact erf GELU (torch default)
    te = jnp.einsum("kbf,kfh->kbh", te, params["wt2"]) + params["bt2"][:, None, :]       # (2,B,128)

    def film(wg, bg, wb, bb):
        g = jnp.einsum("kbf,kfh->kbh", te, params[wg]) + params[bg][:, None, :]
        fb = jnp.einsum("kbf,kfh->kbh", te, params[wb]) + params[bb][:, None, :]
        return g[:, :, None, :], fb[:, :, None, :]               # (2, B, 1, H) f32
    g2, fb2 = film("wm2g", "bm2g", "wm2b", "bm2b")
    g3, fb3 = film("wm3g", "bm3g", "wm3b", "bm3b")

    # ---- row tensors: obj rows + rel rows (endpoint gather is index glue, plain JAX) ----------
    obj_x = jnp.concatenate([obj_cond, positions], axis=-1)                              # (B,N,8)
    ia = rel_ids[..., 0]
    ib = rel_ids[..., 1]
    pos_a = jnp.take_along_axis(positions, ia[:, :, None], axis=1)                       # (B,R,4)
    pos_b = jnp.take_along_axis(positions, ib[:, :, None], axis=1)                       # (B,R,4)
    rel_x = jnp.concatenate([rel_cond, pos_a, pos_b], axis=-1)                           # (B,R,17)

    max_rows = max(N, R)
    tile_m = min(512, _round_up(max_rows, 16))       # multiple of 16: bf16 sublane packing
    row_pad = _round_up(max_rows, tile_m)
    n_tiles = row_pad // tile_m

    def pad_rows(v):
        v = v.astype(jnp.float32)
        return jnp.pad(v, ((0, 0), (0, row_pad - v.shape[1]), (0, IN_PAD - v.shape[2])))

    x = jnp.stack([pad_rows(obj_x), pad_rows(rel_x)], axis=0).astype(jnp.bfloat16)  # (2,B,rp,32)

    out = _fused_main_mlp(params, x, (g2, fb2, g3, fb3), N, R, tile_m, n_tiles)     # (2,B,rp,128)

    obj_out = out[0, :, :N, :OBJ_OUT]                                   # (B, N, 4) — static slices
    rel_out = out[1, :, :R, :REL_OUT]                                   # (B, R, 8)

    # scatter-add halves back onto the two endpoint objects (index glue, plain JAX)
    batch_idx = jnp.broadcast_to(jnp.arange(B)[:, None], (B, R))
    output = obj_out
    output = output.at[batch_idx, ia].add(rel_out[..., :OBJ_OUT])
    output = output.at[batch_idx, ib].add(rel_out[..., OBJ_OUT:])
    return output


if __name__ == "__main__":
    key = jax.random.PRNGKey(0)
    k1, k2, k3, k4, k5, k6, k7 = jax.random.split(key, 7)

    B, N, R = 2, 8, 6  # batch, objects per example, relations per example
    obj_cond = jax.random.normal(k1, (B, N, 4), jnp.float32)
    positions = jax.random.normal(k2, (B, N, 4), jnp.float32)
    rel_cond = jax.random.normal(k3, (B, R, 9), jnp.float32)
    rel_ids = jax.random.randint(k4, (B, R, 2), 0, N, jnp.int32)
    t = jax.random.uniform(k5, (B,), jnp.float32, 0.0, 100.0)

    params = init_bidenoise_params(k6, k7)   # obj = Denoise(4,4), rel = Denoise(9,8)

    out = bidenoise_forward(params, obj_cond, rel_cond, rel_ids, positions, t)
    jax.block_until_ready(out)
    assert out.shape == (B, N, 4)
    print("KERNEL_OK")
</pallas_src>

<mosaic_0001>
module attributes {stable_mosaic.version = 11 : i64} {
  func.func @_denoise_mlp_kernel(%arg0: i32, %arg1: i32, %arg2: i32, %arg3: memref<1x1x16x32xbf16, #tpu.memory_space<vmem>>, %arg4: memref<1x1x1x512xf32, #tpu.memory_space<vmem>>, %arg5: memref<1x1x1x512xf32, #tpu.memory_space<vmem>>, %arg6: memref<1x1x1x512xf32, #tpu.memory_space<vmem>>, %arg7: memref<1x1x1x512xf32, #tpu.memory_space<vmem>>, %arg8: memref<1x32x512xbf16, #tpu.memory_space<vmem>>, %arg9: memref<1x1x512xf32, #tpu.memory_space<vmem>>, %arg10: memref<1x512x512xbf16, #tpu.memory_space<vmem>>, %arg11: memref<1x1x512xf32, #tpu.memory_space<vmem>>, %arg12: memref<1x512x512xbf16, #tpu.memory_space<vmem>>, %arg13: memref<1x1x512xf32, #tpu.memory_space<vmem>>, %arg14: memref<1x512x128xbf16, #tpu.memory_space<vmem>>, %arg15: memref<1x1x128xf32, #tpu.memory_space<vmem>>, %arg16: memref<1x1x16x128xf32, #tpu.memory_space<vmem>>) attributes {dimension_semantics = [#tpu.dimension_semantics<parallel>, #tpu.dimension_semantics<arbitrary>, #tpu.dimension_semantics<arbitrary>], iteration_bounds = array<i64: 2, 2, 1>, scalar_prefetch = 0 : i64, scratch_operands = 0 : i64, tpu.core_type = #tpu.core_type<tc>, window_params = [{transform_indices = @transform_0, window_bounds = array<i64: 1, 1, 16, 32>}, {transform_indices = @transform_1, window_bounds = array<i64: 1, 1, 1, 512>}, {transform_indices = @transform_2, window_bounds = array<i64: 1, 1, 1, 512>}, {transform_indices = @transform_3, window_bounds = array<i64: 1, 1, 1, 512>}, {transform_indices = @transform_4, window_bounds = array<i64: 1, 1, 1, 512>}, {transform_indices = @transform_5, window_bounds = array<i64: 1, 32, 512>}, {transform_indices = @transform_6, window_bounds = array<i64: 1, 1, 512>}, {transform_indices = @transform_7, window_bounds = array<i64: 1, 512, 512>}, {transform_indices = @transform_8, window_bounds = array<i64: 1, 1, 512>}, {transform_indices = @transform_9, window_bounds = array<i64: 1, 512, 512>}, {transform_indices = @transform_10, window_bounds = array<i64: 1, 1, 512>}, {transform_indices = @transform_11, window_bounds = array<i64: 1, 512, 128>}, {transform_indices = @transform_12, window_bounds = array<i64: 1, 1, 128>}, {transform_indices = @transform_13, window_bounds = array<i64: 1, 1, 16, 128>}]} {
    %c0_i32 = arith.constant 0 : i32
    %0 = arith.cmpi eq, %arg0, %c0_i32 : i32
    %c8_i32 = arith.constant 8 : i32
    %c6_i32 = arith.constant 6 : i32
    %1 = arith.select %0, %c8_i32, %c6_i32 : i32
    %c16_i32 = arith.constant 16 : i32
    %2 = arith.muli %arg2, %c16_i32 : i32
    %3 = arith.cmpi slt, %2, %1 : i32
    %4 = arith.extui %3 : i1 to i32
    %c0_i32_0 = arith.constant 0 : i32
    %5 = arith.cmpi ne, %4, %c0_i32_0 : i32
    scf.if %5 {
      %c0 = arith.constant 0 : index
      %c0_1 = arith.constant 0 : index
      %c0_2 = arith.constant 0 : index
      %c0_3 = arith.constant 0 : index
      %6 = vector.load %arg3[%c0, %c0_1, %c0_2, %c0_3] : memref<1x1x16x32xbf16, #tpu.memory_space<vmem>>, vector<1x1x16x32xbf16>
      %7 = vector.shape_cast %6 : vector<1x1x16x32xbf16> to vector<16x32xbf16>
      %c0_4 = arith.constant 0 : index
      %c0_5 = arith.constant 0 : index
      %c0_6 = arith.constant 0 : index
      %8 = vector.load %arg8[%c0_4, %c0_5, %c0_6] : memref<1x32x512xbf16, #tpu.memory_space<vmem>>, vector<1x32x512xbf16>
      %9 = vector.shape_cast %8 : vector<1x32x512xbf16> to vector<32x512xbf16>
      %cst = arith.constant dense<0.000000e+00> : vector<16x512xf32>
      %10 = tpu.matmul %7, %9, %cst {dimension_numbers = #tpu.dot_dimension_numbers<[1], [0], [0], [1], [0, 0, 1, 1], [], []>} : vector<16x32xbf16>, vector<32x512xbf16>, vector<16x512xf32> -> vector<16x512xf32>
      %c0_7 = arith.constant 0 : index
      %c0_8 = arith.constant 0 : index
      %c0_9 = arith.constant 0 : index
      %11 = vector.load %arg9[%c0_7, %c0_8, %c0_9] : memref<1x1x512xf32, #tpu.memory_space<vmem>>, vector<1x1x512xf32>
      %12 = vector.shape_cast %11 : vector<1x1x512xf32> to vector<1x512xf32>
      %13 = vector.broadcast %12 : vector<1x512xf32> to vector<16x512xf32>
      %14 = arith.addf %10, %13 : vector<16x512xf32>
      %cst_10 = arith.constant 0.000000e+00 : f32
      %15 = vector.broadcast %cst_10 : f32 to vector<16x512xf32>
      %16 = arith.subf %15, %14 : vector<16x512xf32>
      %17 = math.exp %16 : vector<16x512xf32>
      %cst_11 = arith.constant 1.000000e+00 : f32
      %18 = vector.broadcast %cst_11 : f32 to vector<16x512xf32>
      %19 = arith.addf %18, %17 : vector<16x512xf32>
      %20 = arith.divf %14, %19 : vector<16x512xf32>
      %21 = arith.truncf %20 : vector<16x512xf32> to vector<16x512xbf16>
      %c0_12 = arith.constant 0 : index
      %c0_13 = arith.constant 0 : index
      %c0_14 = arith.constant 0 : index
      %22 = vector.load %arg10[%c0_12, %c0_13, %c0_14] : memref<1x512x512xbf16, #tpu.memory_space<vmem>>, vector<1x512x512xbf16>
      %23 = vector.shape_cast %22 : vector<1x512x512xbf16> to vector<512x512xbf16>
      %cst_15 = arith.constant dense<0.000000e+00> : vector<16x512xf32>
      %24 = tpu.matmul %21, %23, %cst_15 {dimension_numbers = #tpu.dot_dimension_numbers<[1], [0], [0], [1], [0, 0, 1, 1], [], []>} : vector<16x512xbf16>, vector<512x512xbf16>, vector<16x512xf32> -> vector<16x512xf32>
      %c0_16 = arith.constant 0 : index
      %c0_17 = arith.constant 0 : index
      %c0_18 = arith.constant 0 : index
      %25 = vector.load %arg11[%c0_16, %c0_17, %c0_18] : memref<1x1x512xf32, #tpu.memory_space<vmem>>, vector<1x1x512xf32>
      %26 = vector.shape_cast %25 : vector<1x1x512xf32> to vector<1x512xf32>
      %27 = vector.broadcast %26 : vector<1x512xf32> to vector<16x512xf32>
      %28 = arith.addf %24, %27 : vector<16x512xf32>
      %c0_19 = arith.constant 0 : index
      %c0_20 = arith.constant 0 : index
      %c0_21 = arith.constant 0 : index
      %c0_22 = arith.constant 0 : index
      %29 = vector.load %arg4[%c0_19, %c0_20, %c0_21, %c0_22] : memref<1x1x1x512xf32, #tpu.memory_space<vmem>>, vector<1x1x1x512xf32>
      %30 = vector.shape_cast %29 : vector<1x1x1x512xf32> to vector<1x512xf32>
      %31 = vector.broadcast %30 : vector<1x512xf32> to vector<16x512xf32>
      %32 = arith.mulf %28, %31 : vector<16x512xf32>
      %c0_23 = arith.constant 0 : index
      %c0_24 = arith.constant 0 : index
      %c0_25 = arith.constant 0 : index
      %c0_26 = arith.constant 0 : index
      %33 = vector.load %arg5[%c0_23, %c0_24, %c0_25, %c0_26] : memref<1x1x1x512xf32, #tpu.memory_space<vmem>>, vector<1x1x1x512xf32>
      %34 = vector.shape_cast %33 : vector<1x1x1x512xf32> to vector<1x512xf32>
      %35 = vector.broadcast %34 : vector<1x512xf32> to vector<16x512xf32>
      %36 = arith.addf %32, %35 : vector<16x512xf32>
      %cst_27 = arith.constant 0.000000e+00 : f32
      %37 = vector.broadcast %cst_27 : f32 to vector<16x512xf32>
      %38 = arith.subf %37, %36 : vector<16x512xf32>
      %39 = math.exp %38 : vector<16x512xf32>
      %cst_28 = arith.constant 1.000000e+00 : f32
      %40 = vector.broadcast %cst_28 : f32 to vector<16x512xf32>
      %41 = arith.addf %40, %39 : vector<16x512xf32>
      %42 = arith.divf %36, %41 : vector<16x512xf32>
      %43 = arith.truncf %42 : vector<16x512xf32> to vector<16x512xbf16>
      %c0_29 = arith.constant 0 : index
      %c0_30 = arith.constant 0 : index
      %c0_31 = arith.constant 0 : index
      %44 = vector.load %arg12[%c0_29, %c0_30, %c0_31] : memref<1x512x512xbf16, #tpu.memory_space<vmem>>, vector<1x512x512xbf16>
      %45 = vector.shape_cast %44 : vector<1x512x512xbf16> to vector<512x512xbf16>
      %cst_32 = arith.constant dense<0.000000e+00> : vector<16x512xf32>
      %46 = tpu.matmul %43, %45, %cst_32 {dimension_numbers = #tpu.dot_dimension_numbers<[1], [0], [0], [1], [0, 0, 1, 1], [], []>} : vector<16x512xbf16>, vector<512x512xbf16>, vector<16x512xf32> -> vector<16x512xf32>
      %c0_33 = arith.constant 0 : index
      %c0_34 = arith.constant 0 : index
      %c0_35 = arith.constant 0 : index
      %47 = vector.load %arg13[%c0_33, %c0_34, %c0_35] : memref<1x1x512xf32, #tpu.memory_space<vmem>>, vector<1x1x512xf32>
      %48 = vector.shape_cast %47 : vector<1x1x512xf32> to vector<1x512xf32>
      %49 = vector.broadcast %48 : vector<1x512xf32> to vector<16x512xf32>
      %50 = arith.addf %46, %49 : vector<16x512xf32>
      %c0_36 = arith.constant 0 : index
      %c0_37 = arith.constant 0 : index
      %c0_38 = arith.constant 0 : index
      %c0_39 = arith.constant 0 : index
      %51 = vector.load %arg6[%c0_36, %c0_37, %c0_38, %c0_39] : memref<1x1x1x512xf32, #tpu.memory_space<vmem>>, vector<1x1x1x512xf32>
      %52 = vector.shape_cast %51 : vector<1x1x1x512xf32> to vector<1x512xf32>
      %53 = vector.broadcast %52 : vector<1x512xf32> to vector<16x512xf32>
      %54 = arith.mulf %50, %53 : vector<16x512xf32>
      %c0_40 = arith.constant 0 : index
      %c0_41 = arith.constant 0 : index
      %c0_42 = arith.constant 0 : index
      %c0_43 = arith.constant 0 : index
      %55 = vector.load %arg7[%c0_40, %c0_41, %c0_42, %c0_43] : memref<1x1x1x512xf32, #tpu.memory_space<vmem>>, vector<1x1x1x512xf32>
      %56 = vector.shape_cast %55 : vector<1x1x1x512xf32> to vector<1x512xf32>
      %57 = vector.broadcast %56 : vector<1x512xf32> to vector<16x512xf32>
      %58 = arith.addf %54, %57 : vector<16x512xf32>
      %cst_44 = arith.constant 0.000000e+00 : f32
      %59 = vector.broadcast %cst_44 : f32 to vector<16x512xf32>
      %60 = arith.subf %59, %58 : vector<16x512xf32>
      %61 = math.exp %60 : vector<16x512xf32>
      %cst_45 = arith.constant 1.000000e+00 : f32
      %62 = vector.broadcast %cst_45 : f32 to vector<16x512xf32>
      %63 = arith.addf %62, %61 : vector<16x512xf32>
      %64 = arith.divf %58, %63 : vector<16x512xf32>
      %65 = arith.truncf %64 : vector<16x512xf32> to vector<16x512xbf16>
      %c0_46 = arith.constant 0 : index
      %c0_47 = arith.constant 0 : index
      %c0_48 = arith.constant 0 : index
      %66 = vector.load %arg14[%c0_46, %c0_47, %c0_48] : memref<1x512x128xbf16, #tpu.memory_space<vmem>>, vector<1x512x128xbf16>
      %67 = vector.shape_cast %66 : vector<1x512x128xbf16> to vector<512x128xbf16>
      %cst_49 = arith.constant dense<0.000000e+00> : vector<16x128xf32>
      %68 = tpu.matmul %65, %67, %cst_49 {dimension_numbers = #tpu.dot_dimension_numbers<[1], [0], [0], [1], [0, 0, 1, 1], [], []>} : vector<16x512xbf16>, vector<512x128xbf16>, vector<16x128xf32> -> vector<16x128xf32>
      %c0_50 = arith.constant 0 : index
      %c0_51 = arith.constant 0 : index
      %c0_52 = arith.constant 0 : index
      %69 = vector.load %arg15[%c0_50, %c0_51, %c0_52] : memref<1x1x128xf32, #tpu.memory_space<vmem>>, vector<1x1x128xf32>
      %70 = vector.shape_cast %69 : vector<1x1x128xf32> to vector<1x128xf32>
      %71 = vector.broadcast %70 : vector<1x128xf32> to vector<16x128xf32>
      %72 = arith.addf %68, %71 : vector<16x128xf32>
      %c0_53 = arith.constant 0 : index
      %c0_54 = arith.constant 0 : index
      %c0_55 = arith.constant 0 : index
      %c0_56 = arith.constant 0 : index
      %73 = vector.load %arg16[%c0_53, %c0_54, %c0_55, %c0_56] : memref<1x1x16x128xf32, #tpu.memory_space<vmem>>, vector<1x1x16x128xf32>
      %74 = vector.shape_cast %73 : vector<1x1x16x128xf32> to vector<16x128xf32>
      %75 = vector.shape_cast %72 : vector<16x128xf32> to vector<1x1x16x128xf32>
      tpu.vector_store %arg16[%c0_53, %c0_54, %c0_55, %c0_56], %75 {strides = array<i32>} : memref<1x1x16x128xf32, #tpu.memory_space<vmem>>, vector<1x1x16x128xf32>,
    } else {
    }
    return
  }
  func.func @transform_0(%arg0: i32, %arg1: i32, %arg2: i32) -> (i32, i32, i32, i32) {
    %c0_i32 = arith.constant 0 : i32
    %c0_i32_0 = arith.constant 0 : i32
    return %arg0, %arg1, %arg2, %c0_i32 : i32, i32, i32, i32
  }
  func.func @transform_1(%arg0: i32, %arg1: i32, %arg2: i32) -> (i32, i32, i32, i32) {
    %c0_i32 = arith.constant 0 : i32
    %c0_i32_0 = arith.constant 0 : i32
    %c0_i32_1 = arith.constant 0 : i32
    return %arg0, %arg1, %c0_i32, %c0_i32_0 : i32, i32, i32, i32
  }
  func.func @transform_2(%arg0: i32, %arg1: i32, %arg2: i32) -> (i32, i32, i32, i32) {
    %c0_i32 = arith.constant 0 : i32
    %c0_i32_0 = arith.constant 0 : i32
    %c0_i32_1 = arith.constant 0 : i32
    return %arg0, %arg1, %c0_i32, %c0_i32_0 : i32, i32, i32, i32
  }
  func.func @transform_3(%arg0: i32, %arg1: i32, %arg2: i32) -> (i32, i32, i32, i32) {
    %c0_i32 = arith.constant 0 : i32
    %c0_i32_0 = arith.constant 0 : i32
    %c0_i32_1 = arith.constant 0 : i32
    return %arg0, %arg1, %c0_i32, %c0_i32_0 : i32, i32, i32, i32
  }
  func.func @transform_4(%arg0: i32, %arg1: i32, %arg2: i32) -> (i32, i32, i32, i32) {
    %c0_i32 = arith.constant 0 : i32
    %c0_i32_0 = arith.constant 0 : i32
    %c0_i32_1 = arith.constant 0 : i32
    return %arg0, %arg1, %c0_i32, %c0_i32_0 : i32, i32, i32, i32
  }
  func.func @transform_5(%arg0: i32, %arg1: i32, %arg2: i32) -> (i32, i32, i32) {
    %c0_i32 = arith.constant 0 : i32
    %c0_i32_0 = arith.constant 0 : i32
    %c0_i32_1 = arith.constant 0 : i32
    return %arg0, %c0_i32, %c0_i32_0 : i32, i32, i32
  }
  func.func @transform_6(%arg0: i32, %arg1: i32, %arg2: i32) -> (i32, i32, i32) {
    %c0_i32 = arith.constant 0 : i32
    %c0_i32_0 = arith.constant 0 : i32
    %c0_i32_1 = arith.constant 0 : i32
    return %arg0, %c0_i32, %c0_i32_0 : i32, i32, i32
  }
  func.func @transform_7(%arg0: i32, %arg1: i32, %arg2: i32) -> (i32, i32, i32) {
    %c0_i32 = arith.constant 0 : i32
    %c0_i32_0 = arith.constant 0 : i32
    %c0_i32_1 = arith.constant 0 : i32
    return %arg0, %c0_i32, %c0_i32_0 : i32, i32, i32
  }
  func.func @transform_8(%arg0: i32, %arg1: i32, %arg2: i32) -> (i32, i32, i32) {
    %c0_i32 = arith.constant 0 : i32
    %c0_i32_0 = arith.constant 0 : i32
    %c0_i32_1 = arith.constant 0 : i32
    return %arg0, %c0_i32, %c0_i32_0 : i32, i32, i32
  }
  func.func @transform_9(%arg0: i32, %arg1: i32, %arg2: i32) -> (i32, i32, i32) {
    %c0_i32 = arith.constant 0 : i32
    %c0_i32_0 = arith.constant 0 : i32
    %c0_i32_1 = arith.constant 0 : i32
    return %arg0, %c0_i32, %c0_i32_0 : i32, i32, i32
  }
  func.func @transform_10(%arg0: i32, %arg1: i32, %arg2: i32) -> (i32, i32, i32) {
    %c0_i32 = arith.constant 0 : i32
    %c0_i32_0 = arith.constant 0 : i32
    %c0_i32_1 = arith.constant 0 : i32
    return %arg0, %c0_i32, %c0_i32_0 : i32, i32, i32
  }
  func.func @transform_11(%arg0: i32, %arg1: i32, %arg2: i32) -> (i32, i32, i32) {
    %c0_i32 = arith.constant 0 : i32
    %c0_i32_0 = arith.constant 0 : i32
    %c0_i32_1 = arith.constant 0 : i32
    return %arg0, %c0_i32, %c0_i32_0 : i32, i32, i32
  }
  func.func @transform_12(%arg0: i32, %arg1: i32, %arg2: i32) -> (i32, i32, i32) {
    %c0_i32 = arith.constant 0 : i32
    %c0_i32_0 = arith.constant 0 : i32
    %c0_i32_1 = arith.constant 0 : i32
    return %arg0, %c0_i32, %c0_i32_0 : i32, i32, i32
  }
  func.func @transform_13(%arg0: i32, %arg1: i32, %arg2: i32) -> (i32, i32, i32, i32) {
    %c0_i32 = arith.constant 0 : i32
    %c0_i32_0 = arith.constant 0 : i32
    return %arg0, %arg1, %arg2, %c0_i32 : i32, i32, i32, i32
  }
}

</mosaic_0001>

<llo_original>
// kernel: bidenoise_forward.1
$region0: #{bidenoise_forward.1}
  #allocation0 [shape = 'u32[]', space=smem, size = 0x4, offset = 0x4, fixed_abs, tag = 'smem constant byte address 0x4 - core index']
  #allocation1 [shape = 'u32[144,128]{1,0:T(1,128)}', space=vmem, size = 0x12000, scoped, tag = 'internal scratch']
  %s0 = inlined_call_operand.vmem [shape: bf16[2,2,16,32], index: 0, kind: input, shape index: {}]
  %s1 = inlined_call_operand.vmem [shape: f32[2,2,1,512], index: 1, kind: input, shape index: {}]
  %s2 = inlined_call_operand.vmem [shape: f32[2,2,1,512], index: 2, kind: input, shape index: {}]
  %s3 = inlined_call_operand.vmem [shape: f32[2,2,1,512], index: 3, kind: input, shape index: {}]
  %s4 = inlined_call_operand.vmem [shape: f32[2,2,1,512], index: 4, kind: input, shape index: {}]
  %s5 = inlined_call_operand.vmem [shape: bf16[2,32,512], index: 5, kind: input, shape index: {}]
  %s6 = inlined_call_operand.vmem [shape: f32[2,1,512], index: 6, kind: input, shape index: {}]
  %s7 = inlined_call_operand.vmem [shape: bf16[2,512,512], index: 7, kind: input, shape index: {}]
  %s8 = inlined_call_operand.vmem [shape: f32[2,1,512], index: 8, kind: input, shape index: {}]
  %s9 = inlined_call_operand.vmem [shape: bf16[2,512,512], index: 9, kind: input, shape index: {}]
  %s10 = inlined_call_operand.vmem [shape: f32[2,1,512], index: 10, kind: input, shape index: {}]
  %s11 = inlined_call_operand.hbm [shape: bf16[2,512,128], index: 11, kind: input, shape index: {}]
  %s12 = inlined_call_operand.vmem [shape: f32[2,1,128], index: 12, kind: input, shape index: {}]
  %s13 = inlined_call_operand.vmem [shape: f32[2,2,16,128], index: 13, kind: output, shape index: {}]
  %s14 = sld [smem:[#allocation0]]
  $region93: #{bidenoise_forward.1} parent=0
    _
  %s16 = ssub.s32 1, %s14
  %s17 = scalar_select 0, %s16, %s14
  $region1: #{bidenoise_forward.1} parent=0
    #allocation2 [shape = 'u8[262144]{0}', space=vmem, size = 0x40000, scoped, tag = 'input window, operand 11']
    #allocation3 [shape = 's32[2]{0}', space=sflag, size = 0x8, scoped, tag = 'scoped memory for bidenoise_forward.1']
    %18 = vsyncpa [#allocation3], 0
    %s19 = scalar_lea.sflag [#allocation3], 1
    %20 = vsyncpa %s19, 0
    loop: start=0, step=1, limit=6
    $region2: #{bidenoise_forward.1} parent=1 // loop_pre_header
      _
    $region3: #{bidenoise_forward.1} parent=1 // loop_header
      %s22 = sphi 0, %s26
      %p23 = scmp.ge.s32.totalorder %s22, 6
      %s29 = sphi 0, %s48
      %s30 = sphi 0, %s44
      %s31 = sphi 0, %s40
      %s32 = sphi 0, %s29
      %s33 = sphi 0, %s30
      %s34 = sphi 0, %s31
      %s35 = sphi 0, %s32
      %s36 = sphi 0, %s33
      %s37 = sphi 0, %s34
      %s55 = sphi 0, %s57
      %s58 = sphi 0, %s55
      %s59 = sphi 0, %s58
      %s75 = sphi 0, %s59
      %s83 = sphi 0, %s85
      %s86 = sphi 0, %s83
      %s87 = sphi 0, %s86
      %s103 = sphi 0, %s87
      %s111 = sphi 0, %s113
      %s114 = sphi 0, %s111
      %s115 = sphi 0, %s114
      %s131 = sphi 0, %s115
      %s139 = sphi 0, %s141
      %s142 = sphi 0, %s139
      %s143 = sphi 0, %s142
      %s159 = sphi 0, %s143
      %s167 = sphi 0, %s169
      %s170 = sphi 0, %s167
      %s171 = sphi 0, %s170
      %s187 = sphi 0, %s171
      %s193 = sphi 0, %s195
      %s196 = sphi 0, %s193
      %s197 = sphi 0, %s196
      %s213 = sphi 0, %s197
      %s219 = sphi 0, %s221
      %s222 = sphi 0, %s219
      %s223 = sphi 0, %s222
      %s239 = sphi 0, %s223
      %s245 = sphi 0, %s247
      %s248 = sphi 0, %s245
      %s249 = sphi 0, %s248
      %s265 = sphi 0, %s249
      %s271 = sphi 0, %s273
      %s274 = sphi 0, %s271
      %s275 = sphi 0, %s274
      %s291 = sphi 0, %s275
      %s297 = sphi 0, %s299
      %s300 = sphi 0, %s297
      %s301 = sphi 0, %s300
      %s317 = sphi 0, %s301
      %s323 = sphi 0, %s325
      %s326 = sphi 0, %s323
      %s327 = sphi 0, %s326
      %s343 = sphi 0, %s327
      %s349 = sphi 0, %s351
      %s352 = sphi 0, %s349
      %s353 = sphi 0, %s352
      %s369 = sphi 0, %s353
      %s375 = sphi 0, %s377
      %s378 = sphi 0, %s375
      %s379 = sphi 0, %s378
      %s395 = sphi 0, %s379
      %s405 = sphi 0, %s407
      %s408 = sphi 0, %s405
      %s409 = sphi 0, %s408
      %s425 = sphi 0, %s409
    $region4: #{bidenoise_forward.1} parent=1 // loop_header_branch
      %25 = sbr.rel (%p23) target = $region8
    $region5: #{bidenoise_forward.1} parent=1 // loop_body
      %s27 = ssub.s32 %s22, 1
      %s28 = ssub.s32 %s22, 2
      %s38 = sadd.s32 1, %s31
      %p39 = scmp.ge.s32.totalorder %s38, 1
      %s40 = scalar_select %p39, 0, %s38
      %s41 = sadd.s32 1, %s30
      %s42 = scalar_select %p39, %s41, %s30
      %p43 = scmp.ge.s32.totalorder %s42, 2
      %s44 = scalar_select %p43, 0, %s42
      %s45 = sadd.s32 1, %s29
      %s46 = scalar_select %p43, %s45, %s29
      %p47 = scmp.ge.s32.totalorder %s46, 2
      %s48 = scalar_select %p47, 0, %s46
      %s49 = ssub.s32 %s29, %s48
      %s50 = ssub.s32 %s30, %s44
      %s51 = sor.u32 %s49, %s50
      %s52 = ssub.s32 %s31, %s40
      %s53 = sor.u32 %s51, %s52
      %p54 = scmp.eq.s32.totalorder %s53, 0
      %s56 = sadd.s32 %s55, 1
      %s57 = scalar_select %p54, %s55, %s56
      %p60 = pneg %p54
      %p61 = scmp.eq.s32.totalorder %s22, 3
      %p62 = por %p60, %p61
      %p63 = scmp.ne.s32.totalorder %s55, %s58
      %p64 = scmp.eq.s32.totalorder %s22, 0
      %p65 = por %p63, %p64
      %p66 = scmp.ne.s32.totalorder %s55, %s58
      %p67 = scmp.eq.s32.totalorder %s27, 3
      %p68 = por %p66, %p67
      %p69 = scmp.ne.s32.totalorder %s58, %s59
      %p70 = scmp.eq.s32.totalorder %s27, 0
      %p71 = por %p69, %p70
      %p72 = scmp.ne.s32.totalorder %s58, %s59
      %p73 = scmp.eq.s32.totalorder %s28, 3
      %p74 = por %p72, %p73
      %p76 = scmp.ne.s32.totalorder %s59, %s75
      %p77 = scmp.eq.s32.totalorder %s28, 0
      %p78 = por %p76, %p77
      %s79 = ssub.s32 %s29, %s48
      %s80 = ssub.s32 %s30, %s44
      %s81 = sor.u32 %s79, %s80
      %p82 = scmp.eq.s32.totalorder %s81, 0
      %s84 = sadd.s32 %s83, 1
      %s85 = scalar_select %p82, %s83, %s84
      %p88 = pneg %p82
      %p89 = scmp.eq.s32.totalorder %s22, 3
      %p90 = por %p88, %p89
      %p91 = scmp.ne.s32.totalorder %s83, %s86
      %p92 = scmp.eq.s32.totalorder %s22, 0
      %p93 = por %p91, %p92
      %p94 = scmp.ne.s32.totalorder %s83, %s86
      %p95 = scmp.eq.s32.totalorder %s27, 3
      %p96 = por %p94, %p95
      %p97 = scmp.ne.s32.totalorder %s86, %s87
      %p98 = scmp.eq.s32.totalorder %s27, 0
      %p99 = por %p97, %p98
      %p100 = scmp.ne.s32.totalorder %s86, %s87
      %p101 = scmp.eq.s32.totalorder %s28, 3
      %p102 = por %p100, %p101
      %p104 = scmp.ne.s32.totalorder %s87, %s103
      %p105 = scmp.eq.s32.totalorder %s28, 0
      %p106 = por %p104, %p105
      %s107 = ssub.s32 %s29, %s48
      %s108 = ssub.s32 %s30, %s44
      %s109 = sor.u32 %s107, %s108
      %p110 = scmp.eq.s32.totalorder %s109, 0
      %s112 = sadd.s32 %s111, 1
      %s113 = scalar_select %p110, %s111, %s112
      %p116 = pneg %p110
      %p117 = scmp.eq.s32.totalorder %s22, 3
      %p118 = por %p116, %p117
      %p119 = scmp.ne.s32.totalorder %s111, %s114
      %p120 = scmp.eq.s32.totalorder %s22, 0
      %p121 = por %p119, %p120
      %p122 = scmp.ne.s32.totalorder %s111, %s114
      %p123 = scmp.eq.s32.totalorder %s27, 3
      %p124 = por %p122, %p123
      %p125 = scmp.ne.s32.totalorder %s114, %s115
      %p126 = scmp.eq.s32.totalorder %s27, 0
      %p127 = por %p125, %p126
      %p128 = scmp.ne.s32.totalorder %s114, %s115
      %p129 = scmp.eq.s32.totalorder %s28, 3
      %p130 = por %p128, %p129
      %p132 = scmp.ne.s32.totalorder %s115, %s131
      %p133 = scmp.eq.s32.totalorder %s28, 0
      %p134 = por %p132, %p133
      %s135 = ssub.s32 %s29, %s48
      %s136 = ssub.s32 %s30, %s44
      %s137 = sor.u32 %s135, %s136
      %p138 = scmp.eq.s32.totalorder %s137, 0
      %s140 = sadd.s32 %s139, 1
      %s141 = scalar_select %p138, %s139, %s140
      %p144 = pneg %p138
      %p145 = scmp.eq.s32.totalorder %s22, 3
      %p146 = por %p144, %p145
      %p147 = scmp.ne.s32.totalorder %s139, %s142
      %p148 = scmp.eq.s32.totalorder %s22, 0
      %p149 = por %p147, %p148
      %p150 = scmp.ne.s32.totalorder %s139, %s142
      %p151 = scmp.eq.s32.totalorder %s27, 3
      %p152 = por %p150, %p151
      %p153 = scmp.ne.s32.totalorder %s142, %s143
      %p154 = scmp.eq.s32.totalorder %s27, 0
      %p155 = por %p153, %p154
      %p156 = scmp.ne.s32.totalorder %s142, %s143
      %p157 = scmp.eq.s32.totalorder %s28, 3
      %p158 = por %p156, %p157
      %p160 = scmp.ne.s32.totalorder %s143, %s159
      %p161 = scmp.eq.s32.totalorder %s28, 0
      %p162 = por %p160, %p161
      %s163 = ssub.s32 %s29, %s48
      %s164 = ssub.s32 %s30, %s44
      %s165 = sor.u32 %s163, %s164
      %p166 = scmp.eq.s32.totalorder %s165, 0
      %s168 = sadd.s32 %s167, 1
      %s169 = scalar_select %p166, %s167, %s168
      %p172 = pneg %p166
      %p173 = scmp.eq.s32.totalorder %s22, 3
      %p174 = por %p172, %p173
      %p175 = scmp.ne.s32.totalorder %s167, %s170
      %p176 = scmp.eq.s32.totalorder %s22, 0
      %p177 = por %p175, %p176
      %p178 = scmp.ne.s32.totalorder %s167, %s170
      %p179 = scmp.eq.s32.totalorder %s27, 3
      %p180 = por %p178, %p179
      %p181 = scmp.ne.s32.totalorder %s170, %s171
      %p182 = scmp.eq.s32.totalorder %s27, 0
      %p183 = por %p181, %p182
      %p184 = scmp.ne.s32.totalorder %s170, %s171
      %p185 = scmp.eq.s32.totalorder %s28, 3
      %p186 = por %p184, %p185
      %p188 = scmp.ne.s32.totalorder %s171, %s187
      %p189 = scmp.eq.s32.totalorder %s28, 0
      %p190 = por %p188, %p189
      %s191 = ssub.s32 %s29, %s48
      %p192 = scmp.eq.s32.totalorder %s191, 0
      %s194 = sadd.s32 %s193, 1
      %s195 = scalar_select %p192, %s193, %s194
      %p198 = pneg %p192
      %p199 = scmp.eq.s32.totalorder %s22, 3
      %p200 = por %p198, %p199
      %p201 = scmp.ne.s32.totalorder %s193, %s196
      %p202 = scmp.eq.s32.totalorder %s22, 0
      %p203 = por %p201, %p202
      %p204 = scmp.ne.s32.totalorder %s193, %s196
      %p205 = scmp.eq.s32.totalorder %s27, 3
      %p206 = por %p204, %p205
      %p207 = scmp.ne.s32.totalorder %s196, %s197
      %p208 = scmp.eq.s32.totalorder %s27, 0
      %p209 = por %p207, %p208
      %p210 = scmp.ne.s32.totalorder %s196, %s197
      %p211 = scmp.eq.s32.totalorder %s28, 3
      %p212 = por %p210, %p211
      %p214 = scmp.ne.s32.totalorder %s197, %s213
      %p215 = scmp.eq.s32.totalorder %s28, 0
      %p216 = por %p214, %p215
      %s217 = ssub.s32 %s29, %s48
      %p218 = scmp.eq.s32.totalorder %s217, 0
      %s220 = sadd.s32 %s219, 1
      %s221 = scalar_select %p218, %s219, %s220
      %p224 = pneg %p218
      %p225 = scmp.eq.s32.totalorder %s22, 3
      %p226 = por %p224, %p225
      %p227 = scmp.ne.s32.totalorder %s219, %s222
      %p228 = scmp.eq.s32.totalorder %s22, 0
      %p229 = por %p227, %p228
      %p230 = scmp.ne.s32.totalorder %s219, %s222
      %p231 = scmp.eq.s32.totalorder %s27, 3
      %p232 = por %p230, %p231
      %p233 = scmp.ne.s32.totalorder %s222, %s223
      %p234 = scmp.eq.s32.totalorder %s27, 0
      %p235 = por %p233, %p234
      %p236 = scmp.ne.s32.totalorder %s222, %s223
      %p237 = scmp.eq.s32.totalorder %s28, 3
      %p238 = por %p236, %p237
      %p240 = scmp.ne.s32.totalorder %s223, %s239
      %p241 = scmp.eq.s32.totalorder %s28, 0
      %p242 = por %p240, %p241
      %s243 = ssub.s32 %s29, %s48
      %p244 = scmp.eq.s32.totalorder %s243, 0
      %s246 = sadd.s32 %s245, 1
      %s247 = scalar_select %p244, %s245, %s246
      %p250 = pneg %p244
      %p251 = scmp.eq.s32.totalorder %s22, 3
      %p252 = por %p250, %p251
      %p253 = scmp.ne.s32.totalorder %s245, %s248
      %p254 = scmp.eq.s32.totalorder %s22, 0
      %p255 = por %p253, %p254
      %p256 = scmp.ne.s32.totalorder %s245, %s248
      %p257 = scmp.eq.s32.totalorder %s27, 3
      %p258 = por %p256, %p257
      %p259 = scmp.ne.s32.totalorder %s248, %s249
      %p260 = scmp.eq.s32.totalorder %s27, 0
      %p261 = por %p259, %p260
      %p262 = scmp.ne.s32.totalorder %s248, %s249
      %p263 = scmp.eq.s32.totalorder %s28, 3
      %p264 = por %p262, %p263
      %p266 = scmp.ne.s32.totalorder %s249, %s265
      %p267 = scmp.eq.s32.totalorder %s28, 0
      %p268 = por %p266, %p267
      %s269 = ssub.s32 %s29, %s48
      %p270 = scmp.eq.s32.totalorder %s269, 0
      %s272 = sadd.s32 %s271, 1
      %s273 = scalar_select %p270, %s271, %s272
      %p276 = pneg %p270
      %p277 = scmp.eq.s32.totalorder %s22, 3
      %p278 = por %p276, %p277
      %p279 = scmp.ne.s32.totalorder %s271, %s274
      %p280 = scmp.eq.s32.totalorder %s22, 0
      %p281 = por %p279, %p280
      %p282 = scmp.ne.s32.totalorder %s271, %s274
      %p283 = scmp.eq.s32.totalorder %s27, 3
      %p284 = por %p282, %p283
      %p285 = scmp.ne.s32.totalorder %s274, %s275
      %p286 = scmp.eq.s32.totalorder %s27, 0
      %p287 = por %p285, %p286
      %p288 = scmp.ne.s32.totalorder %s274, %s275
      %p289 = scmp.eq.s32.totalorder %s28, 3
      %p290 = por %p288, %p289
      %p292 = scmp.ne.s32.totalorder %s275, %s291
      %p293 = scmp.eq.s32.totalorder %s28, 0
      %p294 = por %p292, %p293
      %s295 = ssub.s32 %s29, %s48
      %p296 = scmp.eq.s32.totalorder %s295, 0
      %s298 = sadd.s32 %s297, 1
      %s299 = scalar_select %p296, %s297, %s298
      %p302 = pneg %p296
      %p303 = scmp.eq.s32.totalorder %s22, 3
      %p304 = por %p302, %p303
      %p305 = scmp.ne.s32.totalorder %s297, %s300
      %p306 = scmp.eq.s32.totalorder %s22, 0
      %p307 = por %p305, %p306
      %p308 = scmp.ne.s32.totalorder %s297, %s300
      %p309 = scmp.eq.s32.totalorder %s27, 3
      %p310 = por %p308, %p309
      %p311 = scmp.ne.s32.totalorder %s300, %s301
      %p312 = scmp.eq.s32.totalorder %s27, 0
      %p313 = por %p311, %p312
      %p314 = scmp.ne.s32.totalorder %s300, %s301
      %p315 = scmp.eq.s32.totalorder %s28, 3
      %p316 = por %p314, %p315
      %p318 = scmp.ne.s32.totalorder %s301, %s317
      %p319 = scmp.eq.s32.totalorder %s28, 0
      %p320 = por %p318, %p319
      %s321 = ssub.s32 %s29, %s48
      %p322 = scmp.eq.s32.totalorder %s321, 0
      %s324 = sadd.s32 %s323, 1
      %s325 = scalar_select %p322, %s323, %s324
      %p328 = pneg %p322
      %p329 = scmp.eq.s32.totalorder %s22, 3
      %p330 = por %p328, %p329
      %p331 = scmp.ne.s32.totalorder %s323, %s326
      %p332 = scmp.eq.s32.totalorder %s22, 0
      %p333 = por %p331, %p332
      %p334 = scmp.ne.s32.totalorder %s323, %s326
      %p335 = scmp.eq.s32.totalorder %s27, 3
      %p336 = por %p334, %p335
      %p337 = scmp.ne.s32.totalorder %s326, %s327
      %p338 = scmp.eq.s32.totalorder %s27, 0
      %p339 = por %p337, %p338
      %p340 = scmp.ne.s32.totalorder %s326, %s327
      %p341 = scmp.eq.s32.totalorder %s28, 3
      %p342 = por %p340, %p341
      %p344 = scmp.ne.s32.totalorder %s327, %s343
      %p345 = scmp.eq.s32.totalorder %s28, 0
      %p346 = por %p344, %p345
      %s347 = ssub.s32 %s29, %s48
      %p348 = scmp.eq.s32.totalorder %s347, 0
      %s350 = sadd.s32 %s349, 1
      %s351 = scalar_select %p348, %s349, %s350
      %p354 = pneg %p348
      %p355 = scmp.eq.s32.totalorder %s22, 3
      %p356 = por %p354, %p355
      %p357 = scmp.ne.s32.totalorder %s349, %s352
      %p358 = scmp.eq.s32.totalorder %s22, 0
      %p359 = por %p357, %p358
      %p360 = scmp.ne.s32.totalorder %s349, %s352
      %p361 = scmp.eq.s32.totalorder %s27, 3
      %p362 = por %p360, %p361
      %p363 = scmp.ne.s32.totalorder %s352, %s353
      %p364 = scmp.eq.s32.totalorder %s27, 0
      %p365 = por %p363, %p364
      %p366 = scmp.ne.s32.totalorder %s352, %s353
      %p367 = scmp.eq.s32.totalorder %s28, 3
      %p368 = por %p366, %p367
      %p370 = scmp.ne.s32.totalorder %s353, %s369
      %p371 = scmp.eq.s32.totalorder %s28, 0
      %p372 = por %p370, %p371
      %s373 = ssub.s32 %s29, %s48
      %p374 = scmp.eq.s32.totalorder %s373, 0
      %s376 = sadd.s32 %s375, 1
      %s377 = scalar_select %p374, %s375, %s376
      %p380 = pneg %p374
      %p381 = scmp.eq.s32.totalorder %s22, 3
      %p382 = por %p380, %p381
      %p383 = scmp.ne.s32.totalorder %s375, %s378
      %p384 = scmp.eq.s32.totalorder %s22, 0
      %p385 = por %p383, %p384
      %p386 = scmp.ne.s32.totalorder %s375, %s378
      %p387 = scmp.eq.s32.totalorder %s27, 3
      %p388 = por %p386, %p387
      %p389 = scmp.ne.s32.totalorder %s378, %s379
      %p390 = scmp.eq.s32.totalorder %s27, 0
      %p391 = por %p389, %p390
      %p392 = scmp.ne.s32.totalorder %s378, %s379
      %p393 = scmp.eq.s32.totalorder %s28, 3
      %p394 = por %p392, %p393
      %p396 = scmp.ne.s32.totalorder %s379, %s395
      %p397 = scmp.eq.s32.totalorder %s28, 0
      %p398 = por %p396, %p397
      %s399 = ssub.s32 %s29, %s48
      %s400 = ssub.s32 %s30, %s44
      %s401 = sor.u32 %s399, %s400
      %s402 = ssub.s32 %s31, %s40
      %s403 = sor.u32 %s401, %s402
      %p404 = scmp.eq.s32.totalorder %s403, 0
      %s406 = sadd.s32 %s405, 1
      %s407 = scalar_select %p404, %s405, %s406
      %p410 = pneg %p404
      %p411 = scmp.eq.s32.totalorder %s22, 3
      %p412 = por %p410, %p411
      %p413 = scmp.ne.s32.totalorder %s405, %s408
      %p414 = scmp.eq.s32.totalorder %s22, 0
      %p415 = por %p413, %p414
      %p416 = scmp.ne.s32.totalorder %s405, %s408
      %p417 = scmp.eq.s32.totalorder %s27, 3
      %p418 = por %p416, %p417
      %p419 = scmp.ne.s32.totalorder %s408, %s409
      %p420 = scmp.eq.s32.totalorder %s27, 0
      %p421 = por %p419, %p420
      %p422 = scmp.ne.s32.totalorder %s408, %s409
      %p423 = scmp.eq.s32.totalorder %s28, 3
      %p424 = por %p422, %p423
      %p426 = scmp.ne.s32.totalorder %s409, %s425
      %p427 = scmp.eq.s32.totalorder %s28, 0
      %p428 = por %p426, %p427
      %p429 = scmp.le.s32.totalorder 1, %s22
      %p430 = scmp.lt.s32.totalorder %s22, 5
      %p431 = pnand %p429, %p430
      %p432 = pneg %p431
      // Predicated region
      $region9: #{bidenoise_forward.1} parent=5 // pred_check
        _
      $region10: #{bidenoise_forward.1} parent=5 // pred_check_branch
        %434 = sbr.rel (%p431) target = $region12
      $region11: #{bidenoise_forward.1} parent=5 // pred_region
        %s435 = ssub.s32 %s22, 1
      $region12: #{bidenoise_forward.1} parent=5 // pred_fallthru
        _
      %p436 = scmp.lt.s32.totalorder %s22, 4
      // Predicated region
      $region13: #{bidenoise_forward.1} parent=5 // pred_check
        %p437 = pneg %p436
      $region14: #{bidenoise_forward.1} parent=5 // pred_check_branch
        %439 = sbr.rel (%p437) target = $region16
      $region15: #{bidenoise_forward.1} parent=5 // pred_region
        // Predicated region
        $region17: #{bidenoise_forward.1} parent=15 // pred_check
          %p440 = pneg %p65
        $region18: #{bidenoise_forward.1} parent=15 // pred_check_branch
          %442 = sbr.rel (%p440) target = $region20
        $region19: #{bidenoise_forward.1} parent=15 // pred_region
          %s443 = smul.u32 2, %s31
          %p444 = scmp.lt.s32.totalorder %s29, 1
          %s445 = scalar_select %p444, %s29, 1
          %p446 = scmp.lt.s32.totalorder %s30, 1
          %s447 = scalar_select %p446, %s30, 1
          %p448 = scmp.lt.s32.totalorder %s443, 1
          %s449 = scalar_select %p448, %s443, 1
          %s450 = smul.addr %s447, 2
          %s451 = sadd.s32 %s449, %s450
          %s452 = smul.addr %s445, 4
          %s453 = sadd.s32 %s451, %s452
          %s454 = smul.addr %s453, 4
          %s455 = scalar_lea.vmem %s0, %s454
          %s456 = smul.u32 2, %s31
        $region20: #{bidenoise_forward.1} parent=15 // pred_fallthru
          _
        // Predicated region
        $region21: #{bidenoise_forward.1} parent=15 // pred_check
          %p457 = pneg %p93
        $region22: #{bidenoise_forward.1} parent=15 // pred_check_branch
          %459 = sbr.rel (%p457) target = $region24
        $region23: #{bidenoise_forward.1} parent=15 // pred_region
          %p460 = scmp.lt.s32.totalorder %s29, 1
          %s461 = scalar_select %p460, %s29, 1
          %p462 = scmp.lt.s32.totalorder %s30, 1
          %s463 = scalar_select %p462, %s30, 1
          %s464 = smul.addr %s463, 4
          %s465 = smul.addr %s461, 8
          %s466 = sadd.s32 %s464, %s465
          %s467 = scalar_lea.vmem %s1, %s466
        $region24: #{bidenoise_forward.1} parent=15 // pred_fallthru
          _
        // Predicated region
        $region25: #{bidenoise_forward.1} parent=15 // pred_check
          %p468 = pneg %p121
        $region26: #{bidenoise_forward.1} parent=15 // pred_check_branch
          %470 = sbr.rel (%p468) target = $region28
        $region27: #{bidenoise_forward.1} parent=15 // pred_region
          %p471 = scmp.lt.s32.totalorder %s29, 1
          %s472 = scalar_select %p471, %s29, 1
          %p473 = scmp.lt.s32.totalorder %s30, 1
          %s474 = scalar_select %p473, %s30, 1
          %s475 = smul.addr %s474, 4
          %s476 = smul.addr %s472, 8
          %s477 = sadd.s32 %s475, %s476
          %s478 = scalar_lea.vmem %s2, %s477
        $region28: #{bidenoise_forward.1} parent=15 // pred_fallthru
          _
        // Predicated region
        $region29: #{bidenoise_forward.1} parent=15 // pred_check
          %p479 = pneg %p149
        $region30: #{bidenoise_forward.1} parent=15 // pred_check_branch
          %481 = sbr.rel (%p479) target = $region32
        $region31: #{bidenoise_forward.1} parent=15 // pred_region
          %p482 = scmp.lt.s32.totalorder %s29, 1
          %s483 = scalar_select %p482, %s29, 1
          %p484 = scmp.lt.s32.totalorder %s30, 1
          %s485 = scalar_select %p484, %s30, 1
          %s486 = smul.addr %s485, 4
          %s487 = smul.addr %s483, 8
          %s488 = sadd.s32 %s486, %s487
          %s489 = scalar_lea.vmem %s3, %s488
        $region32: #{bidenoise_forward.1} parent=15 // pred_fallthru
          _
        // Predicated region
        $region33: #{bidenoise_forward.1} parent=15 // pred_check
          %p490 = pneg %p177
        $region34: #{bidenoise_forward.1} parent=15 // pred_check_branch
          %492 = sbr.rel (%p490) target = $region36
        $region35: #{bidenoise_forward.1} parent=15 // pred_region
          %p493 = scmp.lt.s32.totalorder %s29, 1
          %s494 = scalar_select %p493, %s29, 1
          %p495 = scmp.lt.s32.totalorder %s30, 1
          %s496 = scalar_select %p495, %s30, 1
          %s497 = smul.addr %s496, 4
          %s498 = smul.addr %s494, 8
          %s499 = sadd.s32 %s497, %s498
          %s500 = scalar_lea.vmem %s4, %s499
        $region36: #{bidenoise_forward.1} parent=15 // pred_fallthru
          _
        // Predicated region
        $region37: #{bidenoise_forward.1} parent=15 // pred_check
          %p501 = pneg %p203
        $region38: #{bidenoise_forward.1} parent=15 // pred_check_branch
          %503 = sbr.rel (%p501) target = $region40
        $region39: #{bidenoise_forward.1} parent=15 // pred_region
          %p504 = scmp.lt.s32.totalorder %s29, 1
          %s505 = scalar_select %p504, %s29, 1
          %s506 = smul.addr %s505, 16
          %s507 = smul.addr %s506, 4
          %s508 = scalar_lea.vmem %s5, %s507
        $region40: #{bidenoise_forward.1} parent=15 // pred_fallthru
          _
        // Predicated region
        $region41: #{bidenoise_forward.1} parent=15 // pred_check
          %p509 = pneg %p229
        $region42: #{bidenoise_forward.1} parent=15 // pred_check_branch
          %511 = sbr.rel (%p509) target = $region44
        $region43: #{bidenoise_forward.1} parent=15 // pred_region
          %p512 = scmp.lt.s32.totalorder %s29, 1
          %s513 = scalar_select %p512, %s29, 1
          %s514 = smul.addr %s513, 4
          %s515 = scalar_lea.vmem %s6, %s514
        $region44: #{bidenoise_forward.1} parent=15 // pred_fallthru
          _
        // Predicated region
        $region45: #{bidenoise_forward.1} parent=15 // pred_check
          %p516 = pneg %p255
        $region46: #{bidenoise_forward.1} parent=15 // pred_check_branch
          %518 = sbr.rel (%p516) target = $region48
        $region47: #{bidenoise_forward.1} parent=15 // pred_region
          %p519 = scmp.lt.s32.totalorder %s29, 1
          %s520 = scalar_select %p519, %s29, 1
          %s521 = smul.addr %s520, 256
          %s522 = smul.addr %s521, 4
          %s523 = scalar_lea.vmem %s7, %s522
        $region48: #{bidenoise_forward.1} parent=15 // pred_fallthru
          _
        // Predicated region
        $region49: #{bidenoise_forward.1} parent=15 // pred_check
          %p524 = pneg %p281
        $region50: #{bidenoise_forward.1} parent=15 // pred_check_branch
          %526 = sbr.rel (%p524) target = $region52
        $region51: #{bidenoise_forward.1} parent=15 // pred_region
          %p527 = scmp.lt.s32.totalorder %s29, 1
          %s528 = scalar_select %p527, %s29, 1
          %s529 = smul.addr %s528, 4
          %s530 = scalar_lea.vmem %s8, %s529
        $region52: #{bidenoise_forward.1} parent=15 // pred_fallthru
          _
        // Predicated region
        $region53: #{bidenoise_forward.1} parent=15 // pred_check
          %p531 = pneg %p307
        $region54: #{bidenoise_forward.1} parent=15 // pred_check_branch
          %533 = sbr.rel (%p531) target = $region56
        $region55: #{bidenoise_forward.1} parent=15 // pred_region
          %p534 = scmp.lt.s32.totalorder %s29, 1
          %s535 = scalar_select %p534, %s29, 1
          %s536 = smul.addr %s535, 256
          %s537 = smul.addr %s536, 4
          %s538 = scalar_lea.vmem %s9, %s537
        $region56: #{bidenoise_forward.1} parent=15 // pred_fallthru
          _
        // Predicated region
        $region57: #{bidenoise_forward.1} parent=15 // pred_check
          %p539 = pneg %p333
        $region58: #{bidenoise_forward.1} parent=15 // pred_check_branch
          %541 = sbr.rel (%p539) target = $region60
        $region59: #{bidenoise_forward.1} parent=15 // pred_region
          %p542 = scmp.lt.s32.totalorder %s29, 1
          %s543 = scalar_select %p542, %s29, 1
          %s544 = smul.addr %s543, 4
          %s545 = scalar_lea.vmem %s10, %s544
        $region60: #{bidenoise_forward.1} parent=15 // pred_fallthru
          _
        // Predicated region
        $region61: #{bidenoise_forward.1} parent=15 // pred_check
          %p546 = pneg %p359
        $region62: #{bidenoise_forward.1} parent=15 // pred_check_branch
          %548 = sbr.rel (%p546) target = $region64
        $region63: #{bidenoise_forward.1} parent=15 // pred_region
          %s549 = sand.u32 %s349, 1
          %s550 = scalar_lea.sflag [#allocation3], %s549
          %s551 = sand.u32 %s349, 1
          %s552 = smul.addr %s551, 256
          %s553 = scalar_lea.vmem [#allocation2], %s552
          %s555 = ssub.s32 4096, 4096
          %556 = vsyncadd %s550, %s555
          %s557 = smul.addr %s29, 64
          %s558 = smul.addr %s557, 64
          %s559 = scalar_lea.hbm %s11, %s558
          %s560 = sshll.u32 %s553, 4
          %s561 = int_to_ptr.vmem [resolvable:$true] %s560
          %566 = dma.hbm_to_vmem [thread:$0]  %s559, 4096, %s561, %s550, 64, 64, 4
        $region64: #{bidenoise_forward.1} parent=15 // pred_fallthru
          _
        // Predicated region
        $region65: #{bidenoise_forward.1} parent=15 // pred_check
          %p567 = pneg %p385
        $region66: #{bidenoise_forward.1} parent=15 // pred_check_branch
          %569 = sbr.rel (%p567) target = $region68
        $region67: #{bidenoise_forward.1} parent=15 // pred_region
          %p570 = scmp.lt.s32.totalorder %s29, 1
          %s571 = scalar_select %p570, %s29, 1
          %s572 = scalar_lea.vmem %s12, %s571
        $region68: #{bidenoise_forward.1} parent=15 // pred_fallthru
          _
      $region16: #{bidenoise_forward.1} parent=5 // pred_fallthru
        _
      %p573 = scmp.le.s32.totalorder 1, %s22
      %p574 = scmp.lt.s32.totalorder %s22, 5
      %p575 = pnand %p573, %p574
      %p576 = pneg %p575
      // Predicated region
      $region69: #{bidenoise_forward.1} parent=5 // pred_check
        _
      $region70: #{bidenoise_forward.1} parent=5 // pred_check_branch
        %578 = sbr.rel (%p575) target = $region72
      $region71: #{bidenoise_forward.1} parent=5 // pred_region
        %s579 = ssub.s32 %s22, 1
        %s580 = sand.u32 %s352, 1
        %s581 = scalar_lea.sflag [#allocation3], %s580
        %s582 = sand.u32 %s352, 1
        %s583 = smul.addr %s582, 256
        %s584 = scalar_lea.vmem [#allocation2], %s583
        // Predicated region
        $region73: #{bidenoise_forward.1} parent=71 // pred_check
          %p585 = pneg %p365
        $region74: #{bidenoise_forward.1} parent=71 // pred_check_branch
          %587 = sbr.rel (%p585) target = $region76
        $region75: #{bidenoise_forward.1} parent=71 // pred_region
          %588 = dma.done %s581, 4096
        $region76: #{bidenoise_forward.1} parent=71 // pred_fallthru
          _
        %s589 = smul.u32 2, %s34
        %p590 = scmp.lt.s32.totalorder %s32, 1
        %s591 = scalar_select %p590, %s32, 1
        %p592 = scmp.lt.s32.totalorder %s33, 1
        %s593 = scalar_select %p592, %s33, 1
        %p594 = scmp.lt.s32.totalorder %s589, 1
        %s595 = scalar_select %p594, %s589, 1
        %s596 = smul.addr %s593, 2
        %s597 = sadd.s32 %s595, %s596
        %s598 = smul.addr %s591, 4
        %s599 = sadd.s32 %s597, %s598
        %s600 = smul.addr %s599, 4
        %s601 = scalar_lea.vmem %s0, %s600
        %p602 = pneg %p71
        %p603 = pneg %p68
        %p604 = scmp.lt.s32.totalorder %s32, 1
        %s605 = scalar_select %p604, %s32, 1
        %p606 = scmp.lt.s32.totalorder %s33, 1
        %s607 = scalar_select %p606, %s33, 1
        %s608 = smul.addr %s607, 4
        %s609 = smul.addr %s605, 8
        %s610 = sadd.s32 %s608, %s609
        %s611 = scalar_lea.vmem %s1, %s610
        %p612 = pneg %p99
        %p613 = pneg %p96
        %p614 = scmp.lt.s32.totalorder %s32, 1
        %s615 = scalar_select %p614, %s32, 1
        %p616 = scmp.lt.s32.totalorder %s33, 1
        %s617 = scalar_select %p616, %s33, 1
        %s618 = smul.addr %s617, 4
        %s619 = smul.addr %s615, 8
        %s620 = sadd.s32 %s618, %s619
        %s621 = scalar_lea.vmem %s2, %s620
        %p622 = pneg %p127
        %p623 = pneg %p124
        %p624 = scmp.lt.s32.totalorder %s32, 1
        %s625 = scalar_select %p624, %s32, 1
        %p626 = scmp.lt.s32.totalorder %s33, 1
        %s627 = scalar_select %p626, %s33, 1
        %s628 = smul.addr %s627, 4
        %s629 = smul.addr %s625, 8
        %s630 = sadd.s32 %s628, %s629
        %s631 = scalar_lea.vmem %s3, %s630
        %p632 = pneg %p155
        %p633 = pneg %p152
        %p634 = scmp.lt.s32.totalorder %s32, 1
        %s635 = scalar_select %p634, %s32, 1
        %p636 = scmp.lt.s32.totalorder %s33, 1
        %s637 = scalar_select %p636, %s33, 1
        %s638 = smul.addr %s637, 4
        %s639 = smul.addr %s635, 8
        %s640 = sadd.s32 %s638, %s639
        %s641 = scalar_lea.vmem %s4, %s640
        %p642 = pneg %p183
        %p643 = pneg %p180
        %p644 = scmp.lt.s32.totalorder %s32, 1
        %s645 = scalar_select %p644, %s32, 1
        %s646 = smul.addr %s645, 16
        %s647 = smul.addr %s646, 4
        %s648 = scalar_lea.vmem %s5, %s647
        %p649 = pneg %p209
        %p650 = pneg %p206
        %p651 = scmp.lt.s32.totalorder %s32, 1
        %s652 = scalar_select %p651, %s32, 1
        %s653 = smul.addr %s652, 4
        %s654 = scalar_lea.vmem %s6, %s653
        %p655 = pneg %p235
        %p656 = pneg %p232
        %p657 = scmp.lt.s32.totalorder %s32, 1
        %s658 = scalar_select %p657, %s32, 1
        %s659 = smul.addr %s658, 256
        %s660 = smul.addr %s659, 4
        %s661 = scalar_lea.vmem %s7, %s660
        %p662 = pneg %p261
        %p663 = pneg %p258
        %p664 = scmp.lt.s32.totalorder %s32, 1
        %s665 = scalar_select %p664, %s32, 1
        %s666 = smul.addr %s665, 4
        %s667 = scalar_lea.vmem %s8, %s666
        %p668 = pneg %p287
        %p669 = pneg %p284
        %p670 = scmp.lt.s32.totalorder %s32, 1
        %s671 = scalar_select %p670, %s32, 1
        %s672 = smul.addr %s671, 256
        %s673 = smul.addr %s672, 4
        %s674 = scalar_lea.vmem %s9, %s673
        %p675 = pneg %p313
        %p676 = pneg %p310
        %p677 = scmp.lt.s32.totalorder %s32, 1
        %s678 = scalar_select %p677, %s32, 1
        %s679 = smul.addr %s678, 4
        %s680 = scalar_lea.vmem %s10, %s679
        %p681 = pneg %p339
        %p682 = pneg %p336
        %s683 = sand.u32 %s352, 1
        %s684 = scalar_lea.sflag [#allocation3], %s683
        %s685 = sand.u32 %s352, 1
        %s686 = smul.addr %s685, 256
        %s687 = scalar_lea.vmem [#allocation2], %s686
        %p688 = pneg %p365
        %p689 = pneg %p362
        %p690 = scmp.lt.s32.totalorder %s32, 1
        %s691 = scalar_select %p690, %s32, 1
        %s692 = scalar_lea.vmem %s12, %s691
        %p693 = pneg %p391
        %p694 = pneg %p388
        %p695 = pneg %p421
        %p696 = pneg %p418
        %s697 = smul.u32 2, %s34
        %p698 = scmp.lt.s32.totalorder %s32, 1
        %s699 = scalar_select %p698, %s32, 1
        %p700 = scmp.lt.s32.totalorder %s33, 1
        %s701 = scalar_select %p700, %s33, 1
        %p702 = scmp.lt.s32.totalorder %s697, 1
        %s703 = scalar_select %p702, %s697, 1
        %s704 = smul.addr %s701, 2
        %s705 = sadd.s32 %s703, %s704
        %s706 = smul.addr %s699, 4
        %s707 = sadd.s32 %s705, %s706
        %s708 = smul.addr %s707, 8
        %s709 = scalar_lea.vmem %s13, %s708
        %s710 = smul.u32 2, %s34
        %p711 = scmp.lt.s32.totalorder %s32, 1
        %s712 = scalar_select %p711, %s32, 1
        %p713 = scmp.lt.s32.totalorder %s33, 1
        %s714 = scalar_select %p713, %s33, 1
        %p715 = scmp.lt.s32.totalorder %s710, 1
        %s716 = scalar_select %p715, %s710, 1
        %s717 = smul.addr %s714, 2
        %s718 = sadd.s32 %s716, %s717
        %s719 = smul.addr %s712, 4
        %s720 = sadd.s32 %s718, %s719
        %s721 = smul.addr %s720, 4
        %s722 = scalar_lea.vmem %s0, %s721
        %s723 = smul.u32 2, %s34
        %p724 = scmp.lt.s32.totalorder %s32, 1
        %s725 = scalar_select %p724, %s32, 1
        %p726 = scmp.lt.s32.totalorder %s33, 1
        %s727 = scalar_select %p726, %s33, 1
        %s728 = smul.addr %s727, 4
        %s729 = smul.addr %s725, 8
        %s730 = sadd.s32 %s728, %s729
        %s731 = scalar_lea.vmem %s1, %s730
        %p732 = scmp.lt.s32.totalorder %s32, 1
        %s733 = scalar_select %p732, %s32, 1
        %p734 = scmp.lt.s32.totalorder %s33, 1
        %s735 = scalar_select %p734, %s33, 1
        %s736 = smul.addr %s735, 4
        %s737 = smul.addr %s733, 8
        %s738 = sadd.s32 %s736, %s737
        %s739 = scalar_lea.vmem %s2, %s738
        %p740 = scmp.lt.s32.totalorder %s32, 1
        %s741 = scalar_select %p740, %s32, 1
        %p742 = scmp.lt.s32.totalorder %s33, 1
        %s743 = scalar_select %p742, %s33, 1
        %s744 = smul.addr %s743, 4
        %s745 = smul.addr %s741, 8
        %s746 = sadd.s32 %s744, %s745
        %s747 = scalar_lea.vmem %s3, %s746
        %p748 = scmp.lt.s32.totalorder %s32, 1
        %s749 = scalar_select %p748, %s32, 1
        %p750 = scmp.lt.s32.totalorder %s33, 1
        %s751 = scalar_select %p750, %s33, 1
        %s752 = smul.addr %s751, 4
        %s753 = smul.addr %s749, 8
        %s754 = sadd.s32 %s752, %s753
        %s755 = scalar_lea.vmem %s4, %s754
        %p756 = scmp.lt.s32.totalorder %s32, 1
        %s757 = scalar_select %p756, %s32, 1
        %s758 = smul.addr %s757, 16
        %s759 = smul.addr %s758, 4
        %s760 = scalar_lea.vmem %s5, %s759
        %p761 = scmp.lt.s32.totalorder %s32, 1
        %s762 = scalar_select %p761, %s32, 1
        %s763 = smul.addr %s762, 4
        %s764 = scalar_lea.vmem %s6, %s763
        %p765 = scmp.lt.s32.totalorder %s32, 1
        %s766 = scalar_select %p765, %s32, 1
        %s767 = smul.addr %s766, 256
        %s768 = smul.addr %s767, 4
        %s769 = scalar_lea.vmem %s7, %s768
        %p770 = scmp.lt.s32.totalorder %s32, 1
        %s771 = scalar_select %p770, %s32, 1
        %s772 = smul.addr %s771, 4
        %s773 = scalar_lea.vmem %s8, %s772
        %p774 = scmp.lt.s32.totalorder %s32, 1
        %s775 = scalar_select %p774, %s32, 1
        %s776 = smul.addr %s775, 256
        %s777 = smul.addr %s776, 4
        %s778 = scalar_lea.vmem %s9, %s777
        %p779 = scmp.lt.s32.totalorder %s32, 1
        %s780 = scalar_select %p779, %s32, 1
        %s781 = smul.addr %s780, 4
        %s782 = scalar_lea.vmem %s10, %s781
        %p783 = scmp.lt.s32.totalorder %s32, 1
        %s784 = scalar_select %p783, %s32, 1
        %s785 = scalar_lea.vmem %s12, %s784
        %s786 = smul.u32 2, %s34
        %p787 = scmp.lt.s32.totalorder %s32, 1
        %s788 = scalar_select %p787, %s32, 1
        %p789 = scmp.lt.s32.totalorder %s33, 1
        %s790 = scalar_select %p789, %s33, 1
        %p791 = scmp.lt.s32.totalorder %s786, 1
        %s792 = scalar_select %p791, %s786, 1
        %s793 = smul.addr %s790, 2
        %s794 = sadd.s32 %s792, %s793
        %s795 = smul.addr %s788, 4
        %s796 = sadd.s32 %s794, %s795
        %s797 = smul.addr %s796, 8
        %s798 = scalar_lea.vmem %s13, %s797
        %s799 = smul.u32 2, %s34
        %p801 = scmp.eq.s32.totalorder %s32, 0
        %s802 = scalar_select %p801, 8, 6
        %s803 = smul.u32 %s34, 16
        %p804 = scmp.lt.s32.totalorder %s803, %s802
        // Predicated region
        $region77: #{bidenoise_forward.1} parent=71 // pred_check
          %p805 = pneg %p804
        $region78: #{bidenoise_forward.1} parent=71 // pred_check_branch
          %807 = sbr.rel (%p805) target = $region80
        $region79: #{bidenoise_forward.1} parent=71 // pred_region
          %v808 = vld [vmem:[%s722] sm:$0xf]
          %v809 = vld [vmem:[%s722 + $0x4] sm:$0xf]
          %v810 = vld [vmem:[%s760] sm:$0xff]
          %v811 = vld [vmem:[%s760 + $0x8] sm:$0xff]
          %v812 = vld [vmem:[%s760 + $0x10] sm:$0xff]
          %v813 = vld [vmem:[%s760 + $0x18] sm:$0xff]
          %v814 = vld [vmem:[%s760 + $0x20] sm:$0xff]
          %v815 = vld [vmem:[%s760 + $0x28] sm:$0xff]
          %v816 = vld [vmem:[%s760 + $0x30] sm:$0xff]
          %v817 = vld [vmem:[%s760 + $0x38] sm:$0xff]
          %v818 = vld [vmem:[%s764] sm:$0xf]
          %v820 = vlaneseq
          %v821 = vshrl.u32 %v820, 7
          %v822 = vsub.s32 0, %v821
          %v823 = vrot.slane %v818, %v822
          %v824 = vlaneseq
          %v825 = vshrl.u32 %v824, 7
          %v826 = vsub.s32 1, %v825
          %v827 = vrot.slane %v818, %v826
          %v828 = vlaneseq
          %v829 = vshrl.u32 %v828, 7
          %v830 = vsub.s32 2, %v829
          %v831 = vrot.slane %v818, %v830
          %v832 = vlaneseq
          %v833 = vshrl.u32 %v832, 7
          %v834 = vsub.s32 3, %v833
          %v835 = vrot.slane %v818, %v834
          %v842 = vunpack.c.l.b16 %v808
          %v843 = vunpack.c.l.b16 %v809
          %v844 = vpack.c.b16 %v843, %v842
          %v853 = vunpack.c.l.b16 %v810
          %v854 = vunpack.c.h.b16 %v810
          %v855 = vunpack.c.l.b16 %v811
          %v856 = vunpack.c.h.b16 %v811
          %v857 = vunpack.c.l.b16 %v812
          %v858 = vunpack.c.h.b16 %v812
          %v859 = vunpack.c.l.b16 %v813
          %v860 = vunpack.c.h.b16 %v813
          %v861 = vunpack.c.l.b16 %v814
          %v862 = vunpack.c.h.b16 %v814
          %v863 = vunpack.c.l.b16 %v815
          %v864 = vunpack.c.h.b16 %v815
          %v865 = vunpack.c.l.b16 %v816
          %v866 = vunpack.c.h.b16 %v816
          %v867 = vunpack.c.l.b16 %v817
          %v868 = vunpack.c.h.b16 %v817
          %v869 = vpack.c.b16 %v857, %v853
          %v870 = vpack.c.b16 %v858, %v854
          %v871 = vpack.c.b16 %v859, %v855
          %v872 = vpack.c.b16 %v860, %v856
          %v873 = vpack.c.b16 %v865, %v861
          %v874 = vpack.c.b16 %v866, %v862
          %v875 = vpack.c.b16 %v867, %v863
          %v876 = vpack.c.b16 %v868, %v864
          %vm885 = vcmask 261120
          %v887 = vsel %vm885, %v844, 0
          %889 = vmatprep.subr.bf16.mxu0 0
          %890 = vmatpush1.bf16.msra.mxu0 0
          %891 = vmatprep.subr.bf16.mxu0 0
          %892 = vmatpush1.bf16.msra.mxu0 0
          %893 = vmatprep.subr.bf16.mxu0 0
          %894 = vmatpush1.bf16.msra.mxu0 0
          %895 = vmatprep.subr.bf16.mxu0 0
          %896 = vmatpush1.bf16.msra.mxu0 0
          %897 = vmatprep.subr.bf16.mxu0 0
          %898 = vmatpush1.bf16.msra.mxu0 0
          %899 = vmatprep.subr.bf16.mxu0 0
          %900 = vmatpush1.bf16.msra.mxu0 0
          %901 = vmatprep.subr.bf16.mxu0 %v874
          %902 = vmatpush1.bf16.msra.mxu0 %v873
          %903 = vmatprep.subr.bf16.mxu0 %v870
          %904 = vmatpush1.bf16.msra.mxu0 %v869
          %905 = vmatprep.subr.bf16.mxu0 0
          %906 = vmatpush2.bf16.msra.mxu0 0
          %907 = vmatprep.subr.bf16.mxu0 0
          %908 = vmatpush2.bf16.msra.mxu0 0
          %909 = vmatprep.subr.bf16.mxu0 0
          %910 = vmatpush2.bf16.msra.mxu0 0
          %911 = vmatprep.subr.bf16.mxu0 0
          %912 = vmatpush2.bf16.msra.mxu0 0
          %913 = vmatprep.subr.bf16.mxu0 0
          %914 = vmatpush2.bf16.msra.mxu0 0
          %915 = vmatprep.subr.bf16.mxu0 0
          %916 = vmatpush2.bf16.msra.mxu0 0
          %917 = vmatprep.subr.bf16.mxu0 0
          %918 = vmatpush2.bf16.msra.mxu0 0
          %919 = vmatprep.subr.bf16.mxu0 0
          %920 = vmatpush2.bf16.msra.mxu0 0
          %921 = vmatprep.mubr.bf16.mxu0 0
          %922 = vmatmul.mubr.bf16.gmra.mxu0 %v887
          %v923 = vpop.f32.mrf.mxu0
          %v924 = vadd.f32 %v823, %v923
          %v925 = vpop.f32.mrf.mxu0
          %v926 = vadd.f32 %v827, %v925
          %v927 = vpop.f32.mrf.mxu0
          %v928 = vadd.f32 %v823, %v927
          %v929 = vpop.f32.mrf.mxu0
          %v930 = vadd.f32 %v827, %v929
          %931 = vdwg.mxu0
          %932 = vmatprep.subr.bf16.mxu0 0
          %933 = vmatpush1.bf16.msra.mxu0 0
          %934 = vmatprep.subr.bf16.mxu0 0
          %935 = vmatpush1.bf16.msra.mxu0 0
          %936 = vmatprep.subr.bf16.mxu0 0
          %937 = vmatpush1.bf16.msra.mxu0 0
          %938 = vmatprep.subr.bf16.mxu0 0
          %939 = vmatpush1.bf16.msra.mxu0 0
          %940 = vmatprep.subr.bf16.mxu0 0
          %941 = vmatpush1.bf16.msra.mxu0 0
          %942 = vmatprep.subr.bf16.mxu0 0
          %943 = vmatpush1.bf16.msra.mxu0 0
          %944 = vmatprep.subr.bf16.mxu0 %v876
          %945 = vmatpush1.bf16.msra.mxu0 %v875
          %946 = vmatprep.subr.bf16.mxu0 %v872
          %947 = vmatpush1.bf16.msra.mxu0 %v871
          %948 = vmatprep.subr.bf16.mxu0 0
          %949 = vmatpush2.bf16.msra.mxu0 0
          %950 = vmatprep.subr.bf16.mxu0 0
          %951 = vmatpush2.bf16.msra.mxu0 0
          %952 = vmatprep.subr.bf16.mxu0 0
          %953 = vmatpush2.bf16.msra.mxu0 0
          %954 = vmatprep.subr.bf16.mxu0 0
          %955 = vmatpush2.bf16.msra.mxu0 0
          %956 = vmatprep.subr.bf16.mxu0 0
          %957 = vmatpush2.bf16.msra.mxu0 0
          %958 = vmatprep.subr.bf16.mxu0 0
          %959 = vmatpush2.bf16.msra.mxu0 0
          %960 = vmatprep.subr.bf16.mxu0 0
          %961 = vmatpush2.bf16.msra.mxu0 0
          %962 = vmatprep.subr.bf16.mxu0 0
          %963 = vmatpush2.bf16.msra.mxu0 0
          %964 = vmatprep.mubr.bf16.mxu0 0
          %965 = vmatmul.mubr.bf16.gmra.mxu0 %v887
          %v966 = vpop.f32.mrf.mxu0
          %v967 = vadd.f32 %v831, %v966
          %v968 = vpop.f32.mrf.mxu0
          %v969 = vadd.f32 %v835, %v968
          %v970 = vpop.f32.mrf.mxu0
          %v971 = vadd.f32 %v831, %v970
          %v972 = vpop.f32.mrf.mxu0
          %v973 = vadd.f32 %v835, %v972
          %974 = vdwg.mxu0
          %v975 = vsub.f32 0.0, %v924
          %v976 = vsub.f32 0.0, %v926
          %v977 = vsub.f32 0.0, %v967
          %v978 = vsub.f32 0.0, %v969
          %v979 = vsub.f32 0.0, %v928
          %v980 = vsub.f32 0.0, %v930
          %v981 = vsub.f32 0.0, %v971
          %v982 = vsub.f32 0.0, %v973
          %v983 = vmul.f32 %v975, 1.442695
          %v984 = vpow.pop %v983
          %v985 = vmul.f32 %v976, 1.442695
          %v986 = vpow.pop %v985
          %v987 = vmul.f32 %v977, 1.442695
          %v988 = vpow.pop %v987
          %v989 = vmul.f32 %v978, 1.442695
          %v990 = vpow.pop %v989
          %v991 = vmul.f32 %v979, 1.442695
          %v992 = vpow.pop %v991
          %v993 = vmul.f32 %v980, 1.442695
          %v994 = vpow.pop %v993
          %v995 = vmul.f32 %v981, 1.442695
          %v996 = vpow.pop %v995
          %v997 = vmul.f32 %v982, 1.442695
          %v998 = vpow.pop %v997
          %v999 = vadd.f32 %v984, 1.0
          %v1000 = vadd.f32 %v986, 1.0
          %v1001 = vadd.f32 %v988, 1.0
          %v1002 = vadd.f32 %v990, 1.0
          %v1003 = vadd.f32 %v992, 1.0
          %v1004 = vadd.f32 %v994, 1.0
          %v1005 = vadd.f32 %v996, 1.0
          %v1006 = vadd.f32 %v998, 1.0
          %v1007 = vrcp.pop %v999
          %v1008 = vmul.f32 %v924, %v1007
          %v1009 = vrcp.pop %v1000
          %v1010 = vmul.f32 %v926, %v1009
          %v1011 = vrcp.pop %v1001
          %v1012 = vmul.f32 %v967, %v1011
          %v1013 = vrcp.pop %v1002
          %v1014 = vmul.f32 %v969, %v1013
          %v1015 = vrcp.pop %v1003
          %v1016 = vmul.f32 %v928, %v1015
          %v1017 = vrcp.pop %v1004
          %v1018 = vmul.f32 %v930, %v1017
          %v1019 = vrcp.pop %v1005
          %v1020 = vmul.f32 %v971, %v1019
          %v1021 = vrcp.pop %v1006
          %v1022 = vmul.f32 %v973, %v1021
          %v1023 = vpack.c.bf16 %v1016, %v1008
          %v1024 = vpack.c.bf16 %v1018, %v1010
          %v1025 = vpack.c.bf16 %v1020, %v1012
          %v1026 = vpack.c.bf16 %v1022, %v1014
          %v1027 = vld [vmem:[%s769] sm:$0xff]
          %v1028 = vld [vmem:[%s769 + $0x8] sm:$0xff]
          %v1029 = vld [vmem:[%s769 + $0x10] sm:$0xff]
          %v1030 = vld [vmem:[%s769 + $0x18] sm:$0xff]
          %v1031 = vld [vmem:[%s769 + $0x20] sm:$0xff]
          %v1032 = vld [vmem:[%s769 + $0x28] sm:$0xff]
          %v1033 = vld [vmem:[%s769 + $0x30] sm:$0xff]
          %v1034 = vld [vmem:[%s769 + $0x38] sm:$0xff]
          %v1035 = vld [vmem:[%s769 + $0x40] sm:$0xff]
          %v1036 = vld [vmem:[%s769 + $0x48] sm:$0xff]
          %v1037 = vld [vmem:[%s769 + $0x50] sm:$0xff]
          %v1038 = vld [vmem:[%s769 + $0x58] sm:$0xff]
          %v1039 = vld [vmem:[%s769 + $0x60] sm:$0xff]
          %v1040 = vld [vmem:[%s769 + $0x68] sm:$0xff]
          %v1041 = vld [vmem:[%s769 + $0x70] sm:$0xff]
          %v1042 = vld [vmem:[%s769 + $0x78] sm:$0xff]
          %v1043 = vld [vmem:[%s769 + $0x80] sm:$0xff]
          %v1044 = vld [vmem:[%s769 + $0x88] sm:$0xff]
          %v1045 = vld [vmem:[%s769 + $0x90] sm:$0xff]
          %v1046 = vld [vmem:[%s769 + $0x98] sm:$0xff]
          %v1047 = vld [vmem:[%s769 + $0xa0] sm:$0xff]
          %v1048 = vld [vmem:[%s769 + $0xa8] sm:$0xff]
          %v1049 = vld [vmem:[%s769 + $0xb0] sm:$0xff]
          %v1050 = vld [vmem:[%s769 + $0xb8] sm:$0xff]
          %v1051 = vld [vmem:[%s769 + $0xc0] sm:$0xff]
          %v1052 = vld [vmem:[%s769 + $0xc8] sm:$0xff]
          %v1053 = vld [vmem:[%s769 + $0xd0] sm:$0xff]
          %v1054 = vld [vmem:[%s769 + $0xd8] sm:$0xff]
          %v1055 = vld [vmem:[%s769 + $0xe0] sm:$0xff]
          %v1056 = vld [vmem:[%s769 + $0xe8] sm:$0xff]
          %v1057 = vld [vmem:[%s769 + $0xf0] sm:$0xff]
          %v1058 = vld [vmem:[%s769 + $0xf8] sm:$0xff]
          %v1059 = vld [vmem:[%s769 + $0x100] sm:$0xff]
          %v1060 = vld [vmem:[%s769 + $0x108] sm:$0xff]
          %v1061 = vld [vmem:[%s769 + $0x110] sm:$0xff]
          %v1062 = vld [vmem:[%s769 + $0x118] sm:$0xff]
          %v1063 = vld [vmem:[%s769 + $0x120] sm:$0xff]
          %v1064 = vld [vmem:[%s769 + $0x128] sm:$0xff]
          %v1065 = vld [vmem:[%s769 + $0x130] sm:$0xff]
          %v1066 = vld [vmem:[%s769 + $0x138] sm:$0xff]
          %v1067 = vld [vmem:[%s769 + $0x140] sm:$0xff]
          %v1068 = vld [vmem:[%s769 + $0x148] sm:$0xff]
          %v1069 = vld [vmem:[%s769 + $0x150] sm:$0xff]
          %v1070 = vld [vmem:[%s769 + $0x158] sm:$0xff]
          %v1071 = vld [vmem:[%s769 + $0x160] sm:$0xff]
          %v1072 = vld [vmem:[%s769 + $0x168] sm:$0xff]
          %v1073 = vld [vmem:[%s769 + $0x170] sm:$0xff]
          %v1074 = vld [vmem:[%s769 + $0x178] sm:$0xff]
          %v1075 = vld [vmem:[%s769 + $0x180] sm:$0xff]
          %v1076 = vld [vmem:[%s769 + $0x188] sm:$0xff]
          %v1077 = vld [vmem:[%s769 + $0x190] sm:$0xff]
          %v1078 = vld [vmem:[%s769 + $0x198] sm:$0xff]
          %v1079 = vld [vmem:[%s769 + $0x1a0] sm:$0xff]
          %v1080 = vld [vmem:[%s769 + $0x1a8] sm:$0xff]
          %v1081 = vld [vmem:[%s769 + $0x1b0] sm:$0xff]
          %v1082 = vld [vmem:[%s769 + $0x1b8] sm:$0xff]
          %v1083 = vld [vmem:[%s769 + $0x1c0] sm:$0xff]
          %v1084 = vld [vmem:[%s769 + $0x1c8] sm:$0xff]
          %v1085 = vld [vmem:[%s769 + $0x1d0] sm:$0xff]
          %v1086 = vld [vmem:[%s769 + $0x1d8] sm:$0xff]
          %v1087 = vld [vmem:[%s769 + $0x1e0] sm:$0xff]
          %v1088 = vld [vmem:[%s769 + $0x1e8] sm:$0xff]
          %v1089 = vld [vmem:[%s769 + $0x1f0] sm:$0xff]
          %v1090 = vld [vmem:[%s769 + $0x1f8] sm:$0xff]
          %v1091 = vld [vmem:[%s769 + $0x200] sm:$0xff]
          %v1092 = vld [vmem:[%s769 + $0x208] sm:$0xff]
          %v1093 = vld [vmem:[%s769 + $0x210] sm:$0xff]
          %v1094 = vld [vmem:[%s769 + $0x218] sm:$0xff]
          %v1095 = vld [vmem:[%s769 + $0x220] sm:$0xff]
          %v1096 = vld [vmem:[%s769 + $0x228] sm:$0xff]
          %v1097 = vld [vmem:[%s769 + $0x230] sm:$0xff]
          %v1098 = vld [vmem:[%s769 + $0x238] sm:$0xff]
          %v1099 = vld [vmem:[%s769 + $0x240] sm:$0xff]
          %v1100 = vld [vmem:[%s769 + $0x248] sm:$0xff]
          %v1101 = vld [vmem:[%s769 + $0x250] sm:$0xff]
          %v1102 = vld [vmem:[%s769 + $0x258] sm:$0xff]
          %v1103 = vld [vmem:[%s769 + $0x260] sm:$0xff]
          %v1104 = vld [vmem:[%s769 + $0x268] sm:$0xff]
          %v1105 = vld [vmem:[%s769 + $0x270] sm:$0xff]
          %v1106 = vld [vmem:[%s769 + $0x278] sm:$0xff]
          %v1107 = vld [vmem:[%s769 + $0x280] sm:$0xff]
          %v1108 = vld [vmem:[%s769 + $0x288] sm:$0xff]
          %v1109 = vld [vmem:[%s769 + $0x290] sm:$0xff]
          %v1110 = vld [vmem:[%s769 + $0x298] sm:$0xff]
          %v1111 = vld [vmem:[%s769 + $0x2a0] sm:$0xff]
          %v1112 = vld [vmem:[%s769 + $0x2a8] sm:$0xff]
          %v1113 = vld [vmem:[%s769 + $0x2b0] sm:$0xff]
          %v1114 = vld [vmem:[%s769 + $0x2b8] sm:$0xff]
          %v1115 = vld [vmem:[%s769 + $0x2c0] sm:$0xff]
          %v1116 = vld [vmem:[%s769 + $0x2c8] sm:$0xff]
          %v1117 = vld [vmem:[%s769 + $0x2d0] sm:$0xff]
          %v1118 = vld [vmem:[%s769 + $0x2d8] sm:$0xff]
          %v1119 = vld [vmem:[%s769 + $0x2e0] sm:$0xff]
          %v1120 = vld [vmem:[%s769 + $0x2e8] sm:$0xff]
          %v1121 = vld [vmem:[%s769 + $0x2f0] sm:$0xff]
          %v1122 = vld [vmem:[%s769 + $0x2f8] sm:$0xff]
          %v1123 = vld [vmem:[%s769 + $0x300] sm:$0xff]
          %v1124 = vld [vmem:[%s769 + $0x308] sm:$0xff]
          %v1125 = vld [vmem:[%s769 + $0x310] sm:$0xff]
          %v1126 = vld [vmem:[%s769 + $0x318] sm:$0xff]
          %v1127 = vld [vmem:[%s769 + $0x320] sm:$0xff]
          %v1128 = vld [vmem:[%s769 + $0x328] sm:$0xff]
          %v1129 = vld [vmem:[%s769 + $0x330] sm:$0xff]
          %v1130 = vld [vmem:[%s769 + $0x338] sm:$0xff]
          %v1131 = vld [vmem:[%s769 + $0x340] sm:$0xff]
          %v1132 = vld [vmem:[%s769 + $0x348] sm:$0xff]
          %v1133 = vld [vmem:[%s769 + $0x350] sm:$0xff]
          %v1134 = vld [vmem:[%s769 + $0x358] sm:$0xff]
          %v1135 = vld [vmem:[%s769 + $0x360] sm:$0xff]
          %v1136 = vld [vmem:[%s769 + $0x368] sm:$0xff]
          %v1137 = vld [vmem:[%s769 + $0x370] sm:$0xff]
          %v1138 = vld [vmem:[%s769 + $0x378] sm:$0xff]
          %v1139 = vld [vmem:[%s769 + $0x380] sm:$0xff]
          %v1140 = vld [vmem:[%s769 + $0x388] sm:$0xff]
          %v1141 = vld [vmem:[%s769 + $0x390] sm:$0xff]
          %v1142 = vld [vmem:[%s769 + $0x398] sm:$0xff]
          %v1143 = vld [vmem:[%s769 + $0x3a0] sm:$0xff]
          %v1144 = vld [vmem:[%s769 + $0x3a8] sm:$0xff]
          %v1145 = vld [vmem:[%s769 + $0x3b0] sm:$0xff]
          %v1146 = vld [vmem:[%s769 + $0x3b8] sm:$0xff]
          %v1147 = vld [vmem:[%s769 + $0x3c0] sm:$0xff]
          %v1148 = vld [vmem:[%s769 + $0x3c8] sm:$0xff]
          %v1149 = vld [vmem:[%s769 + $0x3d0] sm:$0xff]
          %v1150 = vld [vmem:[%s769 + $0x3d8] sm:$0xff]
          %v1151 = vld [vmem:[%s769 + $0x3e0] sm:$0xff]
          %v1152 = vld [vmem:[%s769 + $0x3e8] sm:$0xff]
          %v1153 = vld [vmem:[%s769 + $0x3f0] sm:$0xff]
          %v1154 = vld [vmem:[%s769 + $0x3f8] sm:$0xff]
          %v1155 = vld [vmem:[%s773] sm:$0xf]
          %v1157 = vlaneseq
          %v1158 = vshrl.u32 %v1157, 7
          %v1159 = vsub.s32 0, %v1158
          %v1160 = vrot.slane %v1155, %v1159
          %v1161 = vlaneseq
          %v1162 = vshrl.u32 %v1161, 7
          %v1163 = vsub.s32 1, %v1162
          %v1164 = vrot.slane %v1155, %v1163
          %v1165 = vlaneseq
          %v1166 = vshrl.u32 %v1165, 7
          %v1167 = vsub.s32 2, %v1166
          %v1168 = vrot.slane %v1155, %v1167
          %v1169 = vlaneseq
          %v1170 = vshrl.u32 %v1169, 7
          %v1171 = vsub.s32 3, %v1170
          %v1172 = vrot.slane %v1155, %v1171
          %v1305 = vunpack.c.l.b16 %v1027
          %v1306 = vunpack.c.h.b16 %v1027
          %v1307 = vunpack.c.l.b16 %v1028
          %v1308 = vunpack.c.h.b16 %v1028
          %v1309 = vunpack.c.l.b16 %v1029
          %v1310 = vunpack.c.h.b16 %v1029
          %v1311 = vunpack.c.l.b16 %v1030
          %v1312 = vunpack.c.h.b16 %v1030
          %v1313 = vunpack.c.l.b16 %v1031
          %v1314 = vunpack.c.h.b16 %v1031
          %v1315 = vunpack.c.l.b16 %v1032
          %v1316 = vunpack.c.h.b16 %v1032
          %v1317 = vunpack.c.l.b16 %v1033
          %v1318 = vunpack.c.h.b16 %v1033
          %v1319 = vunpack.c.l.b16 %v1034
          %v1320 = vunpack.c.h.b16 %v1034
          %v1321 = vunpack.c.l.b16 %v1035
          %v1322 = vunpack.c.h.b16 %v1035
          %v1323 = vunpack.c.l.b16 %v1036
          %v1324 = vunpack.c.h.b16 %v1036
          %v1325 = vunpack.c.l.b16 %v1037
          %v1326 = vunpack.c.h.b16 %v1037
          %v1327 = vunpack.c.l.b16 %v1038
          %v1328 = vunpack.c.h.b16 %v1038
          %v1329 = vunpack.c.l.b16 %v1039
          %v1330 = vunpack.c.h.b16 %v1039
          %v1331 = vunpack.c.l.b16 %v1040
          %v1332 = vunpack.c.h.b16 %v1040
          %v1333 = vunpack.c.l.b16 %v1041
          %v1334 = vunpack.c.h.b16 %v1041
          %v1335 = vunpack.c.l.b16 %v1042
          %v1336 = vunpack.c.h.b16 %v1042
          %v1337 = vunpack.c.l.b16 %v1043
          %v1338 = vunpack.c.h.b16 %v1043
          %v1339 = vunpack.c.l.b16 %v1044
          %v1340 = vunpack.c.h.b16 %v1044
          %v1341 = vunpack.c.l.b16 %v1045
          %v1342 = vunpack.c.h.b16 %v1045
          %v1343 = vunpack.c.l.b16 %v1046
          %v1344 = vunpack.c.h.b16 %v1046
          %v1345 = vunpack.c.l.b16 %v1047
          %v1346 = vunpack.c.h.b16 %v1047
          %v1347 = vunpack.c.l.b16 %v1048
          %v1348 = vunpack.c.h.b16 %v1048
          %v1349 = vunpack.c.l.b16 %v1049
          %v1350 = vunpack.c.h.b16 %v1049
          %v1351 = vunpack.c.l.b16 %v1050
          %v1352 = vunpack.c.h.b16 %v1050
          %v1353 = vunpack.c.l.b16 %v1051
          %v1354 = vunpack.c.h.b16 %v1051
          %v1355 = vunpack.c.l.b16 %v1052
          %v1356 = vunpack.c.h.b16 %v1052
          %v1357 = vunpack.c.l.b16 %v1053
          %v1358 = vunpack.c.h.b16 %v1053
          %v1359 = vunpack.c.l.b16 %v1054
          %v1360 = vunpack.c.h.b16 %v1054
          %v1361 = vunpack.c.l.b16 %v1055
          %v1362 = vunpack.c.h.b16 %v1055
          %v1363 = vunpack.c.l.b16 %v1056
          %v1364 = vunpack.c.h.b16 %v1056
          %v1365 = vunpack.c.l.b16 %v1057
          %v1366 = vunpack.c.h.b16 %v1057
          %v1367 = vunpack.c.l.b16 %v1058
          %v1368 = vunpack.c.h.b16 %v1058
          %v1369 = vunpack.c.l.b16 %v1059
          %v1370 = vunpack.c.h.b16 %v1059
          %v1371 = vunpack.c.l.b16 %v1060
          %v1372 = vunpack.c.h.b16 %v1060
          %v1373 = vunpack.c.l.b16 %v1061
          %v1374 = vunpack.c.h.b16 %v1061
          %v1375 = vunpack.c.l.b16 %v1062
          %v1376 = vunpack.c.h.b16 %v1062
          %v1377 = vunpack.c.l.b16 %v1063
          %v1378 = vunpack.c.h.b16 %v1063
          %v1379 = vunpack.c.l.b16 %v1064
          %v1380 = vunpack.c.h.b16 %v1064
          %v1381 = vunpack.c.l.b16 %v1065
          %v1382 = vunpack.c.h.b16 %v1065
          %v1383 = vunpack.c.l.b16 %v1066
          %v1384 = vunpack.c.h.b16 %v1066
          %v1385 = vunpack.c.l.b16 %v1067
          %v1386 = vunpack.c.h.b16 %v1067
          %v1387 = vunpack.c.l.b16 %v1068
          %v1388 = vunpack.c.h.b16 %v1068
          %v1389 = vunpack.c.l.b16 %v1069
          %v1390 = vunpack.c.h.b16 %v1069
          %v1391 = vunpack.c.l.b16 %v1070
          %v1392 = vunpack.c.h.b16 %v1070
          %v1393 = vunpack.c.l.b16 %v1071
          %v1394 = vunpack.c.h.b16 %v1071
          %v1395 = vunpack.c.l.b16 %v1072
          %v1396 = vunpack.c.h.b16 %v1072
          %v1397 = vunpack.c.l.b16 %v1073
          %v1398 = vunpack.c.h.b16 %v1073
          %v1399 = vunpack.c.l.b16 %v1074
          %v1400 = vunpack.c.h.b16 %v1074
          %v1401 = vunpack.c.l.b16 %v1075
          %v1402 = vunpack.c.h.b16 %v1075
          %v1403 = vunpack.c.l.b16 %v1076
          %v1404 = vunpack.c.h.b16 %v1076
          %v1405 = vunpack.c.l.b16 %v1077
          %v1406 = vunpack.c.h.b16 %v1077
          %v1407 = vunpack.c.l.b16 %v1078
          %v1408 = vunpack.c.h.b16 %v1078
          %v1409 = vunpack.c.l.b16 %v1079
          %v1410 = vunpack.c.h.b16 %v1079
          %v1411 = vunpack.c.l.b16 %v1080
          %v1412 = vunpack.c.h.b16 %v1080
          %v1413 = vunpack.c.l.b16 %v1081
          %v1414 = vunpack.c.h.b16 %v1081
          %v1415 = vunpack.c.l.b16 %v1082
          %v1416 = vunpack.c.h.b16 %v1082
          %v1417 = vunpack.c.l.b16 %v1083
          %v1418 = vunpack.c.h.b16 %v1083
          %v1419 = vunpack.c.l.b16 %v1084
          %v1420 = vunpack.c.h.b16 %v1084
          %v1421 = vunpack.c.l.b16 %v1085
          %v1422 = vunpack.c.h.b16 %v1085
          %v1423 = vunpack.c.l.b16 %v1086
          %v1424 = vunpack.c.h.b16 %v1086
          %v1425 = vunpack.c.l.b16 %v1087
          %v1426 = vunpack.c.h.b16 %v1087
          %v1427 = vunpack.c.l.b16 %v1088
          %v1428 = vunpack.c.h.b16 %v1088
          %v1429 = vunpack.c.l.b16 %v1089
          %v1430 = vunpack.c.h.b16 %v1089
          %v1431 = vunpack.c.l.b16 %v1090
          %v1432 = vunpack.c.h.b16 %v1090
          %v1433 = vunpack.c.l.b16 %v1091
          %v1434 = vunpack.c.h.b16 %v1091
          %v1435 = vunpack.c.l.b16 %v1092
          %v1436 = vunpack.c.h.b16 %v1092
          %v1437 = vunpack.c.l.b16 %v1093
          %v1438 = vunpack.c.h.b16 %v1093
          %v1439 = vunpack.c.l.b16 %v1094
          %v1440 = vunpack.c.h.b16 %v1094
          %v1441 = vunpack.c.l.b16 %v1095
          %v1442 = vunpack.c.h.b16 %v1095
          %v1443 = vunpack.c.l.b16 %v1096
          %v1444 = vunpack.c.h.b16 %v1096
          %v1445 = vunpack.c.l.b16 %v1097
          %v1446 = vunpack.c.h.b16 %v1097
          %v1447 = vunpack.c.l.b16 %v1098
          %v1448 = vunpack.c.h.b16 %v1098
          %v1449 = vunpack.c.l.b16 %v1099
          %v1450 = vunpack.c.h.b16 %v1099
          %v1451 = vunpack.c.l.b16 %v1100
          %v1452 = vunpack.c.h.b16 %v1100
          %v1453 = vunpack.c.l.b16 %v1101
          %v1454 = vunpack.c.h.b16 %v1101
          %v1455 = vunpack.c.l.b16 %v1102
          %v1456 = vunpack.c.h.b16 %v1102
          %v1457 = vunpack.c.l.b16 %v1103
          %v1458 = vunpack.c.h.b16 %v1103
          %v1459 = vunpack.c.l.b16 %v1104
          %v1460 = vunpack.c.h.b16 %v1104
          %v1461 = vunpack.c.l.b16 %v1105
          %v1462 = vunpack.c.h.b16 %v1105
          %v1463 = vunpack.c.l.b16 %v1106
          %v1464 = vunpack.c.h.b16 %v1106
          %v1465 = vunpack.c.l.b16 %v1107
          %v1466 = vunpack.c.h.b16 %v1107
          %v1467 = vunpack.c.l.b16 %v1108
          %v1468 = vunpack.c.h.b16 %v1108
          %v1469 = vunpack.c.l.b16 %v1109
          %v1470 = vunpack.c.h.b16 %v1109
          %v1471 = vunpack.c.l.b16 %v1110
          %v1472 = vunpack.c.h.b16 %v1110
          %v1473 = vunpack.c.l.b16 %v1111
          %v1474 = vunpack.c.h.b16 %v1111
          %v1475 = vunpack.c.l.b16 %v1112
          %v1476 = vunpack.c.h.b16 %v1112
          %v1477 = vunpack.c.l.b16 %v1113
          %v1478 = vunpack.c.h.b16 %v1113
          %v1479 = vunpack.c.l.b16 %v1114
          %v1480 = vunpack.c.h.b16 %v1114
          %v1481 = vunpack.c.l.b16 %v1115
          %v1482 = vunpack.c.h.b16 %v1115
          %v1483 = vunpack.c.l.b16 %v1116
          %v1484 = vunpack.c.h.b16 %v1116
          %v1485 = vunpack.c.l.b16 %v1117
          %v1486 = vunpack.c.h.b16 %v1117
          %v1487 = vunpack.c.l.b16 %v1118
          %v1488 = vunpack.c.h.b16 %v1118
          %v1489 = vunpack.c.l.b16 %v1119
          %v1490 = vunpack.c.h.b16 %v1119
          %v1491 = vunpack.c.l.b16 %v1120
          %v1492 = vunpack.c.h.b16 %v1120
          %v1493 = vunpack.c.l.b16 %v1121
          %v1494 = vunpack.c.h.b16 %v1121
          %v1495 = vunpack.c.l.b16 %v1122
          %v1496 = vunpack.c.h.b16 %v1122
          %v1497 = vunpack.c.l.b16 %v1123
          %v1498 = vunpack.c.h.b16 %v1123
          %v1499 = vunpack.c.l.b16 %v1124
          %v1500 = vunpack.c.h.b16 %v1124
          %v1501 = vunpack.c.l.b16 %v1125
          %v1502 = vunpack.c.h.b16 %v1125
          %v1503 = vunpack.c.l.b16 %v1126
          %v1504 = vunpack.c.h.b16 %v1126
          %v1505 = vunpack.c.l.b16 %v1127
          %v1506 = vunpack.c.h.b16 %v1127
          %v1507 = vunpack.c.l.b16 %v1128
          %v1508 = vunpack.c.h.b16 %v1128
          %v1509 = vunpack.c.l.b16 %v1129
          %v1510 = vunpack.c.h.b16 %v1129
          %v1511 = vunpack.c.l.b16 %v1130
          %v1512 = vunpack.c.h.b16 %v1130
          %v1513 = vunpack.c.l.b16 %v1131
          %v1514 = vunpack.c.h.b16 %v1131
          %v1515 = vunpack.c.l.b16 %v1132
          %v1516 = vunpack.c.h.b16 %v1132
          %v1517 = vunpack.c.l.b16 %v1133
          %v1518 = vunpack.c.h.b16 %v1133
          %v1519 = vunpack.c.l.b16 %v1134
          %v1520 = vunpack.c.h.b16 %v1134
          %v1521 = vunpack.c.l.b16 %v1135
          %v1522 = vunpack.c.h.b16 %v1135
          %v1523 = vunpack.c.l.b16 %v1136
          %v1524 = vunpack.c.h.b16 %v1136
          %v1525 = vunpack.c.l.b16 %v1137
          %v1526 = vunpack.c.h.b16 %v1137
          %v1527 = vunpack.c.l.b16 %v1138
          %v1528 = vunpack.c.h.b16 %v1138
          %v1529 = vunpack.c.l.b16 %v1139
          %v1530 = vunpack.c.h.b16 %v1139
          %v1531 = vunpack.c.l.b16 %v1140
          %v1532 = vunpack.c.h.b16 %v1140
          %v1533 = vunpack.c.l.b16 %v1141
          %v1534 = vunpack.c.h.b16 %v1141
          %v1535 = vunpack.c.l.b16 %v1142
          %v1536 = vunpack.c.h.b16 %v1142
          %v1537 = vunpack.c.l.b16 %v1143
          %v1538 = vunpack.c.h.b16 %v1143
          %v1539 = vunpack.c.l.b16 %v1144
          %v1540 = vunpack.c.h.b16 %v1144
          %v1541 = vunpack.c.l.b16 %v1145
          %v1542 = vunpack.c.h.b16 %v1145
          %v1543 = vunpack.c.l.b16 %v1146
          %v1544 = vunpack.c.h.b16 %v1146
          %v1545 = vunpack.c.l.b16 %v1147
          %v1546 = vunpack.c.h.b16 %v1147
          %v1547 = vunpack.c.l.b16 %v1148
          %v1548 = vunpack.c.h.b16 %v1148
          %v1549 = vunpack.c.l.b16 %v1149
          %v1550 = vunpack.c.h.b16 %v1149
          %v1551 = vunpack.c.l.b16 %v1150
          %v1552 = vunpack.c.h.b16 %v1150
          %v1553 = vunpack.c.l.b16 %v1151
          %v1554 = vunpack.c.h.b16 %v1151
          %v1555 = vunpack.c.l.b16 %v1152
          %v1556 = vunpack.c.h.b16 %v1152
          %v1557 = vunpack.c.l.b16 %v1153
          %v1558 = vunpack.c.h.b16 %v1153
          %v1559 = vunpack.c.l.b16 %v1154
          %v1560 = vunpack.c.h.b16 %v1154
          %v1561 = vpack.c.b16 %v1309, %v1305
          %v1562 = vpack.c.b16 %v1310, %v1306
          %v1563 = vpack.c.b16 %v1311, %v1307
          %v1564 = vpack.c.b16 %v1312, %v1308
          %v1565 = vpack.c.b16 %v1317, %v1313
          %v1566 = vpack.c.b16 %v1318, %v1314
          %v1567 = vpack.c.b16 %v1319, %v1315
          %v1568 = vpack.c.b16 %v1320, %v1316
          %v1569 = vpack.c.b16 %v1325, %v1321
          %v1570 = vpack.c.b16 %v1326, %v1322
          %v1571 = vpack.c.b16 %v1327, %v1323
          %v1572 = vpack.c.b16 %v1328, %v1324
          %v1573 = vpack.c.b16 %v1333, %v1329
          %v1574 = vpack.c.b16 %v1334, %v1330
          %v1575 = vpack.c.b16 %v1335, %v1331
          %v1576 = vpack.c.b16 %v1336, %v1332
          %v1577 = vpack.c.b16 %v1341, %v1337
          %v1578 = vpack.c.b16 %v1342, %v1338
          %v1579 = vpack.c.b16 %v1343, %v1339
          %v1580 = vpack.c.b16 %v1344, %v1340
          %v1581 = vpack.c.b16 %v1349, %v1345
          %v1582 = vpack.c.b16 %v1350, %v1346
          %v1583 = vpack.c.b16 %v1351, %v1347
          %v1584 = vpack.c.b16 %v1352, %v1348
          %v1585 = vpack.c.b16 %v1357, %v1353
          %v1586 = vpack.c.b16 %v1358, %v1354
          %v1587 = vpack.c.b16 %v1359, %v1355
          %v1588 = vpack.c.b16 %v1360, %v1356
          %v1589 = vpack.c.b16 %v1365, %v1361
          %v1590 = vpack.c.b16 %v1366, %v1362
          %v1591 = vpack.c.b16 %v1367, %v1363
          %v1592 = vpack.c.b16 %v1368, %v1364
          %v1593 = vpack.c.b16 %v1373, %v1369
          %v1594 = vpack.c.b16 %v1374, %v1370
          %v1595 = vpack.c.b16 %v1375, %v1371
          %v1596 = vpack.c.b16 %v1376, %v1372
          %v1597 = vpack.c.b16 %v1381, %v1377
          %v1598 = vpack.c.b16 %v1382, %v1378
          %v1599 = vpack.c.b16 %v1383, %v1379
          %v1600 = vpack.c.b16 %v1384, %v1380
          %v1601 = vpack.c.b16 %v1389, %v1385
          %v1602 = vpack.c.b16 %v1390, %v1386
          %v1603 = vpack.c.b16 %v1391, %v1387
          %v1604 = vpack.c.b16 %v1392, %v1388
          %v1605 = vpack.c.b16 %v1397, %v1393
          %v1606 = vpack.c.b16 %v1398, %v1394
          %v1607 = vpack.c.b16 %v1399, %v1395
          %v1608 = vpack.c.b16 %v1400, %v1396
          %v1609 = vpack.c.b16 %v1405, %v1401
          %v1610 = vpack.c.b16 %v1406, %v1402
          %v1611 = vpack.c.b16 %v1407, %v1403
          %v1612 = vpack.c.b16 %v1408, %v1404
          %v1613 = vpack.c.b16 %v1413, %v1409
          %v1614 = vpack.c.b16 %v1414, %v1410
          %v1615 = vpack.c.b16 %v1415, %v1411
          %v1616 = vpack.c.b16 %v1416, %v1412
          %v1617 = vpack.c.b16 %v1421, %v1417
          %v1618 = vpack.c.b16 %v1422, %v1418
          %v1619 = vpack.c.b16 %v1423, %v1419
          %v1620 = vpack.c.b16 %v1424, %v1420
          %v1621 = vpack.c.b16 %v1429, %v1425
          %v1622 = vpack.c.b16 %v1430, %v1426
          %v1623 = vpack.c.b16 %v1431, %v1427
          %v1624 = vpack.c.b16 %v1432, %v1428
          %v1625 = vpack.c.b16 %v1437, %v1433
          %v1626 = vpack.c.b16 %v1438, %v1434
          %v1627 = vpack.c.b16 %v1439, %v1435
          %v1628 = vpack.c.b16 %v1440, %v1436
          %v1629 = vpack.c.b16 %v1445, %v1441
          %v1630 = vpack.c.b16 %v1446, %v1442
          %v1631 = vpack.c.b16 %v1447, %v1443
          %v1632 = vpack.c.b16 %v1448, %v1444
          %v1633 = vpack.c.b16 %v1453, %v1449
          %v1634 = vpack.c.b16 %v1454, %v1450
          %v1635 = vpack.c.b16 %v1455, %v1451
          %v1636 = vpack.c.b16 %v1456, %v1452
          %v1637 = vpack.c.b16 %v1461, %v1457
          %v1638 = vpack.c.b16 %v1462, %v1458
          %v1639 = vpack.c.b16 %v1463, %v1459
          %v1640 = vpack.c.b16 %v1464, %v1460
          %v1641 = vpack.c.b16 %v1469, %v1465
          %v1642 = vpack.c.b16 %v1470, %v1466
          %v1643 = vpack.c.b16 %v1471, %v1467
          %v1644 = vpack.c.b16 %v1472, %v1468
          %v1645 = vpack.c.b16 %v1477, %v1473
          %v1646 = vpack.c.b16 %v1478, %v1474
          %v1647 = vpack.c.b16 %v1479, %v1475
          %v1648 = vpack.c.b16 %v1480, %v1476
          %v1649 = vpack.c.b16 %v1485, %v1481
          %v1650 = vpack.c.b16 %v1486, %v1482
          %v1651 = vpack.c.b16 %v1487, %v1483
          %v1652 = vpack.c.b16 %v1488, %v1484
          %v1653 = vpack.c.b16 %v1493, %v1489
          %v1654 = vpack.c.b16 %v1494, %v1490
          %v1655 = vpack.c.b16 %v1495, %v1491
          %v1656 = vpack.c.b16 %v1496, %v1492
          %v1657 = vpack.c.b16 %v1501, %v1497
          %v1658 = vpack.c.b16 %v1502, %v1498
          %v1659 = vpack.c.b16 %v1503, %v1499
          %v1660 = vpack.c.b16 %v1504, %v1500
          %v1661 = vpack.c.b16 %v1509, %v1505
          %v1662 = vpack.c.b16 %v1510, %v1506
          %v1663 = vpack.c.b16 %v1511, %v1507
          %v1664 = vpack.c.b16 %v1512, %v1508
          %v1665 = vpack.c.b16 %v1517, %v1513
          %v1666 = vpack.c.b16 %v1518, %v1514
          %v1667 = vpack.c.b16 %v1519, %v1515
          %v1668 = vpack.c.b16 %v1520, %v1516
          %v1669 = vpack.c.b16 %v1525, %v1521
          %v1670 = vpack.c.b16 %v1526, %v1522
          %v1671 = vpack.c.b16 %v1527, %v1523
          %v1672 = vpack.c.b16 %v1528, %v1524
          %v1673 = vpack.c.b16 %v1533, %v1529
          %v1674 = vpack.c.b16 %v1534, %v1530
          %v1675 = vpack.c.b16 %v1535, %v1531
          %v1676 = vpack.c.b16 %v1536, %v1532
          %v1677 = vpack.c.b16 %v1541, %v1537
          %v1678 = vpack.c.b16 %v1542, %v1538
          %v1679 = vpack.c.b16 %v1543, %v1539
          %v1680 = vpack.c.b16 %v1544, %v1540
          %v1681 = vpack.c.b16 %v1549, %v1545
          %v1682 = vpack.c.b16 %v1550, %v1546
          %v1683 = vpack.c.b16 %v1551, %v1547
          %v1684 = vpack.c.b16 %v1552, %v1548
          %v1685 = vpack.c.b16 %v1557, %v1553
          %v1686 = vpack.c.b16 %v1558, %v1554
          %v1687 = vpack.c.b16 %v1559, %v1555
          %v1688 = vpack.c.b16 %v1560, %v1556
          %1817 = vmatprep.subr.bf16.mxu0 %v1590
          %1818 = vmatpush1.bf16.msra.mxu0 %v1589
          %1819 = vmatprep.subr.bf16.mxu0 %v1586
          %1820 = vmatpush1.bf16.msra.mxu0 %v1585
          %1821 = vmatprep.subr.bf16.mxu0 %v1582
          %1822 = vmatpush1.bf16.msra.mxu0 %v1581
          %1823 = vmatprep.subr.bf16.mxu0 %v1578
          %1824 = vmatpush1.bf16.msra.mxu0 %v1577
          %1825 = vmatprep.subr.bf16.mxu0 %v1574
          %1826 = vmatpush1.bf16.msra.mxu0 %v1573
          %1827 = vmatprep.subr.bf16.mxu0 %v1570
          %1828 = vmatpush1.bf16.msra.mxu0 %v1569
          %1829 = vmatprep.subr.bf16.mxu0 %v1566
          %1830 = vmatpush1.bf16.msra.mxu0 %v1565
          %1831 = vmatprep.subr.bf16.mxu0 %v1562
          %1832 = vmatpush1.bf16.msra.mxu0 %v1561
          %1833 = vmatprep.subr.bf16.mxu0 %v1622
          %1834 = vmatpush2.bf16.msra.mxu0 %v1621
          %1835 = vmatprep.subr.bf16.mxu0 %v1618
          %1836 = vmatpush2.bf16.msra.mxu0 %v1617
          %1837 = vmatprep.subr.bf16.mxu0 %v1614
          %1838 = vmatpush2.bf16.msra.mxu0 %v1613
          %1839 = vmatprep.subr.bf16.mxu0 %v1610
          %1840 = vmatpush2.bf16.msra.mxu0 %v1609
          %1841 = vmatprep.subr.bf16.mxu0 %v1606
          %1842 = vmatpush2.bf16.msra.mxu0 %v1605
          %1843 = vmatprep.subr.bf16.mxu0 %v1602
          %1844 = vmatpush2.bf16.msra.mxu0 %v1601
          %1845 = vmatprep.subr.bf16.mxu0 %v1598
          %1846 = vmatpush2.bf16.msra.mxu0 %v1597
          %1847 = vmatprep.subr.bf16.mxu0 %v1594
          %1848 = vmatpush2.bf16.msra.mxu0 %v1593
          %1849 = vmatprep.mubr.bf16.mxu0 %v1024
          %1850 = vmatmul.mubr.bf16.gmra.mxu0 %v1023
          %v1851 = vpop.f32.mrf.mxu0
          %v1852 = vadd.f32 %v1160, %v1851
          %v1853 = vpop.f32.mrf.mxu0
          %v1854 = vadd.f32 %v1164, %v1853
          %v1855 = vpop.f32.mrf.mxu0
          %v1856 = vadd.f32 %v1160, %v1855
          %v1857 = vpop.f32.mrf.mxu0
          %v1858 = vadd.f32 %v1164, %v1857
          %1859 = vdwg.mxu0
          %1860 = vmatprep.subr.bf16.mxu0 %v1654
          %1861 = vmatpush1.bf16.msra.mxu0 %v1653
          %1862 = vmatprep.subr.bf16.mxu0 %v1650
          %1863 = vmatpush1.bf16.msra.mxu0 %v1649
          %1864 = vmatprep.subr.bf16.mxu0 %v1646
          %1865 = vmatpush1.bf16.msra.mxu0 %v1645
          %1866 = vmatprep.subr.bf16.mxu0 %v1642
          %1867 = vmatpush1.bf16.msra.mxu0 %v1641
          %1868 = vmatprep.subr.bf16.mxu0 %v1638
          %1869 = vmatpush1.bf16.msra.mxu0 %v1637
          %1870 = vmatprep.subr.bf16.mxu0 %v1634
          %1871 = vmatpush1.bf16.msra.mxu0 %v1633
          %1872 = vmatprep.subr.bf16.mxu0 %v1630
          %1873 = vmatpush1.bf16.msra.mxu0 %v1629
          %1874 = vmatprep.subr.bf16.mxu0 %v1626
          %1875 = vmatpush1.bf16.msra.mxu0 %v1625
          %1876 = vmatprep.subr.bf16.mxu0 %v1686
          %1877 = vmatpush2.bf16.msra.mxu0 %v1685
          %1878 = vmatprep.subr.bf16.mxu0 %v1682
          %1879 = vmatpush2.bf16.msra.mxu0 %v1681
          %1880 = vmatprep.subr.bf16.mxu0 %v1678
          %1881 = vmatpush2.bf16.msra.mxu0 %v1677
          %1882 = vmatprep.subr.bf16.mxu0 %v1674
          %1883 = vmatpush2.bf16.msra.mxu0 %v1673
          %1884 = vmatprep.subr.bf16.mxu0 %v1670
          %1885 = vmatpush2.bf16.msra.mxu0 %v1669
          %1886 = vmatprep.subr.bf16.mxu0 %v1666
          %1887 = vmatpush2.bf16.msra.mxu0 %v1665
          %1888 = vmatprep.subr.bf16.mxu0 %v1662
          %1889 = vmatpush2.bf16.msra.mxu0 %v1661
          %1890 = vmatprep.subr.bf16.mxu0 %v1658
          %1891 = vmatpush2.bf16.msra.mxu0 %v1657
          %1892 = vmatprep.mubr.bf16.mxu0 %v1026
          %1893 = vmatmul.mubr.bf16.gmra.mxu0 %v1025
          %v1894 = vpop.f32.mrf.mxu0
          %v1895 = vadd.f32 %v1852, %v1894
          %v1896 = vpop.f32.mrf.mxu0
          %v1897 = vadd.f32 %v1854, %v1896
          %v1898 = vpop.f32.mrf.mxu0
          %v1899 = vadd.f32 %v1856, %v1898
          %v1900 = vpop.f32.mrf.mxu0
          %v1901 = vadd.f32 %v1858, %v1900
          %1902 = vdwg.mxu0
          %1903 = vmatprep.subr.bf16.mxu0 %v1592
          %1904 = vmatpush1.bf16.msra.mxu0 %v1591
          %1905 = vmatprep.subr.bf16.mxu0 %v1588
          %1906 = vmatpush1.bf16.msra.mxu0 %v1587
          %1907 = vmatprep.subr.bf16.mxu0 %v1584
          %1908 = vmatpush1.bf16.msra.mxu0 %v1583
          %1909 = vmatprep.subr.bf16.mxu0 %v1580
          %1910 = vmatpush1.bf16.msra.mxu0 %v1579
          %1911 = vmatprep.subr.bf16.mxu0 %v1576
          %1912 = vmatpush1.bf16.msra.mxu0 %v1575
          %1913 = vmatprep.subr.bf16.mxu0 %v1572
          %1914 = vmatpush1.bf16.msra.mxu0 %v1571
          %1915 = vmatprep.subr.bf16.mxu0 %v1568
          %1916 = vmatpush1.bf16.msra.mxu0 %v1567
          %1917 = vmatprep.subr.bf16.mxu0 %v1564
          %1918 = vmatpush1.bf16.msra.mxu0 %v1563
          %1919 = vmatprep.subr.bf16.mxu0 %v1624
          %1920 = vmatpush2.bf16.msra.mxu0 %v1623
          %1921 = vmatprep.subr.bf16.mxu0 %v1620
          %1922 = vmatpush2.bf16.msra.mxu0 %v1619
          %1923 = vmatprep.subr.bf16.mxu0 %v1616
          %1924 = vmatpush2.bf16.msra.mxu0 %v1615
          %1925 = vmatprep.subr.bf16.mxu0 %v1612
          %1926 = vmatpush2.bf16.msra.mxu0 %v1611
          %1927 = vmatprep.subr.bf16.mxu0 %v1608
          %1928 = vmatpush2.bf16.msra.mxu0 %v1607
          %1929 = vmatprep.subr.bf16.mxu0 %v1604
          %1930 = vmatpush2.bf16.msra.mxu0 %v1603
          %1931 = vmatprep.subr.bf16.mxu0 %v1600
          %1932 = vmatpush2.bf16.msra.mxu0 %v1599
          %1933 = vmatprep.subr.bf16.mxu0 %v1596
          %1934 = vmatpush2.bf16.msra.mxu0 %v1595
          %1935 = vmatprep.mubr.bf16.mxu0 %v1024
          %1936 = vmatmul.mubr.bf16.gmra.mxu0 %v1023
          %v1937 = vpop.f32.mrf.mxu0
          %v1938 = vadd.f32 %v1168, %v1937
          %v1939 = vpop.f32.mrf.mxu0
          %v1940 = vadd.f32 %v1172, %v1939
          %v1941 = vpop.f32.mrf.mxu0
          %v1942 = vadd.f32 %v1168, %v1941
          %v1943 = vpop.f32.mrf.mxu0
          %v1944 = vadd.f32 %v1172, %v1943
          %1945 = vdwg.mxu0
          %1946 = vmatprep.subr.bf16.mxu0 %v1656
          %1947 = vmatpush1.bf16.msra.mxu0 %v1655
          %1948 = vmatprep.subr.bf16.mxu0 %v1652
          %1949 = vmatpush1.bf16.msra.mxu0 %v1651
          %1950 = vmatprep.subr.bf16.mxu0 %v1648
          %1951 = vmatpush1.bf16.msra.mxu0 %v1647
          %1952 = vmatprep.subr.bf16.mxu0 %v1644
          %1953 = vmatpush1.bf16.msra.mxu0 %v1643
          %1954 = vmatprep.subr.bf16.mxu0 %v1640
          %1955 = vmatpush1.bf16.msra.mxu0 %v1639
          %1956 = vmatprep.subr.bf16.mxu0 %v1636
          %1957 = vmatpush1.bf16.msra.mxu0 %v1635
          %1958 = vmatprep.subr.bf16.mxu0 %v1632
          %1959 = vmatpush1.bf16.msra.mxu0 %v1631
          %1960 = vmatprep.subr.bf16.mxu0 %v1628
          %1961 = vmatpush1.bf16.msra.mxu0 %v1627
          %1962 = vmatprep.subr.bf16.mxu0 %v1688
          %1963 = vmatpush2.bf16.msra.mxu0 %v1687
          %1964 = vmatprep.subr.bf16.mxu0 %v1684
          %1965 = vmatpush2.bf16.msra.mxu0 %v1683
          %1966 = vmatprep.subr.bf16.mxu0 %v1680
          %1967 = vmatpush2.bf16.msra.mxu0 %v1679
          %1968 = vmatprep.subr.bf16.mxu0 %v1676
          %1969 = vmatpush2.bf16.msra.mxu0 %v1675
          %1970 = vmatprep.subr.bf16.mxu0 %v1672
          %1971 = vmatpush2.bf16.msra.mxu0 %v1671
          %1972 = vmatprep.subr.bf16.mxu0 %v1668
          %1973 = vmatpush2.bf16.msra.mxu0 %v1667
          %1974 = vmatprep.subr.bf16.mxu0 %v1664
          %1975 = vmatpush2.bf16.msra.mxu0 %v1663
          %1976 = vmatprep.subr.bf16.mxu0 %v1660
          %1977 = vmatpush2.bf16.msra.mxu0 %v1659
          %1978 = vmatprep.mubr.bf16.mxu0 %v1026
          %1979 = vmatmul.mubr.bf16.gmra.mxu0 %v1025
          %v1980 = vpop.f32.mrf.mxu0
          %v1981 = vadd.f32 %v1938, %v1980
          %v1982 = vpop.f32.mrf.mxu0
          %v1983 = vadd.f32 %v1940, %v1982
          %v1984 = vpop.f32.mrf.mxu0
          %v1985 = vadd.f32 %v1942, %v1984
          %v1986 = vpop.f32.mrf.mxu0
          %v1987 = vadd.f32 %v1944, %v1986
          %1988 = vdwg.mxu0
          %v1989 = vld [vmem:[%s731] sm:$0xf]
          %v1991 = vlaneseq
          %v1992 = vshrl.u32 %v1991, 7
          %v1993 = vsub.s32 0, %v1992
          %v1994 = vrot.slane %v1989, %v1993
          %v1995 = vlaneseq
          %v1996 = vshrl.u32 %v1995, 7
          %v1997 = vsub.s32 1, %v1996
          %v1998 = vrot.slane %v1989, %v1997
          %v1999 = vlaneseq
          %v2000 = vshrl.u32 %v1999, 7
          %v2001 = vsub.s32 2, %v2000
          %v2002 = vrot.slane %v1989, %v2001
          %v2003 = vlaneseq
          %v2004 = vshrl.u32 %v2003, 7
          %v2005 = vsub.s32 3, %v2004
          %v2006 = vrot.slane %v1989, %v2005
          %v2011 = vmul.f32 %v1895, %v1994
          %v2012 = vmul.f32 %v1897, %v1998
          %v2013 = vmul.f32 %v1981, %v2002
          %v2014 = vmul.f32 %v1983, %v2006
          %v2015 = vmul.f32 %v1899, %v1994
          %v2016 = vmul.f32 %v1901, %v1998
          %v2017 = vmul.f32 %v1985, %v2002
          %v2018 = vmul.f32 %v1987, %v2006
          %v2019 = vld [vmem:[%s739] sm:$0xf]
          %v2021 = vlaneseq
          %v2022 = vshrl.u32 %v2021, 7
          %v2023 = vsub.s32 0, %v2022
          %v2024 = vrot.slane %v2019, %v2023
          %v2025 = vlaneseq
          %v2026 = vshrl.u32 %v2025, 7
          %v2027 = vsub.s32 1, %v2026
          %v2028 = vrot.slane %v2019, %v2027
          %v2029 = vlaneseq
          %v2030 = vshrl.u32 %v2029, 7
          %v2031 = vsub.s32 2, %v2030
          %v2032 = vrot.slane %v2019, %v2031
          %v2033 = vlaneseq
          %v2034 = vshrl.u32 %v2033, 7
          %v2035 = vsub.s32 3, %v2034
          %v2036 = vrot.slane %v2019, %v2035
          %v2041 = vadd.f32 %v2011, %v2024
          %v2042 = vadd.f32 %v2012, %v2028
          %v2043 = vadd.f32 %v2013, %v2032
          %v2044 = vadd.f32 %v2014, %v2036
          %v2045 = vadd.f32 %v2015, %v2024
          %v2046 = vadd.f32 %v2016, %v2028
          %v2047 = vadd.f32 %v2017, %v2032
          %v2048 = vadd.f32 %v2018, %v2036
          %v2049 = vsub.f32 0.0, %v2041
          %v2050 = vsub.f32 0.0, %v2042
          %v2051 = vsub.f32 0.0, %v2043
          %v2052 = vsub.f32 0.0, %v2044
          %v2053 = vsub.f32 0.0, %v2045
          %v2054 = vsub.f32 0.0, %v2046
          %v2055 = vsub.f32 0.0, %v2047
          %v2056 = vsub.f32 0.0, %v2048
          %v2057 = vmul.f32 %v2049, 1.442695
          %v2058 = vpow.pop %v2057
          %v2059 = vmul.f32 %v2050, 1.442695
          %v2060 = vpow.pop %v2059
          %v2061 = vmul.f32 %v2051, 1.442695
          %v2062 = vpow.pop %v2061
          %v2063 = vmul.f32 %v2052, 1.442695
          %v2064 = vpow.pop %v2063
          %v2065 = vmul.f32 %v2053, 1.442695
          %v2066 = vpow.pop %v2065
          %v2067 = vmul.f32 %v2054, 1.442695
          %v2068 = vpow.pop %v2067
          %v2069 = vmul.f32 %v2055, 1.442695
          %v2070 = vpow.pop %v2069
          %v2071 = vmul.f32 %v2056, 1.442695
          %v2072 = vpow.pop %v2071
          %v2073 = vadd.f32 %v2058, 1.0
          %v2074 = vadd.f32 %v2060, 1.0
          %v2075 = vadd.f32 %v2062, 1.0
          %v2076 = vadd.f32 %v2064, 1.0
          %v2077 = vadd.f32 %v2066, 1.0
          %v2078 = vadd.f32 %v2068, 1.0
          %v2079 = vadd.f32 %v2070, 1.0
          %v2080 = vadd.f32 %v2072, 1.0
          %v2081 = vrcp.pop %v2073
          %v2082 = vmul.f32 %v2041, %v2081
          %v2083 = vrcp.pop %v2074
          %v2084 = vmul.f32 %v2042, %v2083
          %v2085 = vrcp.pop %v2075
          %v2086 = vmul.f32 %v2043, %v2085
          %v2087 = vrcp.pop %v2076
          %v2088 = vmul.f32 %v2044, %v2087
          %v2089 = vrcp.pop %v2077
          %v2090 = vmul.f32 %v2045, %v2089
          %v2091 = vrcp.pop %v2078
          %v2092 = vmul.f32 %v2046, %v2091
          %v2093 = vrcp.pop %v2079
          %v2094 = vmul.f32 %v2047, %v2093
          %v2095 = vrcp.pop %v2080
          %v2096 = vmul.f32 %v2048, %v2095
          %v2097 = vpack.c.bf16 %v2090, %v2082
          %v2098 = vpack.c.bf16 %v2092, %v2084
          %v2099 = vpack.c.bf16 %v2094, %v2086
          %v2100 = vpack.c.bf16 %v2096, %v2088
          %v2101 = vld [vmem:[%s778] sm:$0xff]
          %v2102 = vld [vmem:[%s778 + $0x8] sm:$0xff]
          %v2103 = vld [vmem:[%s778 + $0x10] sm:$0xff]
          %v2104 = vld [vmem:[%s778 + $0x18] sm:$0xff]
          %v2105 = vld [vmem:[%s778 + $0x20] sm:$0xff]
          %v2106 = vld [vmem:[%s778 + $0x28] sm:$0xff]
          %v2107 = vld [vmem:[%s778 + $0x30] sm:$0xff]
          %v2108 = vld [vmem:[%s778 + $0x38] sm:$0xff]
          %v2109 = vld [vmem:[%s778 + $0x40] sm:$0xff]
          %v2110 = vld [vmem:[%s778 + $0x48] sm:$0xff]
          %v2111 = vld [vmem:[%s778 + $0x50] sm:$0xff]
          %v2112 = vld [vmem:[%s778 + $0x58] sm:$0xff]
          %v2113 = vld [vmem:[%s778 + $0x60] sm:$0xff]
          %v2114 = vld [vmem:[%s778 + $0x68] sm:$0xff]
          %v2115 = vld [vmem:[%s778 + $0x70] sm:$0xff]
          %v2116 = vld [vmem:[%s778 + $0x78] sm:$0xff]
          %v2117 = vld [vmem:[%s778 + $0x80] sm:$0xff]
          %v2118 = vld [vmem:[%s778 + $0x88] sm:$0xff]
          %v2119 = vld [vmem:[%s778 + $0x90] sm:$0xff]
          %v2120 = vld [vmem:[%s778 + $0x98] sm:$0xff]
          %v2121 = vld [vmem:[%s778 + $0xa0] sm:$0xff]
          %v2122 = vld [vmem:[%s778 + $0xa8] sm:$0xff]
          %v2123 = vld [vmem:[%s778 + $0xb0] sm:$0xff]
          %v2124 = vld [vmem:[%s778 + $0xb8] sm:$0xff]
          %v2125 = vld [vmem:[%s778 + $0xc0] sm:$0xff]
          %v2126 = vld [vmem:[%s778 + $0xc8] sm:$0xff]
          %v2127 = vld [vmem:[%s778 + $0xd0] sm:$0xff]
          %v2128 = vld [vmem:[%s778 + $0xd8] sm:$0xff]
          %v2129 = vld [vmem:[%s778 + $0xe0] sm:$0xff]
          %v2130 = vld [vmem:[%s778 + $0xe8] sm:$0xff]
          %v2131 = vld [vmem:[%s778 + $0xf0] sm:$0xff]
          %v2132 = vld [vmem:[%s778 + $0xf8] sm:$0xff]
          %v2133 = vld [vmem:[%s778 + $0x100] sm:$0xff]
          %v2134 = vld [vmem:[%s778 + $0x108] sm:$0xff]
          %v2135 = vld [vmem:[%s778 + $0x110] sm:$0xff]
          %v2136 = vld [vmem:[%s778 + $0x118] sm:$0xff]
          %v2137 = vld [vmem:[%s778 + $0x120] sm:$0xff]
          %v2138 = vld [vmem:[%s778 + $0x128] sm:$0xff]
          %v2139 = vld [vmem:[%s778 + $0x130] sm:$0xff]
          %v2140 = vld [vmem:[%s778 + $0x138] sm:$0xff]
          %v2141 = vld [vmem:[%s778 + $0x140] sm:$0xff]
          %v2142 = vld [vmem:[%s778 + $0x148] sm:$0xff]
          %v2143 = vld [vmem:[%s778 + $0x150] sm:$0xff]
          %v2144 = vld [vmem:[%s778 + $0x158] sm:$0xff]
          %v2145 = vld [vmem:[%s778 + $0x160] sm:$0xff]
          %v2146 = vld [vmem:[%s778 + $0x168] sm:$0xff]
          %v2147 = vld [vmem:[%s778 + $0x170] sm:$0xff]
          %v2148 = vld [vmem:[%s778 + $0x178] sm:$0xff]
          %v2149 = vld [vmem:[%s778 + $0x180] sm:$0xff]
          %v2150 = vld [vmem:[%s778 + $0x188] sm:$0xff]
          %v2151 = vld [vmem:[%s778 + $0x190] sm:$0xff]
          %v2152 = vld [vmem:[%s778 + $0x198] sm:$0xff]
          %v2153 = vld [vmem:[%s778 + $0x1a0] sm:$0xff]
          %v2154 = vld [vmem:[%s778 + $0x1a8] sm:$0xff]
          %v2155 = vld [vmem:[%s778 + $0x1b0] sm:$0xff]
          %v2156 = vld [vmem:[%s778 + $0x1b8] sm:$0xff]
          %v2157 = vld [vmem:[%s778 + $0x1c0] sm:$0xff]
          %v2158 = vld [vmem:[%s778 + $0x1c8] sm:$0xff]
          %v2159 = vld [vmem:[%s778 + $0x1d0] sm:$0xff]
          %v2160 = vld [vmem:[%s778 + $0x1d8] sm:$0xff]
          %v2161 = vld [vmem:[%s778 + $0x1e0] sm:$0xff]
          %v2162 = vld [vmem:[%s778 + $0x1e8] sm:$0xff]
          %v2163 = vld [vmem:[%s778 + $0x1f0] sm:$0xff]
          %v2164 = vld [vmem:[%s778 + $0x1f8] sm:$0xff]
          %v2165 = vld [vmem:[%s778 + $0x200] sm:$0xff]
          %v2166 = vld [vmem:[%s778 + $0x208] sm:$0xff]
          %v2167 = vld [vmem:[%s778 + $0x210] sm:$0xff]
          %v2168 = vld [vmem:[%s778 + $0x218] sm:$0xff]
          %v2169 = vld [vmem:[%s778 + $0x220] sm:$0xff]
          %v2170 = vld [vmem:[%s778 + $0x228] sm:$0xff]
          %v2171 = vld [vmem:[%s778 + $0x230] sm:$0xff]
          %v2172 = vld [vmem:[%s778 + $0x238] sm:$0xff]
          %v2173 = vld [vmem:[%s778 + $0x240] sm:$0xff]
          %v2174 = vld [vmem:[%s778 + $0x248] sm:$0xff]
          %v2175 = vld [vmem:[%s778 + $0x250] sm:$0xff]
          %v2176 = vld [vmem:[%s778 + $0x258] sm:$0xff]
          %v2177 = vld [vmem:[%s778 + $0x260] sm:$0xff]
          %v2178 = vld [vmem:[%s778 + $0x268] sm:$0xff]
          %v2179 = vld [vmem:[%s778 + $0x270] sm:$0xff]
          %v2180 = vld [vmem:[%s778 + $0x278] sm:$0xff]
          %v2181 = vld [vmem:[%s778 + $0x280] sm:$0xff]
          %v2182 = vld [vmem:[%s778 + $0x288] sm:$0xff]
          %v2183 = vld [vmem:[%s778 + $0x290] sm:$0xff]
          %v2184 = vld [vmem:[%s778 + $0x298] sm:$0xff]
          %v2185 = vld [vmem:[%s778 + $0x2a0] sm:$0xff]
          %v2186 = vld [vmem:[%s778 + $0x2a8] sm:$0xff]
          %v2187 = vld [vmem:[%s778 + $0x2b0] sm:$0xff]
          %v2188 = vld [vmem:[%s778 + $0x2b8] sm:$0xff]
          %v2189 = vld [vmem:[%s778 + $0x2c0] sm:$0xff]
          %v2190 = vld [vmem:[%s778 + $0x2c8] sm:$0xff]
          %v2191 = vld [vmem:[%s778 + $0x2d0] sm:$0xff]
          %v2192 = vld [vmem:[%s778 + $0x2d8] sm:$0xff]
          %v2193 = vld [vmem:[%s778 + $0x2e0] sm:$0xff]
          %v2194 = vld [vmem:[%s778 + $0x2e8] sm:$0xff]
          %v2195 = vld [vmem:[%s778 + $0x2f0] sm:$0xff]
          %v2196 = vld [vmem:[%s778 + $0x2f8] sm:$0xff]
          %v2197 = vld [vmem:[%s778 + $0x300] sm:$0xff]
          %v2198 = vld [vmem:[%s778 + $0x308] sm:$0xff]
          %v2199 = vld [vmem:[%s778 + $0x310] sm:$0xff]
          %v2200 = vld [vmem:[%s778 + $0x318] sm:$0xff]
          %v2201 = vld [vmem:[%s778 + $0x320] sm:$0xff]
          %v2202 = vld [vmem:[%s778 + $0x328] sm:$0xff]
          %v2203 = vld [vmem:[%s778 + $0x330] sm:$0xff]
          %v2204 = vld [vmem:[%s778 + $0x338] sm:$0xff]
          %v2205 = vld [vmem:[%s778 + $0x340] sm:$0xff]
          %v2206 = vld [vmem:[%s778 + $0x348] sm:$0xff]
          %v2207 = vld [vmem:[%s778 + $0x350] sm:$0xff]
          %v2208 = vld [vmem:[%s778 + $0x358] sm:$0xff]
          %v2209 = vld [vmem:[%s778 + $0x360] sm:$0xff]
          %v2210 = vld [vmem:[%s778 + $0x368] sm:$0xff]
          %v2211 = vld [vmem:[%s778 + $0x370] sm:$0xff]
          %v2212 = vld [vmem:[%s778 + $0x378] sm:$0xff]
          %v2213 = vld [vmem:[%s778 + $0x380] sm:$0xff]
          %v2214 = vld [vmem:[%s778 + $0x388] sm:$0xff]
          %v2215 = vld [vmem:[%s778 + $0x390] sm:$0xff]
          %v2216 = vld [vmem:[%s778 + $0x398] sm:$0xff]
          %v2217 = vld [vmem:[%s778 + $0x3a0] sm:$0xff]
          %v2218 = vld [vmem:[%s778 + $0x3a8] sm:$0xff]
          %v2219 = vld [vmem:[%s778 + $0x3b0] sm:$0xff]
          %v2220 = vld [vmem:[%s778 + $0x3b8] sm:$0xff]
          %v2221 = vld [vmem:[%s778 + $0x3c0] sm:$0xff]
          %v2222 = vld [vmem:[%s778 + $0x3c8] sm:$0xff]
          %v2223 = vld [vmem:[%s778 + $0x3d0] sm:$0xff]
          %v2224 = vld [vmem:[%s778 + $0x3d8] sm:$0xff]
          %v2225 = vld [vmem:[%s778 + $0x3e0] sm:$0xff]
          %v2226 = vld [vmem:[%s778 + $0x3e8] sm:$0xff]
          %v2227 = vld [vmem:[%s778 + $0x3f0] sm:$0xff]
          %v2228 = vld [vmem:[%s778 + $0x3f8] sm:$0xff]
          %v2229 = vld [vmem:[%s782] sm:$0xf]
          %v2231 = vlaneseq
          %v2232 = vshrl.u32 %v2231, 7
          %v2233 = vsub.s32 0, %v2232
          %v2234 = vrot.slane %v2229, %v2233
          %v2235 = vlaneseq
          %v2236 = vshrl.u32 %v2235, 7
          %v2237 = vsub.s32 1, %v2236
          %v2238 = vrot.slane %v2229, %v2237
          %v2239 = vlaneseq
          %v2240 = vshrl.u32 %v2239, 7
          %v2241 = vsub.s32 2, %v2240
          %v2242 = vrot.slane %v2229, %v2241
          %v2243 = vlaneseq
          %v2244 = vshrl.u32 %v2243, 7
          %v2245 = vsub.s32 3, %v2244
          %v2246 = vrot.slane %v2229, %v2245
          %v2379 = vunpack.c.l.b16 %v2101
          %v2380 = vunpack.c.h.b16 %v2101
          %v2381 = vunpack.c.l.b16 %v2102
          %v2382 = vunpack.c.h.b16 %v2102
          %v2383 = vunpack.c.l.b16 %v2103
          %v2384 = vunpack.c.h.b16 %v2103
          %v2385 = vunpack.c.l.b16 %v2104
          %v2386 = vunpack.c.h.b16 %v2104
          %v2387 = vunpack.c.l.b16 %v2105
          %v2388 = vunpack.c.h.b16 %v2105
          %v2389 = vunpack.c.l.b16 %v2106
          %v2390 = vunpack.c.h.b16 %v2106
          %v2391 = vunpack.c.l.b16 %v2107
          %v2392 = vunpack.c.h.b16 %v2107
          %v2393 = vunpack.c.l.b16 %v2108
          %v2394 = vunpack.c.h.b16 %v2108
          %v2395 = vunpack.c.l.b16 %v2109
          %v2396 = vunpack.c.h.b16 %v2109
          %v2397 = vunpack.c.l.b16 %v2110
          %v2398 = vunpack.c.h.b16 %v2110
          %v2399 = vunpack.c.l.b16 %v2111
          %v2400 = vunpack.c.h.b16 %v2111
          %v2401 = vunpack.c.l.b16 %v2112
          %v2402 = vunpack.c.h.b16 %v2112
          %v2403 = vunpack.c.l.b16 %v2113
          %v2404 = vunpack.c.h.b16 %v2113
          %v2405 = vunpack.c.l.b16 %v2114
          %v2406 = vunpack.c.h.b16 %v2114
          %v2407 = vunpack.c.l.b16 %v2115
          %v2408 = vunpack.c.h.b16 %v2115
          %v2409 = vunpack.c.l.b16 %v2116
          %v2410 = vunpack.c.h.b16 %v2116
          %v2411 = vunpack.c.l.b16 %v2117
          %v2412 = vunpack.c.h.b16 %v2117
          %v2413 = vunpack.c.l.b16 %v2118
          %v2414 = vunpack.c.h.b16 %v2118
          %v2415 = vunpack.c.l.b16 %v2119
          %v2416 = vunpack.c.h.b16 %v2119
          %v2417 = vunpack.c.l.b16 %v2120
          %v2418 = vunpack.c.h.b16 %v2120
          %v2419 = vunpack.c.l.b16 %v2121
          %v2420 = vunpack.c.h.b16 %v2121
          %v2421 = vunpack.c.l.b16 %v2122
          %v2422 = vunpack.c.h.b16 %v2122
          %v2423 = vunpack.c.l.b16 %v2123
          %v2424 = vunpack.c.h.b16 %v2123
          %v2425 = vunpack.c.l.b16 %v2124
          %v2426 = vunpack.c.h.b16 %v2124
          %v2427 = vunpack.c.l.b16 %v2125
          %v2428 = vunpack.c.h.b16 %v2125
          %v2429 = vunpack.c.l.b16 %v2126
          %v2430 = vunpack.c.h.b16 %v2126
          %v2431 = vunpack.c.l.b16 %v2127
          %v2432 = vunpack.c.h.b16 %v2127
          %v2433 = vunpack.c.l.b16 %v2128
          %v2434 = vunpack.c.h.b16 %v2128
          %v2435 = vunpack.c.l.b16 %v2129
          %v2436 = vunpack.c.h.b16 %v2129
          %v2437 = vunpack.c.l.b16 %v2130
          %v2438 = vunpack.c.h.b16 %v2130
          %v2439 = vunpack.c.l.b16 %v2131
          %v2440 = vunpack.c.h.b16 %v2131
          %v2441 = vunpack.c.l.b16 %v2132
          %v2442 = vunpack.c.h.b16 %v2132
          %v2443 = vunpack.c.l.b16 %v2133
          %v2444 = vunpack.c.h.b16 %v2133
          %v2445 = vunpack.c.l.b16 %v2134
          %v2446 = vunpack.c.h.b16 %v2134
          %v2447 = vunpack.c.l.b16 %v2135
          %v2448 = vunpack.c.h.b16 %v2135
          %v2449 = vunpack.c.l.b16 %v2136
          %v2450 = vunpack.c.h.b16 %v2136
          %v2451 = vunpack.c.l.b16 %v2137
          %v2452 = vunpack.c.h.b16 %v2137
          %v2453 = vunpack.c.l.b16 %v2138
          %v2454 = vunpack.c.h.b16 %v2138
          %v2455 = vunpack.c.l.b16 %v2139
          %v2456 = vunpack.c.h.b16 %v2139
          %v2457 = vunpack.c.l.b16 %v2140
          %v2458 = vunpack.c.h.b16 %v2140
          %v2459 = vunpack.c.l.b16 %v2141
          %v2460 = vunpack.c.h.b16 %v2141
          %v2461 = vunpack.c.l.b16 %v2142
          %v2462 = vunpack.c.h.b16 %v2142
          %v2463 = vunpack.c.l.b16 %v2143
          %v2464 = vunpack.c.h.b16 %v2143
          %v2465 = vunpack.c.l.b16 %v2144
          %v2466 = vunpack.c.h.b16 %v2144
          %v2467 = vunpack.c.l.b16 %v2145
          %v2468 = vunpack.c.h.b16 %v2145
          %v2469 = vunpack.c.l.b16 %v2146
          %v2470 = vunpack.c.h.b16 %v2146
          %v2471 = vunpack.c.l.b16 %v2147
          %v2472 = vunpack.c.h.b16 %v2147
          %v2473 = vunpack.c.l.b16 %v2148
          %v2474 = vunpack.c.h.b16 %v2148
          %v2475 = vunpack.c.l.b16 %v2149
          %v2476 = vunpack.c.h.b16 %v2149
          %v2477 = vunpack.c.l.b16 %v2150
          %v2478 = vunpack.c.h.b16 %v2150
          %v2479 = vunpack.c.l.b16 %v2151
          %v2480 = vunpack.c.h.b16 %v2151
          %v2481 = vunpack.c.l.b16 %v2152
          %v2482 = vunpack.c.h.b16 %v2152
          %v2483 = vunpack.c.l.b16 %v2153
          %v2484 = vunpack.c.h.b16 %v2153
          %v2485 = vunpack.c.l.b16 %v2154
          %v2486 = vunpack.c.h.b16 %v2154
          %v2487 = vunpack.c.l.b16 %v2155
          %v2488 = vunpack.c.h.b16 %v2155
          %v2489 = vunpack.c.l.b16 %v2156
          %v2490 = vunpack.c.h.b16 %v2156
          %v2491 = vunpack.c.l.b16 %v2157
          %v2492 = vunpack.c.h.b16 %v2157
          %v2493 = vunpack.c.l.b16 %v2158
          %v2494 = vunpack.c.h.b16 %v2158
          %v2495 = vunpack.c.l.b16 %v2159
          %v2496 = vunpack.c.h.b16 %v2159
          %v2497 = vunpack.c.l.b16 %v2160
          %v2498 = vunpack.c.h.b16 %v2160
          %v2499 = vunpack.c.l.b16 %v2161
          %v2500 = vunpack.c.h.b16 %v2161
          %v2501 = vunpack.c.l.b16 %v2162
          %v2502 = vunpack.c.h.b16 %v2162
          %v2503 = vunpack.c.l.b16 %v2163
          %v2504 = vunpack.c.h.b16 %v2163
          %v2505 = vunpack.c.l.b16 %v2164
          %v2506 = vunpack.c.h.b16 %v2164
          %v2507 = vunpack.c.l.b16 %v2165
          %v2508 = vunpack.c.h.b16 %v2165
          %v2509 = vunpack.c.l.b16 %v2166
          %v2510 = vunpack.c.h.b16 %v2166
          %v2511 = vunpack.c.l.b16 %v2167
          %v2512 = vunpack.c.h.b16 %v2167
          %v2513 = vunpack.c.l.b16 %v2168
          %v2514 = vunpack.c.h.b16 %v2168
          %v2515 = vunpack.c.l.b16 %v2169
          %v2516 = vunpack.c.h.b16 %v2169
          %v2517 = vunpack.c.l.b16 %v2170
          %v2518 = vunpack.c.h.b16 %v2170
          %v2519 = vunpack.c.l.b16 %v2171
          %v2520 = vunpack.c.h.b16 %v2171
          %v2521 = vunpack.c.l.b16 %v2172
          %v2522 = vunpack.c.h.b16 %v2172
          %v2523 = vunpack.c.l.b16 %v2173
          %v2524 = vunpack.c.h.b16 %v2173
          %v2525 = vunpack.c.l.b16 %v2174
          %v2526 = vunpack.c.h.b16 %v2174
          %v2527 = vunpack.c.l.b16 %v2175
          %v2528 = vunpack.c.h.b16 %v2175
          %v2529 = vunpack.c.l.b16 %v2176
          %v2530 = vunpack.c.h.b16 %v2176
          %v2531 = vunpack.c.l.b16 %v2177
          %v2532 = vunpack.c.h.b16 %v2177
          %v2533 = vunpack.c.l.b16 %v2178
          %v2534 = vunpack.c.h.b16 %v2178
          %v2535 = vunpack.c.l.b16 %v2179
          %v2536 = vunpack.c.h.b16 %v2179
          %v2537 = vunpack.c.l.b16 %v2180
          %v2538 = vunpack.c.h.b16 %v2180
          %v2539 = vunpack.c.l.b16 %v2181
          %v2540 = vunpack.c.h.b16 %v2181
          %v2541 = vunpack.c.l.b16 %v2182
          %v2542 = vunpack.c.h.b16 %v2182
          %v2543 = vunpack.c.l.b16 %v2183
          %v2544 = vunpack.c.h.b16 %v2183
          %v2545 = vunpack.c.l.b16 %v2184
          %v2546 = vunpack.c.h.b16 %v2184
          %v2547 = vunpack.c.l.b16 %v2185
          %v2548 = vunpack.c.h.b16 %v2185
          %v2549 = vunpack.c.l.b16 %v2186
          %v2550 = vunpack.c.h.b16 %v2186
          %v2551 = vunpack.c.l.b16 %v2187
          %v2552 = vunpack.c.h.b16 %v2187
          %v2553 = vunpack.c.l.b16 %v2188
          %v2554 = vunpack.c.h.b16 %v2188
          %v2555 = vunpack.c.l.b16 %v2189
          %v2556 = vunpack.c.h.b16 %v2189
          %v2557 = vunpack.c.l.b16 %v2190
          %v2558 = vunpack.c.h.b16 %v2190
          %v2559 = vunpack.c.l.b16 %v2191
          %v2560 = vunpack.c.h.b16 %v2191
          %v2561 = vunpack.c.l.b16 %v2192
          %v2562 = vunpack.c.h.b16 %v2192
          %v2563 = vunpack.c.l.b16 %v2193
          %v2564 = vunpack.c.h.b16 %v2193
          %v2565 = vunpack.c.l.b16 %v2194
          %v2566 = vunpack.c.h.b16 %v2194
          %v2567 = vunpack.c.l.b16 %v2195
          %v2568 = vunpack.c.h.b16 %v2195
          %v2569 = vunpack.c.l.b16 %v2196
          %v2570 = vunpack.c.h.b16 %v2196
          %v2571 = vunpack.c.l.b16 %v2197
          %v2572 = vunpack.c.h.b16 %v2197
          %v2573 = vunpack.c.l.b16 %v2198
          %v2574 = vunpack.c.h.b16 %v2198
          %v2575 = vunpack.c.l.b16 %v2199
          %v2576 = vunpack.c.h.b16 %v2199
          %v2577 = vunpack.c.l.b16 %v2200
          %v2578 = vunpack.c.h.b16 %v2200
          %v2579 = vunpack.c.l.b16 %v2201
          %v2580 = vunpack.c.h.b16 %v2201
          %v2581 = vunpack.c.l.b16 %v2202
          %v2582 = vunpack.c.h.b16 %v2202
          %v2583 = vunpack.c.l.b16 %v2203
          %v2584 = vunpack.c.h.b16 %v2203
          %v2585 = vunpack.c.l.b16 %v2204
          %v2586 = vunpack.c.h.b16 %v2204
          %v2587 = vunpack.c.l.b16 %v2205
          %v2588 = vunpack.c.h.b16 %v2205
          %v2589 = vunpack.c.l.b16 %v2206
          %v2590 = vunpack.c.h.b16 %v2206
          %v2591 = vunpack.c.l.b16 %v2207
          %v2592 = vunpack.c.h.b16 %v2207
          %v2593 = vunpack.c.l.b16 %v2208
          %v2594 = vunpack.c.h.b16 %v2208
          %v2595 = vunpack.c.l.b16 %v2209
          %v2596 = vunpack.c.h.b16 %v2209
          %v2597 = vunpack.c.l.b16 %v2210
          %v2598 = vunpack.c.h.b16 %v2210
          %v2599 = vunpack.c.l.b16 %v2211
          %v2600 = vunpack.c.h.b16 %v2211
          %v2601 = vunpack.c.l.b16 %v2212
          %v2602 = vunpack.c.h.b16 %v2212
          %v2603 = vunpack.c.l.b16 %v2213
          %v2604 = vunpack.c.h.b16 %v2213
          %v2605 = vunpack.c.l.b16 %v2214
          %v2606 = vunpack.c.h.b16 %v2214
          %v2607 = vunpack.c.l.b16 %v2215
          %v2608 = vunpack.c.h.b16 %v2215
          %v2609 = vunpack.c.l.b16 %v2216
          %v2610 = vunpack.c.h.b16 %v2216
          %v2611 = vunpack.c.l.b16 %v2217
          %v2612 = vunpack.c.h.b16 %v2217
          %v2613 = vunpack.c.l.b16 %v2218
          %v2614 = vunpack.c.h.b16 %v2218
          %v2615 = vunpack.c.l.b16 %v2219
          %v2616 = vunpack.c.h.b16 %v2219
          %v2617 = vunpack.c.l.b16 %v2220
          %v2618 = vunpack.c.h.b16 %v2220
          %v2619 = vunpack.c.l.b16 %v2221
          %v2620 = vunpack.c.h.b16 %v2221
          %v2621 = vunpack.c.l.b16 %v2222
          %v2622 = vunpack.c.h.b16 %v2222
          %v2623 = vunpack.c.l.b16 %v2223
          %v2624 = vunpack.c.h.b16 %v2223
          %v2625 = vunpack.c.l.b16 %v2224
          %v2626 = vunpack.c.h.b16 %v2224
          %v2627 = vunpack.c.l.b16 %v2225
          %v2628 = vunpack.c.h.b16 %v2225
          %v2629 = vunpack.c.l.b16 %v2226
          %v2630 = vunpack.c.h.b16 %v2226
          %v2631 = vunpack.c.l.b16 %v2227
          %v2632 = vunpack.c.h.b16 %v2227
          %v2633 = vunpack.c.l.b16 %v2228
          %v2634 = vunpack.c.h.b16 %v2228
          %v2635 = vpack.c.b16 %v2383, %v2379
          %v2636 = vpack.c.b16 %v2384, %v2380
          %v2637 = vpack.c.b16 %v2385, %v2381
          %v2638 = vpack.c.b16 %v2386, %v2382
          %v2639 = vpack.c.b16 %v2391, %v2387
          %v2640 = vpack.c.b16 %v2392, %v2388
          %v2641 = vpack.c.b16 %v2393, %v2389
          %v2642 = vpack.c.b16 %v2394, %v2390
          %v2643 = vpack.c.b16 %v2399, %v2395
          %v2644 = vpack.c.b16 %v2400, %v2396
          %v2645 = vpack.c.b16 %v2401, %v2397
          %v2646 = vpack.c.b16 %v2402, %v2398
          %v2647 = vpack.c.b16 %v2407, %v2403
          %v2648 = vpack.c.b16 %v2408, %v2404
          %v2649 = vpack.c.b16 %v2409, %v2405
          %v2650 = vpack.c.b16 %v2410, %v2406
          %v2651 = vpack.c.b16 %v2415, %v2411
          %v2652 = vpack.c.b16 %v2416, %v2412
          %v2653 = vpack.c.b16 %v2417, %v2413
          %v2654 = vpack.c.b16 %v2418, %v2414
          %v2655 = vpack.c.b16 %v2423, %v2419
          %v2656 = vpack.c.b16 %v2424, %v2420
          %v2657 = vpack.c.b16 %v2425, %v2421
          %v2658 = vpack.c.b16 %v2426, %v2422
          %v2659 = vpack.c.b16 %v2431, %v2427
          %v2660 = vpack.c.b16 %v2432, %v2428
          %v2661 = vpack.c.b16 %v2433, %v2429
          %v2662 = vpack.c.b16 %v2434, %v2430
          %v2663 = vpack.c.b16 %v2439, %v2435
          %v2664 = vpack.c.b16 %v2440, %v2436
          %v2665 = vpack.c.b16 %v2441, %v2437
          %v2666 = vpack.c.b16 %v2442, %v2438
          %v2667 = vpack.c.b16 %v2447, %v2443
          %v2668 = vpack.c.b16 %v2448, %v2444
          %v2669 = vpack.c.b16 %v2449, %v2445
          %v2670 = vpack.c.b16 %v2450, %v2446
          %v2671 = vpack.c.b16 %v2455, %v2451
          %v2672 = vpack.c.b16 %v2456, %v2452
          %v2673 = vpack.c.b16 %v2457, %v2453
          %v2674 = vpack.c.b16 %v2458, %v2454
          %v2675 = vpack.c.b16 %v2463, %v2459
          %v2676 = vpack.c.b16 %v2464, %v2460
          %v2677 = vpack.c.b16 %v2465, %v2461
          %v2678 = vpack.c.b16 %v2466, %v2462
          %v2679 = vpack.c.b16 %v2471, %v2467
          %v2680 = vpack.c.b16 %v2472, %v2468
          %v2681 = vpack.c.b16 %v2473, %v2469
          %v2682 = vpack.c.b16 %v2474, %v2470
          %v2683 = vpack.c.b16 %v2479, %v2475
          %v2684 = vpack.c.b16 %v2480, %v2476
          %v2685 = vpack.c.b16 %v2481, %v2477
          %v2686 = vpack.c.b16 %v2482, %v2478
          %v2687 = vpack.c.b16 %v2487, %v2483
          %v2688 = vpack.c.b16 %v2488, %v2484
          %v2689 = vpack.c.b16 %v2489, %v2485
          %v2690 = vpack.c.b16 %v2490, %v2486
          %v2691 = vpack.c.b16 %v2495, %v2491
          %v2692 = vpack.c.b16 %v2496, %v2492
          %v2693 = vpack.c.b16 %v2497, %v2493
          %v2694 = vpack.c.b16 %v2498, %v2494
          %v2695 = vpack.c.b16 %v2503, %v2499
          %v2696 = vpack.c.b16 %v2504, %v2500
          %v2697 = vpack.c.b16 %v2505, %v2501
          %v2698 = vpack.c.b16 %v2506, %v2502
          %v2699 = vpack.c.b16 %v2511, %v2507
          %v2700 = vpack.c.b16 %v2512, %v2508
          %v2701 = vpack.c.b16 %v2513, %v2509
          %v2702 = vpack.c.b16 %v2514, %v2510
          %v2703 = vpack.c.b16 %v2519, %v2515
          %v2704 = vpack.c.b16 %v2520, %v2516
          %v2705 = vpack.c.b16 %v2521, %v2517
          %v2706 = vpack.c.b16 %v2522, %v2518
          %v2707 = vpack.c.b16 %v2527, %v2523
          %v2708 = vpack.c.b16 %v2528, %v2524
          %v2709 = vpack.c.b16 %v2529, %v2525
          %v2710 = vpack.c.b16 %v2530, %v2526
          %v2711 = vpack.c.b16 %v2535, %v2531
          %v2712 = vpack.c.b16 %v2536, %v2532
          %v2713 = vpack.c.b16 %v2537, %v2533
          %v2714 = vpack.c.b16 %v2538, %v2534
          %v2715 = vpack.c.b16 %v2543, %v2539
          %v2716 = vpack.c.b16 %v2544, %v2540
          %v2717 = vpack.c.b16 %v2545, %v2541
          %v2718 = vpack.c.b16 %v2546, %v2542
          %v2719 = vpack.c.b16 %v2551, %v2547
          %v2720 = vpack.c.b16 %v2552, %v2548
          %v2721 = vpack.c.b16 %v2553, %v2549
          %v2722 = vpack.c.b16 %v2554, %v2550
          %v2723 = vpack.c.b16 %v2559, %v2555
          %v2724 = vpack.c.b16 %v2560, %v2556
          %v2725 = vpack.c.b16 %v2561, %v2557
          %v2726 = vpack.c.b16 %v2562, %v2558
          %v2727 = vpack.c.b16 %v2567, %v2563
          %v2728 = vpack.c.b16 %v2568, %v2564
          %v2729 = vpack.c.b16 %v2569, %v2565
          %v2730 = vpack.c.b16 %v2570, %v2566
          %v2731 = vpack.c.b16 %v2575, %v2571
          %v2732 = vpack.c.b16 %v2576, %v2572
          %v2733 = vpack.c.b16 %v2577, %v2573
          %v2734 = vpack.c.b16 %v2578, %v2574
          %v2735 = vpack.c.b16 %v2583, %v2579
          %v2736 = vpack.c.b16 %v2584, %v2580
          %v2737 = vpack.c.b16 %v2585, %v2581
          %v2738 = vpack.c.b16 %v2586, %v2582
          %v2739 = vpack.c.b16 %v2591, %v2587
          %v2740 = vpack.c.b16 %v2592, %v2588
          %v2741 = vpack.c.b16 %v2593, %v2589
          %v2742 = vpack.c.b16 %v2594, %v2590
          %v2743 = vpack.c.b16 %v2599, %v2595
          %v2744 = vpack.c.b16 %v2600, %v2596
          %v2745 = vpack.c.b16 %v2601, %v2597
          %v2746 = vpack.c.b16 %v2602, %v2598
          %v2747 = vpack.c.b16 %v2607, %v2603
          %v2748 = vpack.c.b16 %v2608, %v2604
          %v2749 = vpack.c.b16 %v2609, %v2605
          %v2750 = vpack.c.b16 %v2610, %v2606
          %v2751 = vpack.c.b16 %v2615, %v2611
          %v2752 = vpack.c.b16 %v2616, %v2612
          %v2753 = vpack.c.b16 %v2617, %v2613
          %v2754 = vpack.c.b16 %v2618, %v2614
          %v2755 = vpack.c.b16 %v2623, %v2619
          %v2756 = vpack.c.b16 %v2624, %v2620
          %v2757 = vpack.c.b16 %v2625, %v2621
          %v2758 = vpack.c.b16 %v2626, %v2622
          %v2759 = vpack.c.b16 %v2631, %v2627
          %v2760 = vpack.c.b16 %v2632, %v2628
          %v2761 = vpack.c.b16 %v2633, %v2629
          %v2762 = vpack.c.b16 %v2634, %v2630
          %2891 = vmatprep.subr.bf16.mxu0 %v2664
          %2892 = vmatpush1.bf16.msra.mxu0 %v2663
          %2893 = vmatprep.subr.bf16.mxu0 %v2660
          %2894 = vmatpush1.bf16.msra.mxu0 %v2659
          %2895 = vmatprep.subr.bf16.mxu0 %v2656
          %2896 = vmatpush1.bf16.msra.mxu0 %v2655
          %2897 = vmatprep.subr.bf16.mxu0 %v2652
          %2898 = vmatpush1.bf16.msra.mxu0 %v2651
          %2899 = vmatprep.subr.bf16.mxu0 %v2648
          %2900 = vmatpush1.bf16.msra.mxu0 %v2647
          %2901 = vmatprep.subr.bf16.mxu0 %v2644
          %2902 = vmatpush1.bf16.msra.mxu0 %v2643
          %2903 = vmatprep.subr.bf16.mxu0 %v2640
          %2904 = vmatpush1.bf16.msra.mxu0 %v2639
          %2905 = vmatprep.subr.bf16.mxu0 %v2636
          %2906 = vmatpush1.bf16.msra.mxu0 %v2635
          %2907 = vmatprep.subr.bf16.mxu0 %v2696
          %2908 = vmatpush2.bf16.msra.mxu0 %v2695
          %2909 = vmatprep.subr.bf16.mxu0 %v2692
          %2910 = vmatpush2.bf16.msra.mxu0 %v2691
          %2911 = vmatprep.subr.bf16.mxu0 %v2688
          %2912 = vmatpush2.bf16.msra.mxu0 %v2687
          %2913 = vmatprep.subr.bf16.mxu0 %v2684
          %2914 = vmatpush2.bf16.msra.mxu0 %v2683
          %2915 = vmatprep.subr.bf16.mxu0 %v2680
          %2916 = vmatpush2.bf16.msra.mxu0 %v2679
          %2917 = vmatprep.subr.bf16.mxu0 %v2676
          %2918 = vmatpush2.bf16.msra.mxu0 %v2675
          %2919 = vmatprep.subr.bf16.mxu0 %v2672
          %2920 = vmatpush2.bf16.msra.mxu0 %v2671
          %2921 = vmatprep.subr.bf16.mxu0 %v2668
          %2922 = vmatpush2.bf16.msra.mxu0 %v2667
          %2923 = vmatprep.mubr.bf16.mxu0 %v2098
          %2924 = vmatmul.mubr.bf16.gmra.mxu0 %v2097
          %v2925 = vpop.f32.mrf.mxu0
          %v2926 = vadd.f32 %v2234, %v2925
          %v2927 = vpop.f32.mrf.mxu0
          %v2928 = vadd.f32 %v2238, %v2927
          %v2929 = vpop.f32.mrf.mxu0
          %v2930 = vadd.f32 %v2234, %v2929
          %v2931 = vpop.f32.mrf.mxu0
          %v2932 = vadd.f32 %v2238, %v2931
          %2933 = vdwg.mxu0
          %2934 = vmatprep.subr.bf16.mxu0 %v2728
          %2935 = vmatpush1.bf16.msra.mxu0 %v2727
          %2936 = vmatprep.subr.bf16.mxu0 %v2724
          %2937 = vmatpush1.bf16.msra.mxu0 %v2723
          %2938 = vmatprep.subr.bf16.mxu0 %v2720
          %2939 = vmatpush1.bf16.msra.mxu0 %v2719
          %2940 = vmatprep.subr.bf16.mxu0 %v2716
          %2941 = vmatpush1.bf16.msra.mxu0 %v2715
          %2942 = vmatprep.subr.bf16.mxu0 %v2712
          %2943 = vmatpush1.bf16.msra.mxu0 %v2711
          %2944 = vmatprep.subr.bf16.mxu0 %v2708
          %2945 = vmatpush1.bf16.msra.mxu0 %v2707
          %2946 = vmatprep.subr.bf16.mxu0 %v2704
          %2947 = vmatpush1.bf16.msra.mxu0 %v2703
          %2948 = vmatprep.subr.bf16.mxu0 %v2700
          %2949 = vmatpush1.bf16.msra.mxu0 %v2699
          %2950 = vmatprep.subr.bf16.mxu0 %v2760
          %2951 = vmatpush2.bf16.msra.mxu0 %v2759
          %2952 = vmatprep.subr.bf16.mxu0 %v2756
          %2953 = vmatpush2.bf16.msra.mxu0 %v2755
          %2954 = vmatprep.subr.bf16.mxu0 %v2752
          %2955 = vmatpush2.bf16.msra.mxu0 %v2751
          %2956 = vmatprep.subr.bf16.mxu0 %v2748
          %2957 = vmatpush2.bf16.msra.mxu0 %v2747
          %2958 = vmatprep.subr.bf16.mxu0 %v2744
          %2959 = vmatpush2.bf16.msra.mxu0 %v2743
          %2960 = vmatprep.subr.bf16.mxu0 %v2740
          %2961 = vmatpush2.bf16.msra.mxu0 %v2739
          %2962 = vmatprep.subr.bf16.mxu0 %v2736
          %2963 = vmatpush2.bf16.msra.mxu0 %v2735
          %2964 = vmatprep.subr.bf16.mxu0 %v2732
          %2965 = vmatpush2.bf16.msra.mxu0 %v2731
          %2966 = vmatprep.mubr.bf16.mxu0 %v2100
          %2967 = vmatmul.mubr.bf16.gmra.mxu0 %v2099
          %v2968 = vpop.f32.mrf.mxu0
          %v2969 = vadd.f32 %v2926, %v2968
          %v2970 = vpop.f32.mrf.mxu0
          %v2971 = vadd.f32 %v2928, %v2970
          %v2972 = vpop.f32.mrf.mxu0
          %v2973 = vadd.f32 %v2930, %v2972
          %v2974 = vpop.f32.mrf.mxu0
          %v2975 = vadd.f32 %v2932, %v2974
          %2976 = vdwg.mxu0
          %2977 = vmatprep.subr.bf16.mxu0 %v2666
          %2978 = vmatpush1.bf16.msra.mxu0 %v2665
          %2979 = vmatprep.subr.bf16.mxu0 %v2662
          %2980 = vmatpush1.bf16.msra.mxu0 %v2661
          %2981 = vmatprep.subr.bf16.mxu0 %v2658
          %2982 = vmatpush1.bf16.msra.mxu0 %v2657
          %2983 = vmatprep.subr.bf16.mxu0 %v2654
          %2984 = vmatpush1.bf16.msra.mxu0 %v2653
          %2985 = vmatprep.subr.bf16.mxu0 %v2650
          %2986 = vmatpush1.bf16.msra.mxu0 %v2649
          %2987 = vmatprep.subr.bf16.mxu0 %v2646
          %2988 = vmatpush1.bf16.msra.mxu0 %v2645
          %2989 = vmatprep.subr.bf16.mxu0 %v2642
          %2990 = vmatpush1.bf16.msra.mxu0 %v2641
          %2991 = vmatprep.subr.bf16.mxu0 %v2638
          %2992 = vmatpush1.bf16.msra.mxu0 %v2637
          %2993 = vmatprep.subr.bf16.mxu0 %v2698
          %2994 = vmatpush2.bf16.msra.mxu0 %v2697
          %2995 = vmatprep.subr.bf16.mxu0 %v2694
          %2996 = vmatpush2.bf16.msra.mxu0 %v2693
          %2997 = vmatprep.subr.bf16.mxu0 %v2690
          %2998 = vmatpush2.bf16.msra.mxu0 %v2689
          %2999 = vmatprep.subr.bf16.mxu0 %v2686
          %3000 = vmatpush2.bf16.msra.mxu0 %v2685
          %3001 = vmatprep.subr.bf16.mxu0 %v2682
          %3002 = vmatpush2.bf16.msra.mxu0 %v2681
          %3003 = vmatprep.subr.bf16.mxu0 %v2678
          %3004 = vmatpush2.bf16.msra.mxu0 %v2677
          %3005 = vmatprep.subr.bf16.mxu0 %v2674
          %3006 = vmatpush2.bf16.msra.mxu0 %v2673
          %3007 = vmatprep.subr.bf16.mxu0 %v2670
          %3008 = vmatpush2.bf16.msra.mxu0 %v2669
          %3009 = vmatprep.mubr.bf16.mxu0 %v2098
          %3010 = vmatmul.mubr.bf16.gmra.mxu0 %v2097
          %v3011 = vpop.f32.mrf.mxu0
          %v3012 = vadd.f32 %v2242, %v3011
          %v3013 = vpop.f32.mrf.mxu0
          %v3014 = vadd.f32 %v2246, %v3013
          %v3015 = vpop.f32.mrf.mxu0
          %v3016 = vadd.f32 %v2242, %v3015
          %v3017 = vpop.f32.mrf.mxu0
          %v3018 = vadd.f32 %v2246, %v3017
          %3019 = vdwg.mxu0
          %3020 = vmatprep.subr.bf16.mxu0 %v2730
          %3021 = vmatpush1.bf16.msra.mxu0 %v2729
          %3022 = vmatprep.subr.bf16.mxu0 %v2726
          %3023 = vmatpush1.bf16.msra.mxu0 %v2725
          %3024 = vmatprep.subr.bf16.mxu0 %v2722
          %3025 = vmatpush1.bf16.msra.mxu0 %v2721
          %3026 = vmatprep.subr.bf16.mxu0 %v2718
          %3027 = vmatpush1.bf16.msra.mxu0 %v2717
          %3028 = vmatprep.subr.bf16.mxu0 %v2714
          %3029 = vmatpush1.bf16.msra.mxu0 %v2713
          %3030 = vmatprep.subr.bf16.mxu0 %v2710
          %3031 = vmatpush1.bf16.msra.mxu0 %v2709
          %3032 = vmatprep.subr.bf16.mxu0 %v2706
          %3033 = vmatpush1.bf16.msra.mxu0 %v2705
          %3034 = vmatprep.subr.bf16.mxu0 %v2702
          %3035 = vmatpush1.bf16.msra.mxu0 %v2701
          %3036 = vmatprep.subr.bf16.mxu0 %v2762
          %3037 = vmatpush2.bf16.msra.mxu0 %v2761
          %3038 = vmatprep.subr.bf16.mxu0 %v2758
          %3039 = vmatpush2.bf16.msra.mxu0 %v2757
          %3040 = vmatprep.subr.bf16.mxu0 %v2754
          %3041 = vmatpush2.bf16.msra.mxu0 %v2753
          %3042 = vmatprep.subr.bf16.mxu0 %v2750
          %3043 = vmatpush2.bf16.msra.mxu0 %v2749
          %3044 = vmatprep.subr.bf16.mxu0 %v2746
          %3045 = vmatpush2.bf16.msra.mxu0 %v2745
          %3046 = vmatprep.subr.bf16.mxu0 %v2742
          %3047 = vmatpush2.bf16.msra.mxu0 %v2741
          %3048 = vmatprep.subr.bf16.mxu0 %v2738
          %3049 = vmatpush2.bf16.msra.mxu0 %v2737
          %3050 = vmatprep.subr.bf16.mxu0 %v2734
          %3051 = vmatpush2.bf16.msra.mxu0 %v2733
          %3052 = vmatprep.mubr.bf16.mxu0 %v2100
          %3053 = vmatmul.mubr.bf16.gmra.mxu0 %v2099
          %v3054 = vpop.f32.mrf.mxu0
          %v3055 = vadd.f32 %v3012, %v3054
          %v3056 = vpop.f32.mrf.mxu0
          %v3057 = vadd.f32 %v3014, %v3056
          %v3058 = vpop.f32.mrf.mxu0
          %v3059 = vadd.f32 %v3016, %v3058
          %v3060 = vpop.f32.mrf.mxu0
          %v3061 = vadd.f32 %v3018, %v3060
          %3062 = vdwg.mxu0
          %v3063 = vld [vmem:[%s747] sm:$0xf]
          %v3065 = vlaneseq
          %v3066 = vshrl.u32 %v3065, 7
          %v3067 = vsub.s32 0, %v3066
          %v3068 = vrot.slane %v3063, %v3067
          %v3069 = vlaneseq
          %v3070 = vshrl.u32 %v3069, 7
          %v3071 = vsub.s32 1, %v3070
          %v3072 = vrot.slane %v3063, %v3071
          %v3073 = vlaneseq
          %v3074 = vshrl.u32 %v3073, 7
          %v3075 = vsub.s32 2, %v3074
          %v3076 = vrot.slane %v3063, %v3075
          %v3077 = vlaneseq
          %v3078 = vshrl.u32 %v3077, 7
          %v3079 = vsub.s32 3, %v3078
          %v3080 = vrot.slane %v3063, %v3079
          %v3085 = vmul.f32 %v2969, %v3068
          %v3086 = vmul.f32 %v2971, %v3072
          %v3087 = vmul.f32 %v3055, %v3076
          %v3088 = vmul.f32 %v3057, %v3080
          %v3089 = vmul.f32 %v2973, %v3068
          %v3090 = vmul.f32 %v2975, %v3072
          %v3091 = vmul.f32 %v3059, %v3076
          %v3092 = vmul.f32 %v3061, %v3080
          %v3093 = vld [vmem:[%s755] sm:$0xf]
          %v3095 = vlaneseq
          %v3096 = vshrl.u32 %v3095, 7
          %v3097 = vsub.s32 0, %v3096
          %v3098 = vrot.slane %v3093, %v3097
          %v3099 = vlaneseq
          %v3100 = vshrl.u32 %v3099, 7
          %v3101 = vsub.s32 1, %v3100
          %v3102 = vrot.slane %v3093, %v3101
          %v3103 = vlaneseq
          %v3104 = vshrl.u32 %v3103, 7
          %v3105 = vsub.s32 2, %v3104
          %v3106 = vrot.slane %v3093, %v3105
          %v3107 = vlaneseq
          %v3108 = vshrl.u32 %v3107, 7
          %v3109 = vsub.s32 3, %v3108
          %v3110 = vrot.slane %v3093, %v3109
          %v3115 = vadd.f32 %v3085, %v3098
          %v3116 = vadd.f32 %v3086, %v3102
          %v3117 = vadd.f32 %v3087, %v3106
          %v3118 = vadd.f32 %v3088, %v3110
          %v3119 = vadd.f32 %v3089, %v3098
          %v3120 = vadd.f32 %v3090, %v3102
          %v3121 = vadd.f32 %v3091, %v3106
          %v3122 = vadd.f32 %v3092, %v3110
          %v3123 = vsub.f32 0.0, %v3115
          %v3124 = vsub.f32 0.0, %v3116
          %v3125 = vsub.f32 0.0, %v3117
          %v3126 = vsub.f32 0.0, %v3118
          %v3127 = vsub.f32 0.0, %v3119
          %v3128 = vsub.f32 0.0, %v3120
          %v3129 = vsub.f32 0.0, %v3121
          %v3130 = vsub.f32 0.0, %v3122
          %v3131 = vmul.f32 %v3123, 1.442695
          %v3132 = vpow.pop %v3131
          %v3133 = vmul.f32 %v3124, 1.442695
          %v3134 = vpow.pop %v3133
          %v3135 = vmul.f32 %v3125, 1.442695
          %v3136 = vpow.pop %v3135
          %v3137 = vmul.f32 %v3126, 1.442695
          %v3138 = vpow.pop %v3137
          %v3139 = vmul.f32 %v3127, 1.442695
          %v3140 = vpow.pop %v3139
          %v3141 = vmul.f32 %v3128, 1.442695
          %v3142 = vpow.pop %v3141
          %v3143 = vmul.f32 %v3129, 1.442695
          %v3144 = vpow.pop %v3143
          %v3145 = vmul.f32 %v3130, 1.442695
          %v3146 = vpow.pop %v3145
          %v3147 = vadd.f32 %v3132, 1.0
          %v3148 = vadd.f32 %v3134, 1.0
          %v3149 = vadd.f32 %v3136, 1.0
          %v3150 = vadd.f32 %v3138, 1.0
          %v3151 = vadd.f32 %v3140, 1.0
          %v3152 = vadd.f32 %v3142, 1.0
          %v3153 = vadd.f32 %v3144, 1.0
          %v3154 = vadd.f32 %v3146, 1.0
          %v3155 = vrcp.pop %v3147
          %v3156 = vmul.f32 %v3115, %v3155
          %v3157 = vrcp.pop %v3148
          %v3158 = vmul.f32 %v3116, %v3157
          %v3159 = vrcp.pop %v3149
          %v3160 = vmul.f32 %v3117, %v3159
          %v3161 = vrcp.pop %v3150
          %v3162 = vmul.f32 %v3118, %v3161
          %v3163 = vrcp.pop %v3151
          %v3164 = vmul.f32 %v3119, %v3163
          %v3165 = vrcp.pop %v3152
          %v3166 = vmul.f32 %v3120, %v3165
          %v3167 = vrcp.pop %v3153
          %v3168 = vmul.f32 %v3121, %v3167
          %v3169 = vrcp.pop %v3154
          %v3170 = vmul.f32 %v3122, %v3169
          %v3171 = vpack.c.bf16 %v3164, %v3156
          %v3172 = vpack.c.bf16 %v3166, %v3158
          %v3173 = vpack.c.bf16 %v3168, %v3160
          %v3174 = vpack.c.bf16 %v3170, %v3162
          %v3175 = vld [vmem:[%s584] sm:$0xf]
          %v3176 = vld [vmem:[%s584 + $0x4] sm:$0xf]
          %v3177 = vld [vmem:[%s584 + $0x8] sm:$0xf]
          %v3178 = vld [vmem:[%s584 + $0xc] sm:$0xf]
          %v3179 = vld [vmem:[%s584 + $0x10] sm:$0xf]
          %v3180 = vld [vmem:[%s584 + $0x14] sm:$0xf]
          %v3181 = vld [vmem:[%s584 + $0x18] sm:$0xf]
          %v3182 = vld [vmem:[%s584 + $0x1c] sm:$0xf]
          %v3183 = vld [vmem:[%s584 + $0x20] sm:$0xf]
          %v3184 = vld [vmem:[%s584 + $0x24] sm:$0xf]
          %v3185 = vld [vmem:[%s584 + $0x28] sm:$0xf]
          %v3186 = vld [vmem:[%s584 + $0x2c] sm:$0xf]
          %v3187 = vld [vmem:[%s584 + $0x30] sm:$0xf]
          %v3188 = vld [vmem:[%s584 + $0x34] sm:$0xf]
          %v3189 = vld [vmem:[%s584 + $0x38] sm:$0xf]
          %v3190 = vld [vmem:[%s584 + $0x3c] sm:$0xf]
          %v3191 = vld [vmem:[%s584 + $0x40] sm:$0xf]
          %v3192 = vld [vmem:[%s584 + $0x44] sm:$0xf]
          %v3193 = vld [vmem:[%s584 + $0x48] sm:$0xf]
          %v3194 = vld [vmem:[%s584 + $0x4c] sm:$0xf]
          %v3195 = vld [vmem:[%s584 + $0x50] sm:$0xf]
          %v3196 = vld [vmem:[%s584 + $0x54] sm:$0xf]
          %v3197 = vld [vmem:[%s584 + $0x58] sm:$0xf]
          %v3198 = vld [vmem:[%s584 + $0x5c] sm:$0xf]
          %v3199 = vld [vmem:[%s584 + $0x60] sm:$0xf]
          %v3200 = vld [vmem:[%s584 + $0x64] sm:$0xf]
          %v3201 = vld [vmem:[%s584 + $0x68] sm:$0xf]
          %v3202 = vld [vmem:[%s584 + $0x6c] sm:$0xf]
          %v3203 = vld [vmem:[%s584 + $0x70] sm:$0xf]
          %v3204 = vld [vmem:[%s584 + $0x74] sm:$0xf]
          %v3205 = vld [vmem:[%s584 + $0x78] sm:$0xf]
          %v3206 = vld [vmem:[%s584 + $0x7c] sm:$0xf]
          %v3207 = vld [vmem:[%s584 + $0x80] sm:$0xf]
          %v3208 = vld [vmem:[%s584 + $0x84] sm:$0xf]
          %v3209 = vld [vmem:[%s584 + $0x88] sm:$0xf]
          %v3210 = vld [vmem:[%s584 + $0x8c] sm:$0xf]
          %v3211 = vld [vmem:[%s584 + $0x90] sm:$0xf]
          %v3212 = vld [vmem:[%s584 + $0x94] sm:$0xf]
          %v3213 = vld [vmem:[%s584 + $0x98] sm:$0xf]
          %v3214 = vld [vmem:[%s584 + $0x9c] sm:$0xf]
          %v3215 = vld [vmem:[%s584 + $0xa0] sm:$0xf]
          %v3216 = vld [vmem:[%s584 + $0xa4] sm:$0xf]
          %v3217 = vld [vmem:[%s584 + $0xa8] sm:$0xf]
          %v3218 = vld [vmem:[%s584 + $0xac] sm:$0xf]
          %v3219 = vld [vmem:[%s584 + $0xb0] sm:$0xf]
          %v3220 = vld [vmem:[%s584 + $0xb4] sm:$0xf]
          %v3221 = vld [vmem:[%s584 + $0xb8] sm:$0xf]
          %v3222 = vld [vmem:[%s584 + $0xbc] sm:$0xf]
          %v3223 = vld [vmem:[%s584 + $0xc0] sm:$0xf]
          %v3224 = vld [vmem:[%s584 + $0xc4] sm:$0xf]
          %v3225 = vld [vmem:[%s584 + $0xc8] sm:$0xf]
          %v3226 = vld [vmem:[%s584 + $0xcc] sm:$0xf]
          %v3227 = vld [vmem:[%s584 + $0xd0] sm:$0xf]
          %v3228 = vld [vmem:[%s584 + $0xd4] sm:$0xf]
          %v3229 = vld [vmem:[%s584 + $0xd8] sm:$0xf]
          %v3230 = vld [vmem:[%s584 + $0xdc] sm:$0xf]
          %v3231 = vld [vmem:[%s584 + $0xe0] sm:$0xf]
          %v3232 = vld [vmem:[%s584 + $0xe4] sm:$0xf]
          %v3233 = vld [vmem:[%s584 + $0xe8] sm:$0xf]
          %v3234 = vld [vmem:[%s584 + $0xec] sm:$0xf]
          %v3235 = vld [vmem:[%s584 + $0xf0] sm:$0xf]
          %v3236 = vld [vmem:[%s584 + $0xf4] sm:$0xf]
          %v3237 = vld [vmem:[%s584 + $0xf8] sm:$0xf]
          %v3238 = vld [vmem:[%s584 + $0xfc] sm:$0xf]
          %v3239 = vld [vmem:[%s785] sm:$0x1]
          %v3241 = vlaneseq
          %v3242 = vshrl.u32 %v3241, 7
          %v3243 = vsub.s32 0, %v3242
          %v3244 = vrot.slane %v3239, %v3243
          %v3310 = vunpack.c.l.b16 %v3175
          %v3311 = vunpack.c.l.b16 %v3176
          %v3312 = vunpack.c.l.b16 %v3177
          %v3313 = vunpack.c.l.b16 %v3178
          %v3314 = vunpack.c.l.b16 %v3179
          %v3315 = vunpack.c.l.b16 %v3180
          %v3316 = vunpack.c.l.b16 %v3181
          %v3317 = vunpack.c.l.b16 %v3182
          %v3318 = vunpack.c.l.b16 %v3183
          %v3319 = vunpack.c.l.b16 %v3184
          %v3320 = vunpack.c.l.b16 %v3185
          %v3321 = vunpack.c.l.b16 %v3186
          %v3322 = vunpack.c.l.b16 %v3187
          %v3323 = vunpack.c.l.b16 %v3188
          %v3324 = vunpack.c.l.b16 %v3189
          %v3325 = vunpack.c.l.b16 %v3190
          %v3326 = vunpack.c.l.b16 %v3191
          %v3327 = vunpack.c.l.b16 %v3192
          %v3328 = vunpack.c.l.b16 %v3193
          %v3329 = vunpack.c.l.b16 %v3194
          %v3330 = vunpack.c.l.b16 %v3195
          %v3331 = vunpack.c.l.b16 %v3196
          %v3332 = vunpack.c.l.b16 %v3197
          %v3333 = vunpack.c.l.b16 %v3198
          %v3334 = vunpack.c.l.b16 %v3199
          %v3335 = vunpack.c.l.b16 %v3200
          %v3336 = vunpack.c.l.b16 %v3201
          %v3337 = vunpack.c.l.b16 %v3202
          %v3338 = vunpack.c.l.b16 %v3203
          %v3339 = vunpack.c.l.b16 %v3204
          %v3340 = vunpack.c.l.b16 %v3205
          %v3341 = vunpack.c.l.b16 %v3206
          %v3342 = vunpack.c.l.b16 %v3207
          %v3343 = vunpack.c.l.b16 %v3208
          %v3344 = vunpack.c.l.b16 %v3209
          %v3345 = vunpack.c.l.b16 %v3210
          %v3346 = vunpack.c.l.b16 %v3211
          %v3347 = vunpack.c.l.b16 %v3212
          %v3348 = vunpack.c.l.b16 %v3213
          %v3349 = vunpack.c.l.b16 %v3214
          %v3350 = vunpack.c.l.b16 %v3215
          %v3351 = vunpack.c.l.b16 %v3216
          %v3352 = vunpack.c.l.b16 %v3217
          %v3353 = vunpack.c.l.b16 %v3218
          %v3354 = vunpack.c.l.b16 %v3219
          %v3355 = vunpack.c.l.b16 %v3220
          %v3356 = vunpack.c.l.b16 %v3221
          %v3357 = vunpack.c.l.b16 %v3222
          %v3358 = vunpack.c.l.b16 %v3223
          %v3359 = vunpack.c.l.b16 %v3224
          %v3360 = vunpack.c.l.b16 %v3225
          %v3361 = vunpack.c.l.b16 %v3226
          %v3362 = vunpack.c.l.b16 %v3227
          %v3363 = vunpack.c.l.b16 %v3228
          %v3364 = vunpack.c.l.b16 %v3229
          %v3365 = vunpack.c.l.b16 %v3230
          %v3366 = vunpack.c.l.b16 %v3231
          %v3367 = vunpack.c.l.b16 %v3232
          %v3368 = vunpack.c.l.b16 %v3233
          %v3369 = vunpack.c.l.b16 %v3234
          %v3370 = vunpack.c.l.b16 %v3235
          %v3371 = vunpack.c.l.b16 %v3236
          %v3372 = vunpack.c.l.b16 %v3237
          %v3373 = vunpack.c.l.b16 %v3238
          %v3374 = vpack.c.b16 %v3311, %v3310
          %v3375 = vpack.c.b16 %v3313, %v3312
          %v3376 = vpack.c.b16 %v3315, %v3314
          %v3377 = vpack.c.b16 %v3317, %v3316
          %v3378 = vpack.c.b16 %v3319, %v3318
          %v3379 = vpack.c.b16 %v3321, %v3320
          %v3380 = vpack.c.b16 %v3323, %v3322
          %v3381 = vpack.c.b16 %v3325, %v3324
          %v3382 = vpack.c.b16 %v3327, %v3326
          %v3383 = vpack.c.b16 %v3329, %v3328
          %v3384 = vpack.c.b16 %v3331, %v3330
          %v3385 = vpack.c.b16 %v3333, %v3332
          %v3386 = vpack.c.b16 %v3335, %v3334
          %v3387 = vpack.c.b16 %v3337, %v3336
          %v3388 = vpack.c.b16 %v3339, %v3338
          %v3389 = vpack.c.b16 %v3341, %v3340
          %v3390 = vpack.c.b16 %v3343, %v3342
          %v3391 = vpack.c.b16 %v3345, %v3344
          %v3392 = vpack.c.b16 %v3347, %v3346
          %v3393 = vpack.c.b16 %v3349, %v3348
          %v3394 = vpack.c.b16 %v3351, %v3350
          %v3395 = vpack.c.b16 %v3353, %v3352
          %v3396 = vpack.c.b16 %v3355, %v3354
          %v3397 = vpack.c.b16 %v3357, %v3356
          %v3398 = vpack.c.b16 %v3359, %v3358
          %v3399 = vpack.c.b16 %v3361, %v3360
          %v3400 = vpack.c.b16 %v3363, %v3362
          %v3401 = vpack.c.b16 %v3365, %v3364
          %v3402 = vpack.c.b16 %v3367, %v3366
          %v3403 = vpack.c.b16 %v3369, %v3368
          %v3404 = vpack.c.b16 %v3371, %v3370
          %v3405 = vpack.c.b16 %v3373, %v3372
          %3438 = vmatprep.subr.bf16.mxu0 0
          %3439 = vmatpush1.bf16.msra.mxu0 %v3381
          %3440 = vmatprep.subr.bf16.mxu0 0
          %3441 = vmatpush1.bf16.msra.mxu0 %v3380
          %3442 = vmatprep.subr.bf16.mxu0 0
          %3443 = vmatpush1.bf16.msra.mxu0 %v3379
          %3444 = vmatprep.subr.bf16.mxu0 0
          %3445 = vmatpush1.bf16.msra.mxu0 %v3378
          %3446 = vmatprep.subr.bf16.mxu0 0
          %3447 = vmatpush1.bf16.msra.mxu0 %v3377
          %3448 = vmatprep.subr.bf16.mxu0 0
          %3449 = vmatpush1.bf16.msra.mxu0 %v3376
          %3450 = vmatprep.subr.bf16.mxu0 0
          %3451 = vmatpush1.bf16.msra.mxu0 %v3375
          %3452 = vmatprep.subr.bf16.mxu0 0
          %3453 = vmatpush1.bf16.msra.mxu0 %v3374
          %3454 = vmatprep.subr.bf16.mxu0 0
          %3455 = vmatpush2.bf16.msra.mxu0 %v3389
          %3456 = vmatprep.subr.bf16.mxu0 0
          %3457 = vmatpush2.bf16.msra.mxu0 %v3388
          %3458 = vmatprep.subr.bf16.mxu0 0
          %3459 = vmatpush2.bf16.msra.mxu0 %v3387
          %3460 = vmatprep.subr.bf16.mxu0 0
          %3461 = vmatpush2.bf16.msra.mxu0 %v3386
          %3462 = vmatprep.subr.bf16.mxu0 0
          %3463 = vmatpush2.bf16.msra.mxu0 %v3385
          %3464 = vmatprep.subr.bf16.mxu0 0
          %3465 = vmatpush2.bf16.msra.mxu0 %v3384
          %3466 = vmatprep.subr.bf16.mxu0 0
          %3467 = vmatpush2.bf16.msra.mxu0 %v3383
          %3468 = vmatprep.subr.bf16.mxu0 0
          %3469 = vmatpush2.bf16.msra.mxu0 %v3382
          %3470 = vmatprep.mubr.bf16.mxu0 %v3172
          %3471 = vmatmul.mubr.bf16.gmra.mxu0 %v3171
          %v3472 = vpop.f32.mrf.mxu0
          %v3473 = vadd.f32 %v3244, %v3472
          %v3474 = vpop.f32.mrf.mxu0
          %v3475 = vpop.f32.mrf.mxu0
          %v3476 = vadd.f32 %v3244, %v3475
          %v3477 = vpop.f32.mrf.mxu0
          %3478 = vdwg.mxu0
          %3479 = vmatprep.subr.bf16.mxu0 0
          %3480 = vmatpush1.bf16.msra.mxu0 %v3397
          %3481 = vmatprep.subr.bf16.mxu0 0
          %3482 = vmatpush1.bf16.msra.mxu0 %v3396
          %3483 = vmatprep.subr.bf16.mxu0 0
          %3484 = vmatpush1.bf16.msra.mxu0 %v3395
          %3485 = vmatprep.subr.bf16.mxu0 0
          %3486 = vmatpush1.bf16.msra.mxu0 %v3394
          %3487 = vmatprep.subr.bf16.mxu0 0
          %3488 = vmatpush1.bf16.msra.mxu0 %v3393
          %3489 = vmatprep.subr.bf16.mxu0 0
          %3490 = vmatpush1.bf16.msra.mxu0 %v3392
          %3491 = vmatprep.subr.bf16.mxu0 0
          %3492 = vmatpush1.bf16.msra.mxu0 %v3391
          %3493 = vmatprep.subr.bf16.mxu0 0
          %3494 = vmatpush1.bf16.msra.mxu0 %v3390
          %3495 = vmatprep.subr.bf16.mxu0 0
          %3496 = vmatpush2.bf16.msra.mxu0 %v3405
          %3497 = vmatprep.subr.bf16.mxu0 0
          %3498 = vmatpush2.bf16.msra.mxu0 %v3404
          %3499 = vmatprep.subr.bf16.mxu0 0
          %3500 = vmatpush2.bf16.msra.mxu0 %v3403
          %3501 = vmatprep.subr.bf16.mxu0 0
          %3502 = vmatpush2.bf16.msra.mxu0 %v3402
          %3503 = vmatprep.subr.bf16.mxu0 0
          %3504 = vmatpush2.bf16.msra.mxu0 %v3401
          %3505 = vmatprep.subr.bf16.mxu0 0
          %3506 = vmatpush2.bf16.msra.mxu0 %v3400
          %3507 = vmatprep.subr.bf16.mxu0 0
          %3508 = vmatpush2.bf16.msra.mxu0 %v3399
          %3509 = vmatprep.subr.bf16.mxu0 0
          %3510 = vmatpush2.bf16.msra.mxu0 %v3398
          %3511 = vmatprep.mubr.bf16.mxu0 %v3174
          %3512 = vmatmul.mubr.bf16.gmra.mxu0 %v3173
          %v3513 = vpop.f32.mrf.mxu0
          %v3514 = vadd.f32 %v3473, %v3513
          %v3515 = vpop.f32.mrf.mxu0
          %v3516 = vpop.f32.mrf.mxu0
          %v3517 = vadd.f32 %v3476, %v3516
          %v3518 = vpop.f32.mrf.mxu0
          %3519 = vdwg.mxu0
          %3520 = vst [vmem:[%s798] sm:$0xff] %v3514
          %3521 = vst [vmem:[%s798 + $0x8] sm:$0xff] %v3517
        $region80: #{bidenoise_forward.1} parent=71 // pred_fallthru
          _
        %s3522 = smul.u32 2, %s34
        %p3523 = scmp.lt.s32.totalorder %s32, 1
        %s3524 = scalar_select %p3523, %s32, 1
        %p3525 = scmp.lt.s32.totalorder %s33, 1
        %s3526 = scalar_select %p3525, %s33, 1
        %p3527 = scmp.lt.s32.totalorder %s3522, 1
        %s3528 = scalar_select %p3527, %s3522, 1
        %s3529 = smul.addr %s3526, 2
        %s3530 = sadd.s32 %s3528, %s3529
        %s3531 = smul.addr %s3524, 4
        %s3532 = sadd.s32 %s3530, %s3531
        %s3533 = smul.addr %s3532, 8
        %s3534 = scalar_lea.vmem %s13, %s3533
        // Predicated region
        $region81: #{bidenoise_forward.1} parent=71 // pred_check
          %p3535 = pneg %p418
        $region82: #{bidenoise_forward.1} parent=71 // pred_check_branch
          %3537 = sbr.rel (%p3535) target = $region84
        $region83: #{bidenoise_forward.1} parent=71 // pred_region
          %s3538 = smul.u32 2, %s34
        $region84: #{bidenoise_forward.1} parent=71 // pred_fallthru
          _
      $region72: #{bidenoise_forward.1} parent=5 // pred_fallthru
        _
      %p3539 = scmp.le.s32.totalorder 2, %s22
      // Predicated region
      $region85: #{bidenoise_forward.1} parent=5 // pred_check
        %p3540 = pneg %p3539
      $region86: #{bidenoise_forward.1} parent=5 // pred_check_branch
        %3542 = sbr.rel (%p3540) target = $region88
      $region87: #{bidenoise_forward.1} parent=5 // pred_region
        %s3543 = ssub.s32 %s22, 2
        // Predicated region
        $region89: #{bidenoise_forward.1} parent=87 // pred_check
          %p3544 = pneg %p424
        $region90: #{bidenoise_forward.1} parent=87 // pred_check_branch
          %3546 = sbr.rel (%p3544) target = $region92
        $region91: #{bidenoise_forward.1} parent=87 // pred_region
          %s3547 = smul.u32 2, %s37
          %p3548 = scmp.lt.s32.totalorder %s35, 1
          %s3549 = scalar_select %p3548, %s35, 1
          %p3550 = scmp.lt.s32.totalorder %s36, 1
          %s3551 = scalar_select %p3550, %s36, 1
          %p3552 = scmp.lt.s32.totalorder %s3547, 1
          %s3553 = scalar_select %p3552, %s3547, 1
          %s3554 = smul.addr %s3551, 2
          %s3555 = sadd.s32 %s3553, %s3554
          %s3556 = smul.addr %s3549, 4
          %s3557 = sadd.s32 %s3555, %s3556
          %s3558 = smul.addr %s3557, 8
          %s3559 = scalar_lea.vmem %s13, %s3558
        $region92: #{bidenoise_forward.1} parent=87 // pred_fallthru
          _
      $region88: #{bidenoise_forward.1} parent=5 // pred_fallthru
        _
    $region6: #{bidenoise_forward.1} parent=1 // loop_footer
      %s26 = sadd.s32 1, %s22
    $region7: #{bidenoise_forward.1} parent=1 // loop_footer_branch
      %21 = sbr.rel target = $region3
    $region8: #{bidenoise_forward.1} parent=1 // loop_exit
      _
    %3560 = vsyncpa [#allocation3], 1
    %s3561 = scalar_lea.sflag [#allocation3], 1
    %3562 = vsyncpa %s3561, 1

</llo_original>
